<compile_context>
chip_gen: v5e
topology: v5e:2x2
jax: 0.10.0
libtpu: 0.0.40
codegen_flags: <defaults>
</compile_context>

<pallas_src>
import jax
import jax.numpy as jnp
from jax import lax
from jax.experimental import pallas as pl
from jax.experimental.pallas import tpu as pltpu


# ---------------------------------------------------------------------------
# Fused Pallas kernel: maxpool(2) -> conv3x3+BN+ReLU -> conv3x3+BN+ReLU
# (whole batch in one step; im2col matmuls with M = N*H2*W2)
# ---------------------------------------------------------------------------
def _down_fused_kernel(x_ref, w1_ref, b1_ref, w2_ref, b2_ref, o_ref,
                       pad1_ref, col1_ref, pad2_ref, col2_ref):
    # x_ref : (N, H, W, Cin) f32        input image batch (NHWC)
    # w1_ref: (9*Cin, Cmid)  bf16       im2col weight, BN scale folded in
    # b1_ref: (1, Cmid)      f32        folded BN bias
    # w2_ref: (9*Cmid, Cout) bf16 ; b2_ref: (1, Cout) f32
    # o_ref : (N*H2*W2, Cout) f32       flattened output
    # pad1_ref: VMEM (N, H2+2, W2+2, Cin)  f32  zero-padded pooled activation
    # col1_ref: VMEM (N*H2*W2, 9*Cin)      bf16 im2col patches (MXU lhs)
    # pad2_ref: VMEM (N, H2+2, W2+2, Cmid) f32  zero-padded conv1 activation
    # col2_ref: VMEM (N*H2*W2, 9*Cmid)     bf16 im2col patches (MXU lhs)
    N, H, W, Cin = x_ref.shape
    Cmid = b1_ref.shape[-1]
    H2, W2 = H // 2, W // 2
    M = N * H2 * W2

    # ---- 2x2 max pool (VPU work, stays in VMEM) ----
    x = x_ref[...].astype(jnp.float32)                                  # (N,H,W,Cin)
    pooled = jnp.max(x.reshape(N, H2, 2, W2, 2, Cin), axis=(2, 4))      # (N,H2,W2,Cin)

    # ---- conv1 + BN + ReLU : in-kernel zero padding + single im2col matmul
    pad1_ref[...] = jnp.zeros_like(pad1_ref)          # one-off tiny VMEM memset
    pad1_ref[:, 1:H2 + 1, 1:W2 + 1, :] = pooled
    p1 = pad1_ref[...]                                                  # (N,H2+2,W2+2,Cin)
    for k in range(9):                                # unrolled: 9 lane-slice stores
        dy, dx = k // 3, k % 3
        col1_ref[:, k * Cin:(k + 1) * Cin] = (
            p1[:, dy:dy + H2, dx:dx + W2, :].astype(jnp.bfloat16).reshape(M, Cin))
    a1 = lax.dot_general(                             # bf16 operands, f32 accumulate
        col1_ref[...], w1_ref[...],
        (((1,), (0,)), ((), ())),
        preferred_element_type=jnp.float32)                             # (M, Cmid)
    a1 = jnp.maximum(a1 + b1_ref[...], 0.0)

    # ---- conv2 + BN + ReLU ----
    pad2_ref[...] = jnp.zeros_like(pad2_ref)
    pad2_ref[:, 1:H2 + 1, 1:W2 + 1, :] = a1.reshape(N, H2, W2, Cmid)
    p2 = pad2_ref[...]                                                  # (N,H2+2,W2+2,Cmid)
    for k in range(9):
        dy, dx = k // 3, k % 3
        col2_ref[:, k * Cmid:(k + 1) * Cmid] = (
            p2[:, dy:dy + H2, dx:dx + W2, :].astype(jnp.bfloat16).reshape(M, Cmid))
    a2 = lax.dot_general(
        col2_ref[...], w2_ref[...],
        (((1,), (0,)), ((), ())),
        preferred_element_type=jnp.float32)                             # (M, Cout)
    o_ref[...] = jnp.maximum(a2 + b2_ref[...], 0.0).astype(o_ref.dtype)


# ---------------------------------------------------------------------------
# Eval-mode BN folding: conv(w) -> BN(gamma, beta, mean, var)  ==
#   conv(w * scale) + (beta - mean * scale),  scale = gamma / sqrt(var + eps)
# ---------------------------------------------------------------------------
def _fold_bn(w_oihw, gamma, beta, mean, var, eps=1e-5):
    scale = gamma / jnp.sqrt(var + eps)                     # (cout,)
    w_f = w_oihw * scale[:, None, None, None]               # fold scale into conv
    bias = beta - mean * scale
    cout, cin = w_oihw.shape[0], w_oihw.shape[1]
    # OIHW -> (ky, kx, Cin, Cout) -> (9*Cin, Cout), row index = (dy*3+dx)*Cin + ci
    w_col = jnp.transpose(w_f, (2, 3, 1, 0)).reshape(9 * cin, cout)
    return w_col, bias


# ---------------------------------------------------------------------------
# Wrapper around pallas_call
# ---------------------------------------------------------------------------
@jax.jit
def down_forward(x_nchw, params):
    (w1, g1, be1, m1, v1), (w2, g2, be2, m2, v2) = params
    w1_col, b1 = _fold_bn(w1, g1, be1, m1, v1)
    w2_col, b2 = _fold_bn(w2, g2, be2, m2, v2)

    # NCHW -> NHWC (channels-last is lane-friendly inside the kernel).
    # TODO(synk): keep the surrounding model NHWC end-to-end at realistic sizes
    # to avoid these two extra HBM passes.
    x = jnp.transpose(x_nchw, (0, 2, 3, 1)).astype(jnp.float32)
    N, H, W, Cin = x.shape
    assert H % 2 == 0 and W % 2 == 0, "MaxPool2d(2) requires even spatial dims"
    Cmid, Cout = w1.shape[0], w2.shape[0]
    H2, W2 = H // 2, W // 2
    M = N * H2 * W2

    out_flat = pl.pallas_call(
        _down_fused_kernel,
        out_shape=jax.ShapeDtypeStruct((M, Cout), jnp.float32),
        grid=(1,),
        in_specs=[
            pl.BlockSpec((N, H, W, Cin), lambda i: (0, 0, 0, 0)),
            pl.BlockSpec((9 * Cin, Cmid), lambda i: (0, 0)),
            pl.BlockSpec((1, Cmid), lambda i: (0, 0)),
            pl.BlockSpec((9 * Cmid, Cout), lambda i: (0, 0)),
            pl.BlockSpec((1, Cout), lambda i: (0, 0)),
        ],
        out_specs=pl.BlockSpec((M, Cout), lambda i: (0, 0)),
        scratch_shapes=[
            pltpu.VMEM((N, H2 + 2, W2 + 2, Cin), jnp.float32),   # padded pooled act
            pltpu.VMEM((M, 9 * Cin), jnp.bfloat16),              # im2col conv1 (MXU lhs)
            pltpu.VMEM((N, H2 + 2, W2 + 2, Cmid), jnp.float32),  # padded conv1 act
            pltpu.VMEM((M, 9 * Cmid), jnp.bfloat16),             # im2col conv2 (MXU lhs)
        ],
        compiler_params=pltpu.CompilerParams(
            dimension_semantics=("arbitrary",)),
    )(x,
      w1_col.astype(jnp.bfloat16), b1.reshape(1, Cmid).astype(jnp.float32),
      w2_col.astype(jnp.bfloat16), b2.reshape(1, Cout).astype(jnp.float32))

    # Flat (n, y, x, c) order -> NHWC -> NCHW to match the PyTorch convention.
    out = out_flat.reshape(N, H2, W2, Cout)
    return jnp.transpose(out, (0, 3, 1, 2))


# ---------------------------------------------------------------------------
# Parameter construction (deterministic, non-trivial BN running stats)
# ---------------------------------------------------------------------------
def make_params(key, in_channels, out_channels, mid_channels=None):
    if mid_channels is None:
        mid_channels = out_channels
    keys = jax.random.split(key, 10)

    def conv_bn_params(kw, kg, kb, km, kv, cin, cout):
        w = jax.random.normal(kw, (cout, cin, 3, 3), jnp.float32) * 0.1     # OIHW
        gamma = 1.0 + 0.1 * jax.random.normal(kg, (cout,), jnp.float32)
        beta = 0.1 * jax.random.normal(kb, (cout,), jnp.float32)
        mean = 0.3 * jax.random.normal(km, (cout,), jnp.float32)            # running mean
        var = 0.5 + jax.random.uniform(kv, (cout,), jnp.float32)            # running var
        return (w, gamma, beta, mean, var)

    p1 = conv_bn_params(*keys[0:5], in_channels, mid_channels)
    p2 = conv_bn_params(*keys[5:10], mid_channels, out_channels)
    return (p1, p2)


# ---------------------------------------------------------------------------
# Pure-JAX reference (eval-mode BN folded independently; conv operands cast to
# bf16 to mirror the kernel's MXU feed, accumulation in f32)
# ---------------------------------------------------------------------------
def reference_forward(x_nchw, params, eps=1e-5):
    x = jnp.transpose(x_nchw, (0, 2, 3, 1)).astype(jnp.float32)   # NHWC
    x = lax.reduce_window(x, -jnp.inf, lax.max,
                          (1, 2, 2, 1), (1, 2, 2, 1), "VALID")

    def conv_bn_relu(act, p):
        w, gamma, beta, mean, var = p
        scale = gamma / jnp.sqrt(var + eps)
        w_hwio = jnp.transpose(w, (2, 3, 1, 0)) * scale           # fold BN scale
        bias = beta - mean * scale
        y = lax.conv_general_dilated(
            act.astype(jnp.bfloat16), w_hwio.astype(jnp.bfloat16),
            window_strides=(1, 1), padding="SAME",
            dimension_numbers=("NHWC", "HWIO", "NHWC"),
            preferred_element_type=jnp.float32)
        return jnp.maximum(y + bias[None, None, None, :], 0.0)

    x = conv_bn_relu(x, params[0])
    x = conv_bn_relu(x, params[1])
    return jnp.transpose(x, (0, 3, 1, 2))


if __name__ == "__main__":
    key = jax.random.PRNGKey(0)
    kx, kp = jax.random.split(key)

    N, Cin, H, W = 2, 4, 16, 16
    Cout = 8
    x = jax.random.normal(kx, (N, Cin, H, W), jnp.float32)
    params = make_params(kp, Cin, Cout)

    out = down_forward(x, params)
    out = jax.block_until_ready(out)

    ref = reference_forward(x, params)
    assert out.shape == (N, Cout, H // 2, W // 2), out.shape
    max_err = float(jnp.max(jnp.abs(out - ref)))
    assert jnp.allclose(out, ref, atol=5e-3, rtol=5e-3), max_err

    print("KERNEL_OK")
</pallas_src>

<mosaic_0001>
module attributes {stable_mosaic.version = 11 : i64} {
  func.func @_down_fused_kernel(%arg0: i32, %arg1: memref<2x16x16x4xf32, #tpu.memory_space<vmem>>, %arg2: memref<36x8xbf16, #tpu.memory_space<vmem>>, %arg3: memref<1x8xf32, #tpu.memory_space<vmem>>, %arg4: memref<72x8xbf16, #tpu.memory_space<vmem>>, %arg5: memref<1x8xf32, #tpu.memory_space<vmem>>, %arg6: memref<128x8xf32, #tpu.memory_space<vmem>>, %arg7: memref<2x10x10x4xf32, #tpu.memory_space<vmem>>, %arg8: memref<128x36xbf16, #tpu.memory_space<vmem>>, %arg9: memref<2x10x10x8xf32, #tpu.memory_space<vmem>>, %arg10: memref<128x72xbf16, #tpu.memory_space<vmem>>) attributes {dimension_semantics = [#tpu.dimension_semantics<arbitrary>], iteration_bounds = array<i64: 1>, scalar_prefetch = 0 : i64, scratch_operands = 4 : i64, tpu.core_type = #tpu.core_type<tc>, window_params = [{pipeline_mode = #tpu.pipeline_mode<synchronous>, transform_indices = @transform_0, window_bounds = array<i64: 2, 16, 16, 4>}, {pipeline_mode = #tpu.pipeline_mode<synchronous>, transform_indices = @transform_1, window_bounds = array<i64: 36, 8>}, {pipeline_mode = #tpu.pipeline_mode<synchronous>, transform_indices = @transform_2, window_bounds = array<i64: 1, 8>}, {pipeline_mode = #tpu.pipeline_mode<synchronous>, transform_indices = @transform_3, window_bounds = array<i64: 72, 8>}, {pipeline_mode = #tpu.pipeline_mode<synchronous>, transform_indices = @transform_4, window_bounds = array<i64: 1, 8>}, {pipeline_mode = #tpu.pipeline_mode<synchronous>, transform_indices = @transform_5, window_bounds = array<i64: 128, 8>}]} {
    %c0 = arith.constant 0 : index
    %c0_0 = arith.constant 0 : index
    %c0_1 = arith.constant 0 : index
    %c0_2 = arith.constant 0 : index
    %0 = vector.load %arg1[%c0, %c0_0, %c0_1, %c0_2] : memref<2x16x16x4xf32, #tpu.memory_space<vmem>>, vector<2x16x16x4xf32>
    %1 = vector.shape_cast %0 : vector<2x16x16x4xf32> to vector<2x8x2x8x2x4xf32>
    %cst = arith.constant dense<0xFF800000> : vector<2x8x8x4xf32>
    %2 = vector.multi_reduction <maximumf>, %1, %cst [2, 4] : vector<2x8x2x8x2x4xf32> to vector<2x8x8x4xf32>
    %cst_3 = arith.constant 0.000000e+00 : f32
    %3 = vector.broadcast %cst_3 : f32 to vector<2x10x10x4xf32>
    %c0_4 = arith.constant 0 : index
    %c0_5 = arith.constant 0 : index
    %c0_6 = arith.constant 0 : index
    %c0_7 = arith.constant 0 : index
    %4 = vector.load %arg7[%c0_4, %c0_5, %c0_6, %c0_7] : memref<2x10x10x4xf32, #tpu.memory_space<vmem>>, vector<2x10x10x4xf32>
    tpu.vector_store %arg7[%c0_4, %c0_5, %c0_6, %c0_7], %3 {strides = array<i32>} : memref<2x10x10x4xf32, #tpu.memory_space<vmem>>, vector<2x10x10x4xf32>,
    %c0_8 = arith.constant 0 : index
    %c1 = arith.constant 1 : index
    %c1_9 = arith.constant 1 : index
    %c0_10 = arith.constant 0 : index
    %5 = vector.load %arg7[%c0_8, %c1, %c1_9, %c0_10] : memref<2x10x10x4xf32, #tpu.memory_space<vmem>>, vector<2x8x8x4xf32>
    tpu.vector_store %arg7[%c0_8, %c1, %c1_9, %c0_10], %2 {strides = array<i32>} : memref<2x10x10x4xf32, #tpu.memory_space<vmem>>, vector<2x8x8x4xf32>,
    %c0_11 = arith.constant 0 : index
    %c0_12 = arith.constant 0 : index
    %c0_13 = arith.constant 0 : index
    %c0_14 = arith.constant 0 : index
    %6 = vector.load %arg7[%c0_11, %c0_12, %c0_13, %c0_14] : memref<2x10x10x4xf32, #tpu.memory_space<vmem>>, vector<2x10x10x4xf32>
    %7 = vector.extract_strided_slice %6 {offsets = [0, 0, 0, 0], sizes = [2, 8, 8, 4], strides = [1, 1, 1, 1]} : vector<2x10x10x4xf32> to vector<2x8x8x4xf32>
    %8 = arith.truncf %7 : vector<2x8x8x4xf32> to vector<2x8x8x4xbf16>
    %9 = vector.shape_cast %8 : vector<2x8x8x4xbf16> to vector<128x4xbf16>
    %c0_15 = arith.constant 0 : index
    %c0_16 = arith.constant 0 : index
    %10 = vector.load %arg8[%c0_15, %c0_16] : memref<128x36xbf16, #tpu.memory_space<vmem>>, vector<128x4xbf16>
    tpu.vector_store %arg8[%c0_15, %c0_16], %9 {strides = array<i32>} : memref<128x36xbf16, #tpu.memory_space<vmem>>, vector<128x4xbf16>,
    %11 = vector.extract_strided_slice %6 {offsets = [0, 0, 1, 0], sizes = [2, 8, 8, 4], strides = [1, 1, 1, 1]} : vector<2x10x10x4xf32> to vector<2x8x8x4xf32>
    %12 = arith.truncf %11 : vector<2x8x8x4xf32> to vector<2x8x8x4xbf16>
    %13 = vector.shape_cast %12 : vector<2x8x8x4xbf16> to vector<128x4xbf16>
    %c0_17 = arith.constant 0 : index
    %c4 = arith.constant 4 : index
    %14 = vector.load %arg8[%c0_17, %c4] : memref<128x36xbf16, #tpu.memory_space<vmem>>, vector<128x4xbf16>
    tpu.vector_store %arg8[%c0_17, %c4], %13 {strides = array<i32>} : memref<128x36xbf16, #tpu.memory_space<vmem>>, vector<128x4xbf16>,
    %15 = vector.extract_strided_slice %6 {offsets = [0, 0, 2, 0], sizes = [2, 8, 8, 4], strides = [1, 1, 1, 1]} : vector<2x10x10x4xf32> to vector<2x8x8x4xf32>
    %16 = arith.truncf %15 : vector<2x8x8x4xf32> to vector<2x8x8x4xbf16>
    %17 = vector.shape_cast %16 : vector<2x8x8x4xbf16> to vector<128x4xbf16>
    %c0_18 = arith.constant 0 : index
    %c8 = arith.constant 8 : index
    %18 = vector.load %arg8[%c0_18, %c8] : memref<128x36xbf16, #tpu.memory_space<vmem>>, vector<128x4xbf16>
    tpu.vector_store %arg8[%c0_18, %c8], %17 {strides = array<i32>} : memref<128x36xbf16, #tpu.memory_space<vmem>>, vector<128x4xbf16>,
    %19 = vector.extract_strided_slice %6 {offsets = [0, 1, 0, 0], sizes = [2, 8, 8, 4], strides = [1, 1, 1, 1]} : vector<2x10x10x4xf32> to vector<2x8x8x4xf32>
    %20 = arith.truncf %19 : vector<2x8x8x4xf32> to vector<2x8x8x4xbf16>
    %21 = vector.shape_cast %20 : vector<2x8x8x4xbf16> to vector<128x4xbf16>
    %c0_19 = arith.constant 0 : index
    %c12 = arith.constant 12 : index
    %22 = vector.load %arg8[%c0_19, %c12] : memref<128x36xbf16, #tpu.memory_space<vmem>>, vector<128x4xbf16>
    tpu.vector_store %arg8[%c0_19, %c12], %21 {strides = array<i32>} : memref<128x36xbf16, #tpu.memory_space<vmem>>, vector<128x4xbf16>,
    %23 = vector.extract_strided_slice %6 {offsets = [0, 1, 1, 0], sizes = [2, 8, 8, 4], strides = [1, 1, 1, 1]} : vector<2x10x10x4xf32> to vector<2x8x8x4xf32>
    %24 = arith.truncf %23 : vector<2x8x8x4xf32> to vector<2x8x8x4xbf16>
    %25 = vector.shape_cast %24 : vector<2x8x8x4xbf16> to vector<128x4xbf16>
    %c0_20 = arith.constant 0 : index
    %c16 = arith.constant 16 : index
    %26 = vector.load %arg8[%c0_20, %c16] : memref<128x36xbf16, #tpu.memory_space<vmem>>, vector<128x4xbf16>
    tpu.vector_store %arg8[%c0_20, %c16], %25 {strides = array<i32>} : memref<128x36xbf16, #tpu.memory_space<vmem>>, vector<128x4xbf16>,
    %27 = vector.extract_strided_slice %6 {offsets = [0, 1, 2, 0], sizes = [2, 8, 8, 4], strides = [1, 1, 1, 1]} : vector<2x10x10x4xf32> to vector<2x8x8x4xf32>
    %28 = arith.truncf %27 : vector<2x8x8x4xf32> to vector<2x8x8x4xbf16>
    %29 = vector.shape_cast %28 : vector<2x8x8x4xbf16> to vector<128x4xbf16>
    %c0_21 = arith.constant 0 : index
    %c20 = arith.constant 20 : index
    %30 = vector.load %arg8[%c0_21, %c20] : memref<128x36xbf16, #tpu.memory_space<vmem>>, vector<128x4xbf16>
    tpu.vector_store %arg8[%c0_21, %c20], %29 {strides = array<i32>} : memref<128x36xbf16, #tpu.memory_space<vmem>>, vector<128x4xbf16>,
    %31 = vector.extract_strided_slice %6 {offsets = [0, 2, 0, 0], sizes = [2, 8, 8, 4], strides = [1, 1, 1, 1]} : vector<2x10x10x4xf32> to vector<2x8x8x4xf32>
    %32 = arith.truncf %31 : vector<2x8x8x4xf32> to vector<2x8x8x4xbf16>
    %33 = vector.shape_cast %32 : vector<2x8x8x4xbf16> to vector<128x4xbf16>
    %c0_22 = arith.constant 0 : index
    %c24 = arith.constant 24 : index
    %34 = vector.load %arg8[%c0_22, %c24] : memref<128x36xbf16, #tpu.memory_space<vmem>>, vector<128x4xbf16>
    tpu.vector_store %arg8[%c0_22, %c24], %33 {strides = array<i32>} : memref<128x36xbf16, #tpu.memory_space<vmem>>, vector<128x4xbf16>,
    %35 = vector.extract_strided_slice %6 {offsets = [0, 2, 1, 0], sizes = [2, 8, 8, 4], strides = [1, 1, 1, 1]} : vector<2x10x10x4xf32> to vector<2x8x8x4xf32>
    %36 = arith.truncf %35 : vector<2x8x8x4xf32> to vector<2x8x8x4xbf16>
    %37 = vector.shape_cast %36 : vector<2x8x8x4xbf16> to vector<128x4xbf16>
    %c0_23 = arith.constant 0 : index
    %c28 = arith.constant 28 : index
    %38 = vector.load %arg8[%c0_23, %c28] : memref<128x36xbf16, #tpu.memory_space<vmem>>, vector<128x4xbf16>
    tpu.vector_store %arg8[%c0_23, %c28], %37 {strides = array<i32>} : memref<128x36xbf16, #tpu.memory_space<vmem>>, vector<128x4xbf16>,
    %39 = vector.extract_strided_slice %6 {offsets = [0, 2, 2, 0], sizes = [2, 8, 8, 4], strides = [1, 1, 1, 1]} : vector<2x10x10x4xf32> to vector<2x8x8x4xf32>
    %40 = arith.truncf %39 : vector<2x8x8x4xf32> to vector<2x8x8x4xbf16>
    %41 = vector.shape_cast %40 : vector<2x8x8x4xbf16> to vector<128x4xbf16>
    %c0_24 = arith.constant 0 : index
    %c32 = arith.constant 32 : index
    %42 = vector.load %arg8[%c0_24, %c32] : memref<128x36xbf16, #tpu.memory_space<vmem>>, vector<128x4xbf16>
    tpu.vector_store %arg8[%c0_24, %c32], %41 {strides = array<i32>} : memref<128x36xbf16, #tpu.memory_space<vmem>>, vector<128x4xbf16>,
    %c0_25 = arith.constant 0 : index
    %c0_26 = arith.constant 0 : index
    %43 = vector.load %arg8[%c0_25, %c0_26] : memref<128x36xbf16, #tpu.memory_space<vmem>>, vector<128x36xbf16>
    %c0_27 = arith.constant 0 : index
    %c0_28 = arith.constant 0 : index
    %44 = vector.load %arg2[%c0_27, %c0_28] : memref<36x8xbf16, #tpu.memory_space<vmem>>, vector<36x8xbf16>
    %cst_29 = arith.constant dense<0.000000e+00> : vector<128x8xf32>
    %45 = tpu.matmul %43, %44, %cst_29 {dimension_numbers = #tpu.dot_dimension_numbers<[1], [0], [0], [1], [0, 0, 1, 1], [], []>} : vector<128x36xbf16>, vector<36x8xbf16>, vector<128x8xf32> -> vector<128x8xf32>
    %c0_30 = arith.constant 0 : index
    %c0_31 = arith.constant 0 : index
    %46 = vector.load %arg3[%c0_30, %c0_31] : memref<1x8xf32, #tpu.memory_space<vmem>>, vector<1x8xf32>
    %47 = vector.broadcast %46 : vector<1x8xf32> to vector<128x8xf32>
    %48 = arith.addf %45, %47 : vector<128x8xf32>
    %cst_32 = arith.constant 0.000000e+00 : f32
    %49 = vector.broadcast %cst_32 : f32 to vector<128x8xf32>
    %50 = arith.maximumf %48, %49 : vector<128x8xf32>
    %cst_33 = arith.constant 0.000000e+00 : f32
    %51 = vector.broadcast %cst_33 : f32 to vector<2x10x10x8xf32>
    %c0_34 = arith.constant 0 : index
    %c0_35 = arith.constant 0 : index
    %c0_36 = arith.constant 0 : index
    %c0_37 = arith.constant 0 : index
    %52 = vector.load %arg9[%c0_34, %c0_35, %c0_36, %c0_37] : memref<2x10x10x8xf32, #tpu.memory_space<vmem>>, vector<2x10x10x8xf32>
    tpu.vector_store %arg9[%c0_34, %c0_35, %c0_36, %c0_37], %51 {strides = array<i32>} : memref<2x10x10x8xf32, #tpu.memory_space<vmem>>, vector<2x10x10x8xf32>,
    %53 = vector.shape_cast %50 : vector<128x8xf32> to vector<2x8x8x8xf32>
    %c0_38 = arith.constant 0 : index
    %c1_39 = arith.constant 1 : index
    %c1_40 = arith.constant 1 : index
    %c0_41 = arith.constant 0 : index
    %54 = vector.load %arg9[%c0_38, %c1_39, %c1_40, %c0_41] : memref<2x10x10x8xf32, #tpu.memory_space<vmem>>, vector<2x8x8x8xf32>
    tpu.vector_store %arg9[%c0_38, %c1_39, %c1_40, %c0_41], %53 {strides = array<i32>} : memref<2x10x10x8xf32, #tpu.memory_space<vmem>>, vector<2x8x8x8xf32>,
    %c0_42 = arith.constant 0 : index
    %c0_43 = arith.constant 0 : index
    %c0_44 = arith.constant 0 : index
    %c0_45 = arith.constant 0 : index
    %55 = vector.load %arg9[%c0_42, %c0_43, %c0_44, %c0_45] : memref<2x10x10x8xf32, #tpu.memory_space<vmem>>, vector<2x10x10x8xf32>
    %56 = vector.extract_strided_slice %55 {offsets = [0, 0, 0, 0], sizes = [2, 8, 8, 8], strides = [1, 1, 1, 1]} : vector<2x10x10x8xf32> to vector<2x8x8x8xf32>
    %57 = arith.truncf %56 : vector<2x8x8x8xf32> to vector<2x8x8x8xbf16>
    %58 = vector.shape_cast %57 : vector<2x8x8x8xbf16> to vector<128x8xbf16>
    %c0_46 = arith.constant 0 : index
    %c0_47 = arith.constant 0 : index
    %59 = vector.load %arg10[%c0_46, %c0_47] : memref<128x72xbf16, #tpu.memory_space<vmem>>, vector<128x8xbf16>
    tpu.vector_store %arg10[%c0_46, %c0_47], %58 {strides = array<i32>} : memref<128x72xbf16, #tpu.memory_space<vmem>>, vector<128x8xbf16>,
    %60 = vector.extract_strided_slice %55 {offsets = [0, 0, 1, 0], sizes = [2, 8, 8, 8], strides = [1, 1, 1, 1]} : vector<2x10x10x8xf32> to vector<2x8x8x8xf32>
    %61 = arith.truncf %60 : vector<2x8x8x8xf32> to vector<2x8x8x8xbf16>
    %62 = vector.shape_cast %61 : vector<2x8x8x8xbf16> to vector<128x8xbf16>
    %c0_48 = arith.constant 0 : index
    %c8_49 = arith.constant 8 : index
    %63 = vector.load %arg10[%c0_48, %c8_49] : memref<128x72xbf16, #tpu.memory_space<vmem>>, vector<128x8xbf16>
    tpu.vector_store %arg10[%c0_48, %c8_49], %62 {strides = array<i32>} : memref<128x72xbf16, #tpu.memory_space<vmem>>, vector<128x8xbf16>,
    %64 = vector.extract_strided_slice %55 {offsets = [0, 0, 2, 0], sizes = [2, 8, 8, 8], strides = [1, 1, 1, 1]} : vector<2x10x10x8xf32> to vector<2x8x8x8xf32>
    %65 = arith.truncf %64 : vector<2x8x8x8xf32> to vector<2x8x8x8xbf16>
    %66 = vector.shape_cast %65 : vector<2x8x8x8xbf16> to vector<128x8xbf16>
    %c0_50 = arith.constant 0 : index
    %c16_51 = arith.constant 16 : index
    %67 = vector.load %arg10[%c0_50, %c16_51] : memref<128x72xbf16, #tpu.memory_space<vmem>>, vector<128x8xbf16>
    tpu.vector_store %arg10[%c0_50, %c16_51], %66 {strides = array<i32>} : memref<128x72xbf16, #tpu.memory_space<vmem>>, vector<128x8xbf16>,
    %68 = vector.extract_strided_slice %55 {offsets = [0, 1, 0, 0], sizes = [2, 8, 8, 8], strides = [1, 1, 1, 1]} : vector<2x10x10x8xf32> to vector<2x8x8x8xf32>
    %69 = arith.truncf %68 : vector<2x8x8x8xf32> to vector<2x8x8x8xbf16>
    %70 = vector.shape_cast %69 : vector<2x8x8x8xbf16> to vector<128x8xbf16>
    %c0_52 = arith.constant 0 : index
    %c24_53 = arith.constant 24 : index
    %71 = vector.load %arg10[%c0_52, %c24_53] : memref<128x72xbf16, #tpu.memory_space<vmem>>, vector<128x8xbf16>
    tpu.vector_store %arg10[%c0_52, %c24_53], %70 {strides = array<i32>} : memref<128x72xbf16, #tpu.memory_space<vmem>>, vector<128x8xbf16>,
    %72 = vector.extract_strided_slice %55 {offsets = [0, 1, 1, 0], sizes = [2, 8, 8, 8], strides = [1, 1, 1, 1]} : vector<2x10x10x8xf32> to vector<2x8x8x8xf32>
    %73 = arith.truncf %72 : vector<2x8x8x8xf32> to vector<2x8x8x8xbf16>
    %74 = vector.shape_cast %73 : vector<2x8x8x8xbf16> to vector<128x8xbf16>
    %c0_54 = arith.constant 0 : index
    %c32_55 = arith.constant 32 : index
    %75 = vector.load %arg10[%c0_54, %c32_55] : memref<128x72xbf16, #tpu.memory_space<vmem>>, vector<128x8xbf16>
    tpu.vector_store %arg10[%c0_54, %c32_55], %74 {strides = array<i32>} : memref<128x72xbf16, #tpu.memory_space<vmem>>, vector<128x8xbf16>,
    %76 = vector.extract_strided_slice %55 {offsets = [0, 1, 2, 0], sizes = [2, 8, 8, 8], strides = [1, 1, 1, 1]} : vector<2x10x10x8xf32> to vector<2x8x8x8xf32>
    %77 = arith.truncf %76 : vector<2x8x8x8xf32> to vector<2x8x8x8xbf16>
    %78 = vector.shape_cast %77 : vector<2x8x8x8xbf16> to vector<128x8xbf16>
    %c0_56 = arith.constant 0 : index
    %c40 = arith.constant 40 : index
    %79 = vector.load %arg10[%c0_56, %c40] : memref<128x72xbf16, #tpu.memory_space<vmem>>, vector<128x8xbf16>
    tpu.vector_store %arg10[%c0_56, %c40], %78 {strides = array<i32>} : memref<128x72xbf16, #tpu.memory_space<vmem>>, vector<128x8xbf16>,
    %80 = vector.extract_strided_slice %55 {offsets = [0, 2, 0, 0], sizes = [2, 8, 8, 8], strides = [1, 1, 1, 1]} : vector<2x10x10x8xf32> to vector<2x8x8x8xf32>
    %81 = arith.truncf %80 : vector<2x8x8x8xf32> to vector<2x8x8x8xbf16>
    %82 = vector.shape_cast %81 : vector<2x8x8x8xbf16> to vector<128x8xbf16>
    %c0_57 = arith.constant 0 : index
    %c48 = arith.constant 48 : index
    %83 = vector.load %arg10[%c0_57, %c48] : memref<128x72xbf16, #tpu.memory_space<vmem>>, vector<128x8xbf16>
    tpu.vector_store %arg10[%c0_57, %c48], %82 {strides = array<i32>} : memref<128x72xbf16, #tpu.memory_space<vmem>>, vector<128x8xbf16>,
    %84 = vector.extract_strided_slice %55 {offsets = [0, 2, 1, 0], sizes = [2, 8, 8, 8], strides = [1, 1, 1, 1]} : vector<2x10x10x8xf32> to vector<2x8x8x8xf32>
    %85 = arith.truncf %84 : vector<2x8x8x8xf32> to vector<2x8x8x8xbf16>
    %86 = vector.shape_cast %85 : vector<2x8x8x8xbf16> to vector<128x8xbf16>
    %c0_58 = arith.constant 0 : index
    %c56 = arith.constant 56 : index
    %87 = vector.load %arg10[%c0_58, %c56] : memref<128x72xbf16, #tpu.memory_space<vmem>>, vector<128x8xbf16>
    tpu.vector_store %arg10[%c0_58, %c56], %86 {strides = array<i32>} : memref<128x72xbf16, #tpu.memory_space<vmem>>, vector<128x8xbf16>,
    %88 = vector.extract_strided_slice %55 {offsets = [0, 2, 2, 0], sizes = [2, 8, 8, 8], strides = [1, 1, 1, 1]} : vector<2x10x10x8xf32> to vector<2x8x8x8xf32>
    %89 = arith.truncf %88 : vector<2x8x8x8xf32> to vector<2x8x8x8xbf16>
    %90 = vector.shape_cast %89 : vector<2x8x8x8xbf16> to vector<128x8xbf16>
    %c0_59 = arith.constant 0 : index
    %c64 = arith.constant 64 : index
    %91 = vector.load %arg10[%c0_59, %c64] : memref<128x72xbf16, #tpu.memory_space<vmem>>, vector<128x8xbf16>
    tpu.vector_store %arg10[%c0_59, %c64], %90 {strides = array<i32>} : memref<128x72xbf16, #tpu.memory_space<vmem>>, vector<128x8xbf16>,
    %c0_60 = arith.constant 0 : index
    %c0_61 = arith.constant 0 : index
    %92 = vector.load %arg10[%c0_60, %c0_61] : memref<128x72xbf16, #tpu.memory_space<vmem>>, vector<128x72xbf16>
    %c0_62 = arith.constant 0 : index
    %c0_63 = arith.constant 0 : index
    %93 = vector.load %arg4[%c0_62, %c0_63] : memref<72x8xbf16, #tpu.memory_space<vmem>>, vector<72x8xbf16>
    %cst_64 = arith.constant dense<0.000000e+00> : vector<128x8xf32>
    %94 = tpu.matmul %92, %93, %cst_64 {dimension_numbers = #tpu.dot_dimension_numbers<[1], [0], [0], [1], [0, 0, 1, 1], [], []>} : vector<128x72xbf16>, vector<72x8xbf16>, vector<128x8xf32> -> vector<128x8xf32>
    %c0_65 = arith.constant 0 : index
    %c0_66 = arith.constant 0 : index
    %95 = vector.load %arg5[%c0_65, %c0_66] : memref<1x8xf32, #tpu.memory_space<vmem>>, vector<1x8xf32>
    %96 = vector.broadcast %95 : vector<1x8xf32> to vector<128x8xf32>
    %97 = arith.addf %94, %96 : vector<128x8xf32>
    %cst_67 = arith.constant 0.000000e+00 : f32
    %98 = vector.broadcast %cst_67 : f32 to vector<128x8xf32>
    %99 = arith.maximumf %97, %98 : vector<128x8xf32>
    %c0_68 = arith.constant 0 : index
    %c0_69 = arith.constant 0 : index
    %100 = vector.load %arg6[%c0_68, %c0_69] : memref<128x8xf32, #tpu.memory_space<vmem>>, vector<128x8xf32>
    tpu.vector_store %arg6[%c0_68, %c0_69], %99 {strides = array<i32>} : memref<128x8xf32, #tpu.memory_space<vmem>>, vector<128x8xf32>,
    return
  }
  func.func @transform_0(%arg0: i32) -> (i32, i32, i32, i32) {
    %c0_i32 = arith.constant 0 : i32
    %c0_i32_0 = arith.constant 0 : i32
    %c0_i32_1 = arith.constant 0 : i32
    %c0_i32_2 = arith.constant 0 : i32
    %c0_i32_3 = arith.constant 0 : i32
    return %c0_i32, %c0_i32_0, %c0_i32_1, %c0_i32_2 : i32, i32, i32, i32
  }
  func.func @transform_1(%arg0: i32) -> (i32, i32) {
    %c0_i32 = arith.constant 0 : i32
    %c0_i32_0 = arith.constant 0 : i32
    %c0_i32_1 = arith.constant 0 : i32
    return %c0_i32, %c0_i32_0 : i32, i32
  }
  func.func @transform_2(%arg0: i32) -> (i32, i32) {
    %c0_i32 = arith.constant 0 : i32
    %c0_i32_0 = arith.constant 0 : i32
    %c0_i32_1 = arith.constant 0 : i32
    return %c0_i32, %c0_i32_0 : i32, i32
  }
  func.func @transform_3(%arg0: i32) -> (i32, i32) {
    %c0_i32 = arith.constant 0 : i32
    %c0_i32_0 = arith.constant 0 : i32
    %c0_i32_1 = arith.constant 0 : i32
    return %c0_i32, %c0_i32_0 : i32, i32
  }
  func.func @transform_4(%arg0: i32) -> (i32, i32) {
    %c0_i32 = arith.constant 0 : i32
    %c0_i32_0 = arith.constant 0 : i32
    %c0_i32_1 = arith.constant 0 : i32
    return %c0_i32, %c0_i32_0 : i32, i32
  }
  func.func @transform_5(%arg0: i32) -> (i32, i32) {
    %c0_i32 = arith.constant 0 : i32
    %c0_i32_0 = arith.constant 0 : i32
    %c0_i32_1 = arith.constant 0 : i32
    return %c0_i32, %c0_i32_0 : i32, i32
  }
}

</mosaic_0001>

<llo_original>
// kernel: down_forward.1
$region0: #{down_forward.1}
  #allocation0 [shape = 'u32[]', space=smem, size = 0x4, offset = 0x4, fixed_abs, tag = 'smem constant byte address 0x4 - core index']
  #allocation1 [shape = 'u32[72,128]{1,0:T(1,128)}', space=vmem, size = 0x9000, scoped, tag = 'internal scratch']
  #allocation2 [shape = 'f32[2,10,10,4]{3,2,1,0:T(8,128)}', space=vmem, size = 0x28000, scoped, tag = 'scratch operand']
  #allocation3 [shape = 'bf16[128,36]{1,0:T(8,128)(2,1)}', space=vmem, size = 0x8000, scoped, tag = 'scratch operand']
  #allocation4 [shape = 'f32[2,10,10,8]{3,2,1,0:T(8,128)}', space=vmem, size = 0x28000, scoped, tag = 'scratch operand']
  #allocation5 [shape = 'bf16[128,72]{1,0:T(8,128)(2,1)}', space=vmem, size = 0x8000, scoped, tag = 'scratch operand']
  %s0 = inlined_call_operand.vmem [shape: f32[2,16,16,4], index: 0, kind: input, shape index: {}]
  %s1 = inlined_call_operand.vmem [shape: bf16[36,8], index: 1, kind: input, shape index: {}]
  %s2 = inlined_call_operand.vmem [shape: f32[1,8], index: 2, kind: input, shape index: {}]
  %s3 = inlined_call_operand.vmem [shape: bf16[72,8], index: 3, kind: input, shape index: {}]
  %s4 = inlined_call_operand.vmem [shape: f32[1,8], index: 4, kind: input, shape index: {}]
  %s5 = inlined_call_operand.vmem [shape: f32[128,8], index: 5, kind: output, shape index: {}]
  %s6 = sld [smem:[#allocation0]]
  $region30: #{down_forward.1} parent=0
    _
  %s8 = ssub.s32 1, %s6
  %s9 = scalar_select 0, %s8, %s6
  // Predicated region
  $region2: #{down_forward.1} parent=0 // pred_check
    _
  $region3: #{down_forward.1} parent=0 // pred_check_branch
    %11 = sbr.rel (0) target = $region5
  $region4: #{down_forward.1} parent=0 // pred_region
    _
  $region5: #{down_forward.1} parent=0 // pred_fallthru
    _
  // Predicated region
  $region6: #{down_forward.1} parent=0 // pred_check
    _
  $region7: #{down_forward.1} parent=0 // pred_check_branch
    %13 = sbr.rel (0) target = $region9
  $region8: #{down_forward.1} parent=0 // pred_region
    _
  $region9: #{down_forward.1} parent=0 // pred_fallthru
    _
  // Predicated region
  $region10: #{down_forward.1} parent=0 // pred_check
    _
  $region11: #{down_forward.1} parent=0 // pred_check_branch
    %15 = sbr.rel (0) target = $region13
  $region12: #{down_forward.1} parent=0 // pred_region
    _
  $region13: #{down_forward.1} parent=0 // pred_fallthru
    _
  // Predicated region
  $region14: #{down_forward.1} parent=0 // pred_check
    _
  $region15: #{down_forward.1} parent=0 // pred_check_branch
    %17 = sbr.rel (0) target = $region17
  $region16: #{down_forward.1} parent=0 // pred_region
    _
  $region17: #{down_forward.1} parent=0 // pred_fallthru
    _
  // Predicated region
  $region18: #{down_forward.1} parent=0 // pred_check
    _
  $region19: #{down_forward.1} parent=0 // pred_check_branch
    %19 = sbr.rel (0) target = $region21
  $region20: #{down_forward.1} parent=0 // pred_region
    _
  $region21: #{down_forward.1} parent=0 // pred_fallthru
    _
  %v21 = vld [vmem:[%s0] sm:$0xff]
  %v22 = vld [vmem:[%s0 + $0x8] sm:$0xff]
  %v23 = vld [vmem:[%s0 + $0x10] sm:$0xff]
  %v24 = vld [vmem:[%s0 + $0x18] sm:$0xff]
  %v25 = vld [vmem:[%s0 + $0x20] sm:$0xff]
  %v26 = vld [vmem:[%s0 + $0x28] sm:$0xff]
  %v27 = vld [vmem:[%s0 + $0x30] sm:$0xff]
  %v28 = vld [vmem:[%s0 + $0x38] sm:$0xff]
  %v29 = vld [vmem:[%s0 + $0x40] sm:$0xff]
  %v30 = vld [vmem:[%s0 + $0x48] sm:$0xff]
  %v31 = vld [vmem:[%s0 + $0x50] sm:$0xff]
  %v32 = vld [vmem:[%s0 + $0x58] sm:$0xff]
  %v33 = vld [vmem:[%s0 + $0x60] sm:$0xff]
  %v34 = vld [vmem:[%s0 + $0x68] sm:$0xff]
  %v35 = vld [vmem:[%s0 + $0x70] sm:$0xff]
  %v36 = vld [vmem:[%s0 + $0x78] sm:$0xff]
  %v37 = vld [vmem:[%s0 + $0x80] sm:$0xff]
  %v38 = vld [vmem:[%s0 + $0x88] sm:$0xff]
  %v39 = vld [vmem:[%s0 + $0x90] sm:$0xff]
  %v40 = vld [vmem:[%s0 + $0x98] sm:$0xff]
  %v41 = vld [vmem:[%s0 + $0xa0] sm:$0xff]
  %v42 = vld [vmem:[%s0 + $0xa8] sm:$0xff]
  %v43 = vld [vmem:[%s0 + $0xb0] sm:$0xff]
  %v44 = vld [vmem:[%s0 + $0xb8] sm:$0xff]
  %v45 = vld [vmem:[%s0 + $0xc0] sm:$0xff]
  %v46 = vld [vmem:[%s0 + $0xc8] sm:$0xff]
  %v47 = vld [vmem:[%s0 + $0xd0] sm:$0xff]
  %v48 = vld [vmem:[%s0 + $0xd8] sm:$0xff]
  %v49 = vld [vmem:[%s0 + $0xe0] sm:$0xff]
  %v50 = vld [vmem:[%s0 + $0xe8] sm:$0xff]
  %v51 = vld [vmem:[%s0 + $0xf0] sm:$0xff]
  %v52 = vld [vmem:[%s0 + $0xf8] sm:$0xff]
  %v53 = vld [vmem:[%s0 + $0x100] sm:$0xff]
  %v54 = vld [vmem:[%s0 + $0x108] sm:$0xff]
  %v55 = vld [vmem:[%s0 + $0x110] sm:$0xff]
  %v56 = vld [vmem:[%s0 + $0x118] sm:$0xff]
  %v57 = vld [vmem:[%s0 + $0x120] sm:$0xff]
  %v58 = vld [vmem:[%s0 + $0x128] sm:$0xff]
  %v59 = vld [vmem:[%s0 + $0x130] sm:$0xff]
  %v60 = vld [vmem:[%s0 + $0x138] sm:$0xff]
  %v61 = vld [vmem:[%s0 + $0x140] sm:$0xff]
  %v62 = vld [vmem:[%s0 + $0x148] sm:$0xff]
  %v63 = vld [vmem:[%s0 + $0x150] sm:$0xff]
  %v64 = vld [vmem:[%s0 + $0x158] sm:$0xff]
  %v65 = vld [vmem:[%s0 + $0x160] sm:$0xff]
  %v66 = vld [vmem:[%s0 + $0x168] sm:$0xff]
  %v67 = vld [vmem:[%s0 + $0x170] sm:$0xff]
  %v68 = vld [vmem:[%s0 + $0x178] sm:$0xff]
  %v69 = vld [vmem:[%s0 + $0x180] sm:$0xff]
  %v70 = vld [vmem:[%s0 + $0x188] sm:$0xff]
  %v71 = vld [vmem:[%s0 + $0x190] sm:$0xff]
  %v72 = vld [vmem:[%s0 + $0x198] sm:$0xff]
  %v73 = vld [vmem:[%s0 + $0x1a0] sm:$0xff]
  %v74 = vld [vmem:[%s0 + $0x1a8] sm:$0xff]
  %v75 = vld [vmem:[%s0 + $0x1b0] sm:$0xff]
  %v76 = vld [vmem:[%s0 + $0x1b8] sm:$0xff]
  %v77 = vld [vmem:[%s0 + $0x1c0] sm:$0xff]
  %v78 = vld [vmem:[%s0 + $0x1c8] sm:$0xff]
  %v79 = vld [vmem:[%s0 + $0x1d0] sm:$0xff]
  %v80 = vld [vmem:[%s0 + $0x1d8] sm:$0xff]
  %v81 = vld [vmem:[%s0 + $0x1e0] sm:$0xff]
  %v82 = vld [vmem:[%s0 + $0x1e8] sm:$0xff]
  %v83 = vld [vmem:[%s0 + $0x1f0] sm:$0xff]
  %v84 = vld [vmem:[%s0 + $0x1f8] sm:$0xff]
  %v149 = vrot.slane %v21, 2
  %v150 = vrot.slane %v21, 4
  %v151 = vrot.slane %v21, 6
  %v152 = vrot.slane %v22, 2
  %v153 = vrot.slane %v22, 4
  %v154 = vrot.slane %v22, 6
  %v155 = vrot.slane %v23, 2
  %v156 = vrot.slane %v23, 4
  %v157 = vrot.slane %v23, 6
  %v158 = vrot.slane %v24, 2
  %v159 = vrot.slane %v24, 4
  %v160 = vrot.slane %v24, 6
  %v161 = vrot.slane %v25, 2
  %v162 = vrot.slane %v25, 4
  %v163 = vrot.slane %v25, 6
  %v164 = vrot.slane %v26, 2
  %v165 = vrot.slane %v26, 4
  %v166 = vrot.slane %v26, 6
  %v167 = vrot.slane %v27, 2
  %v168 = vrot.slane %v27, 4
  %v169 = vrot.slane %v27, 6
  %v170 = vrot.slane %v28, 2
  %v171 = vrot.slane %v28, 4
  %v172 = vrot.slane %v28, 6
  %v173 = vrot.slane %v29, 2
  %v174 = vrot.slane %v29, 4
  %v175 = vrot.slane %v29, 6
  %v176 = vrot.slane %v30, 2
  %v177 = vrot.slane %v30, 4
  %v178 = vrot.slane %v30, 6
  %v179 = vrot.slane %v31, 2
  %v180 = vrot.slane %v31, 4
  %v181 = vrot.slane %v31, 6
  %v182 = vrot.slane %v32, 2
  %v183 = vrot.slane %v32, 4
  %v184 = vrot.slane %v32, 6
  %v185 = vrot.slane %v33, 2
  %v186 = vrot.slane %v33, 4
  %v187 = vrot.slane %v33, 6
  %v188 = vrot.slane %v34, 2
  %v189 = vrot.slane %v34, 4
  %v190 = vrot.slane %v34, 6
  %v191 = vrot.slane %v35, 2
  %v192 = vrot.slane %v35, 4
  %v193 = vrot.slane %v35, 6
  %v194 = vrot.slane %v36, 2
  %v195 = vrot.slane %v36, 4
  %v196 = vrot.slane %v36, 6
  %v197 = vrot.slane %v37, 2
  %v198 = vrot.slane %v37, 4
  %v199 = vrot.slane %v37, 6
  %v200 = vrot.slane %v38, 2
  %v201 = vrot.slane %v38, 4
  %v202 = vrot.slane %v38, 6
  %v203 = vrot.slane %v39, 2
  %v204 = vrot.slane %v39, 4
  %v205 = vrot.slane %v39, 6
  %v206 = vrot.slane %v40, 2
  %v207 = vrot.slane %v40, 4
  %v208 = vrot.slane %v40, 6
  %v209 = vrot.slane %v41, 2
  %v210 = vrot.slane %v41, 4
  %v211 = vrot.slane %v41, 6
  %v212 = vrot.slane %v42, 2
  %v213 = vrot.slane %v42, 4
  %v214 = vrot.slane %v42, 6
  %v215 = vrot.slane %v43, 2
  %v216 = vrot.slane %v43, 4
  %v217 = vrot.slane %v43, 6
  %v218 = vrot.slane %v44, 2
  %v219 = vrot.slane %v44, 4
  %v220 = vrot.slane %v44, 6
  %v221 = vrot.slane %v45, 2
  %v222 = vrot.slane %v45, 4
  %v223 = vrot.slane %v45, 6
  %v224 = vrot.slane %v46, 2
  %v225 = vrot.slane %v46, 4
  %v226 = vrot.slane %v46, 6
  %v227 = vrot.slane %v47, 2
  %v228 = vrot.slane %v47, 4
  %v229 = vrot.slane %v47, 6
  %v230 = vrot.slane %v48, 2
  %v231 = vrot.slane %v48, 4
  %v232 = vrot.slane %v48, 6
  %v233 = vrot.slane %v49, 2
  %v234 = vrot.slane %v49, 4
  %v235 = vrot.slane %v49, 6
  %v236 = vrot.slane %v50, 2
  %v237 = vrot.slane %v50, 4
  %v238 = vrot.slane %v50, 6
  %v239 = vrot.slane %v51, 2
  %v240 = vrot.slane %v51, 4
  %v241 = vrot.slane %v51, 6
  %v242 = vrot.slane %v52, 2
  %v243 = vrot.slane %v52, 4
  %v244 = vrot.slane %v52, 6
  %v245 = vrot.slane %v53, 2
  %v246 = vrot.slane %v53, 4
  %v247 = vrot.slane %v53, 6
  %v248 = vrot.slane %v54, 2
  %v249 = vrot.slane %v54, 4
  %v250 = vrot.slane %v54, 6
  %v251 = vrot.slane %v55, 2
  %v252 = vrot.slane %v55, 4
  %v253 = vrot.slane %v55, 6
  %v254 = vrot.slane %v56, 2
  %v255 = vrot.slane %v56, 4
  %v256 = vrot.slane %v56, 6
  %v257 = vrot.slane %v57, 2
  %v258 = vrot.slane %v57, 4
  %v259 = vrot.slane %v57, 6
  %v260 = vrot.slane %v58, 2
  %v261 = vrot.slane %v58, 4
  %v262 = vrot.slane %v58, 6
  %v263 = vrot.slane %v59, 2
  %v264 = vrot.slane %v59, 4
  %v265 = vrot.slane %v59, 6
  %v266 = vrot.slane %v60, 2
  %v267 = vrot.slane %v60, 4
  %v268 = vrot.slane %v60, 6
  %v269 = vrot.slane %v61, 2
  %v270 = vrot.slane %v61, 4
  %v271 = vrot.slane %v61, 6
  %v272 = vrot.slane %v62, 2
  %v273 = vrot.slane %v62, 4
  %v274 = vrot.slane %v62, 6
  %v275 = vrot.slane %v63, 2
  %v276 = vrot.slane %v63, 4
  %v277 = vrot.slane %v63, 6
  %v278 = vrot.slane %v64, 2
  %v279 = vrot.slane %v64, 4
  %v280 = vrot.slane %v64, 6
  %v281 = vrot.slane %v65, 2
  %v282 = vrot.slane %v65, 4
  %v283 = vrot.slane %v65, 6
  %v284 = vrot.slane %v66, 2
  %v285 = vrot.slane %v66, 4
  %v286 = vrot.slane %v66, 6
  %v287 = vrot.slane %v67, 2
  %v288 = vrot.slane %v67, 4
  %v289 = vrot.slane %v67, 6
  %v290 = vrot.slane %v68, 2
  %v291 = vrot.slane %v68, 4
  %v292 = vrot.slane %v68, 6
  %v293 = vrot.slane %v69, 2
  %v294 = vrot.slane %v69, 4
  %v295 = vrot.slane %v69, 6
  %v296 = vrot.slane %v70, 2
  %v297 = vrot.slane %v70, 4
  %v298 = vrot.slane %v70, 6
  %v299 = vrot.slane %v71, 2
  %v300 = vrot.slane %v71, 4
  %v301 = vrot.slane %v71, 6
  %v302 = vrot.slane %v72, 2
  %v303 = vrot.slane %v72, 4
  %v304 = vrot.slane %v72, 6
  %v305 = vrot.slane %v73, 2
  %v306 = vrot.slane %v73, 4
  %v307 = vrot.slane %v73, 6
  %v308 = vrot.slane %v74, 2
  %v309 = vrot.slane %v74, 4
  %v310 = vrot.slane %v74, 6
  %v311 = vrot.slane %v75, 2
  %v312 = vrot.slane %v75, 4
  %v313 = vrot.slane %v75, 6
  %v314 = vrot.slane %v76, 2
  %v315 = vrot.slane %v76, 4
  %v316 = vrot.slane %v76, 6
  %v317 = vrot.slane %v77, 2
  %v318 = vrot.slane %v77, 4
  %v319 = vrot.slane %v77, 6
  %v320 = vrot.slane %v78, 2
  %v321 = vrot.slane %v78, 4
  %v322 = vrot.slane %v78, 6
  %v323 = vrot.slane %v79, 2
  %v324 = vrot.slane %v79, 4
  %v325 = vrot.slane %v79, 6
  %v326 = vrot.slane %v80, 2
  %v327 = vrot.slane %v80, 4
  %v328 = vrot.slane %v80, 6
  %v329 = vrot.slane %v81, 2
  %v330 = vrot.slane %v81, 4
  %v331 = vrot.slane %v81, 6
  %v332 = vrot.slane %v82, 2
  %v333 = vrot.slane %v82, 4
  %v334 = vrot.slane %v82, 6
  %v335 = vrot.slane %v83, 2
  %v336 = vrot.slane %v83, 4
  %v337 = vrot.slane %v83, 6
  %v338 = vrot.slane %v84, 2
  %v339 = vrot.slane %v84, 4
  %v340 = vrot.slane %v84, 6
  %vm533 = vcmask 25600
  %v534 = vsel %vm533, %v21, -inf
  %v535 = vsel %vm533, %v23, -inf
  %v536 = vmax.f32 %v534, %v535
  %v537 = vrot.slane %v536, 4
  %v538 = vmax.f32 %v536, %v537
  %v539 = vrot.slane %v538, 2
  %v540 = vmax.f32 %v538, %v539
  %v541 = vrot.slane %v540, 1
  %v542 = vmax.f32 %v540, %v541
  %v543 = vsel %vm533, %v149, -inf
  %v544 = vsel %vm533, %v155, -inf
  %v545 = vmax.f32 %v543, %v544
  %v546 = vrot.slane %v545, 4
  %v547 = vmax.f32 %v545, %v546
  %v548 = vrot.slane %v547, 2
  %v549 = vmax.f32 %v547, %v548
  %v550 = vrot.slane %v549, 1
  %v551 = vmax.f32 %v549, %v550
  %v552 = vsel %vm533, %v150, -inf
  %v553 = vsel %vm533, %v156, -inf
  %v554 = vmax.f32 %v552, %v553
  %v555 = vrot.slane %v554, 4
  %v556 = vmax.f32 %v554, %v555
  %v557 = vrot.slane %v556, 2
  %v558 = vmax.f32 %v556, %v557
  %v559 = vrot.slane %v558, 1
  %v560 = vmax.f32 %v558, %v559
  %v561 = vsel %vm533, %v151, -inf
  %v562 = vsel %vm533, %v157, -inf
  %v563 = vmax.f32 %v561, %v562
  %v564 = vrot.slane %v563, 4
  %v565 = vmax.f32 %v563, %v564
  %v566 = vrot.slane %v565, 2
  %v567 = vmax.f32 %v565, %v566
  %v568 = vrot.slane %v567, 1
  %v569 = vmax.f32 %v567, %v568
  %v570 = vsel %vm533, %v22, -inf
  %v571 = vsel %vm533, %v24, -inf
  %v572 = vmax.f32 %v570, %v571
  %v573 = vrot.slane %v572, 4
  %v574 = vmax.f32 %v572, %v573
  %v575 = vrot.slane %v574, 2
  %v576 = vmax.f32 %v574, %v575
  %v577 = vrot.slane %v576, 1
  %v578 = vmax.f32 %v576, %v577
  %v579 = vsel %vm533, %v152, -inf
  %v580 = vsel %vm533, %v158, -inf
  %v581 = vmax.f32 %v579, %v580
  %v582 = vrot.slane %v581, 4
  %v583 = vmax.f32 %v581, %v582
  %v584 = vrot.slane %v583, 2
  %v585 = vmax.f32 %v583, %v584
  %v586 = vrot.slane %v585, 1
  %v587 = vmax.f32 %v585, %v586
  %v588 = vsel %vm533, %v153, -inf
  %v589 = vsel %vm533, %v159, -inf
  %v590 = vmax.f32 %v588, %v589
  %v591 = vrot.slane %v590, 4
  %v592 = vmax.f32 %v590, %v591
  %v593 = vrot.slane %v592, 2
  %v594 = vmax.f32 %v592, %v593
  %v595 = vrot.slane %v594, 1
  %v596 = vmax.f32 %v594, %v595
  %v597 = vsel %vm533, %v154, -inf
  %v598 = vsel %vm533, %v160, -inf
  %v599 = vmax.f32 %v597, %v598
  %v600 = vrot.slane %v599, 4
  %v601 = vmax.f32 %v599, %v600
  %v602 = vrot.slane %v601, 2
  %v603 = vmax.f32 %v601, %v602
  %v604 = vrot.slane %v603, 1
  %v605 = vmax.f32 %v603, %v604
  %v606 = vsel %vm533, %v25, -inf
  %v607 = vsel %vm533, %v27, -inf
  %v608 = vmax.f32 %v606, %v607
  %v609 = vrot.slane %v608, 4
  %v610 = vmax.f32 %v608, %v609
  %v611 = vrot.slane %v610, 2
  %v612 = vmax.f32 %v610, %v611
  %v613 = vrot.slane %v612, 1
  %v614 = vmax.f32 %v612, %v613
  %v615 = vsel %vm533, %v161, -inf
  %v616 = vsel %vm533, %v167, -inf
  %v617 = vmax.f32 %v615, %v616
  %v618 = vrot.slane %v617, 4
  %v619 = vmax.f32 %v617, %v618
  %v620 = vrot.slane %v619, 2
  %v621 = vmax.f32 %v619, %v620
  %v622 = vrot.slane %v621, 1
  %v623 = vmax.f32 %v621, %v622
  %v624 = vsel %vm533, %v162, -inf
  %v625 = vsel %vm533, %v168, -inf
  %v626 = vmax.f32 %v624, %v625
  %v627 = vrot.slane %v626, 4
  %v628 = vmax.f32 %v626, %v627
  %v629 = vrot.slane %v628, 2
  %v630 = vmax.f32 %v628, %v629
  %v631 = vrot.slane %v630, 1
  %v632 = vmax.f32 %v630, %v631
  %v633 = vsel %vm533, %v163, -inf
  %v634 = vsel %vm533, %v169, -inf
  %v635 = vmax.f32 %v633, %v634
  %v636 = vrot.slane %v635, 4
  %v637 = vmax.f32 %v635, %v636
  %v638 = vrot.slane %v637, 2
  %v639 = vmax.f32 %v637, %v638
  %v640 = vrot.slane %v639, 1
  %v641 = vmax.f32 %v639, %v640
  %v642 = vsel %vm533, %v26, -inf
  %v643 = vsel %vm533, %v28, -inf
  %v644 = vmax.f32 %v642, %v643
  %v645 = vrot.slane %v644, 4
  %v646 = vmax.f32 %v644, %v645
  %v647 = vrot.slane %v646, 2
  %v648 = vmax.f32 %v646, %v647
  %v649 = vrot.slane %v648, 1
  %v650 = vmax.f32 %v648, %v649
  %v651 = vsel %vm533, %v164, -inf
  %v652 = vsel %vm533, %v170, -inf
  %v653 = vmax.f32 %v651, %v652
  %v654 = vrot.slane %v653, 4
  %v655 = vmax.f32 %v653, %v654
  %v656 = vrot.slane %v655, 2
  %v657 = vmax.f32 %v655, %v656
  %v658 = vrot.slane %v657, 1
  %v659 = vmax.f32 %v657, %v658
  %v660 = vsel %vm533, %v165, -inf
  %v661 = vsel %vm533, %v171, -inf
  %v662 = vmax.f32 %v660, %v661
  %v663 = vrot.slane %v662, 4
  %v664 = vmax.f32 %v662, %v663
  %v665 = vrot.slane %v664, 2
  %v666 = vmax.f32 %v664, %v665
  %v667 = vrot.slane %v666, 1
  %v668 = vmax.f32 %v666, %v667
  %v669 = vsel %vm533, %v166, -inf
  %v670 = vsel %vm533, %v172, -inf
  %v671 = vmax.f32 %v669, %v670
  %v672 = vrot.slane %v671, 4
  %v673 = vmax.f32 %v671, %v672
  %v674 = vrot.slane %v673, 2
  %v675 = vmax.f32 %v673, %v674
  %v676 = vrot.slane %v675, 1
  %v677 = vmax.f32 %v675, %v676
  %v678 = vsel %vm533, %v29, -inf
  %v679 = vsel %vm533, %v31, -inf
  %v680 = vmax.f32 %v678, %v679
  %v681 = vrot.slane %v680, 4
  %v682 = vmax.f32 %v680, %v681
  %v683 = vrot.slane %v682, 2
  %v684 = vmax.f32 %v682, %v683
  %v685 = vrot.slane %v684, 1
  %v686 = vmax.f32 %v684, %v685
  %v687 = vsel %vm533, %v173, -inf
  %v688 = vsel %vm533, %v179, -inf
  %v689 = vmax.f32 %v687, %v688
  %v690 = vrot.slane %v689, 4
  %v691 = vmax.f32 %v689, %v690
  %v692 = vrot.slane %v691, 2
  %v693 = vmax.f32 %v691, %v692
  %v694 = vrot.slane %v693, 1
  %v695 = vmax.f32 %v693, %v694
  %v696 = vsel %vm533, %v174, -inf
  %v697 = vsel %vm533, %v180, -inf
  %v698 = vmax.f32 %v696, %v697
  %v699 = vrot.slane %v698, 4
  %v700 = vmax.f32 %v698, %v699
  %v701 = vrot.slane %v700, 2
  %v702 = vmax.f32 %v700, %v701
  %v703 = vrot.slane %v702, 1
  %v704 = vmax.f32 %v702, %v703
  %v705 = vsel %vm533, %v175, -inf
  %v706 = vsel %vm533, %v181, -inf
  %v707 = vmax.f32 %v705, %v706
  %v708 = vrot.slane %v707, 4
  %v709 = vmax.f32 %v707, %v708
  %v710 = vrot.slane %v709, 2
  %v711 = vmax.f32 %v709, %v710
  %v712 = vrot.slane %v711, 1
  %v713 = vmax.f32 %v711, %v712
  %v714 = vsel %vm533, %v30, -inf
  %v715 = vsel %vm533, %v32, -inf
  %v716 = vmax.f32 %v714, %v715
  %v717 = vrot.slane %v716, 4
  %v718 = vmax.f32 %v716, %v717
  %v719 = vrot.slane %v718, 2
  %v720 = vmax.f32 %v718, %v719
  %v721 = vrot.slane %v720, 1
  %v722 = vmax.f32 %v720, %v721
  %v723 = vsel %vm533, %v176, -inf
  %v724 = vsel %vm533, %v182, -inf
  %v725 = vmax.f32 %v723, %v724
  %v726 = vrot.slane %v725, 4
  %v727 = vmax.f32 %v725, %v726
  %v728 = vrot.slane %v727, 2
  %v729 = vmax.f32 %v727, %v728
  %v730 = vrot.slane %v729, 1
  %v731 = vmax.f32 %v729, %v730
  %v732 = vsel %vm533, %v177, -inf
  %v733 = vsel %vm533, %v183, -inf
  %v734 = vmax.f32 %v732, %v733
  %v735 = vrot.slane %v734, 4
  %v736 = vmax.f32 %v734, %v735
  %v737 = vrot.slane %v736, 2
  %v738 = vmax.f32 %v736, %v737
  %v739 = vrot.slane %v738, 1
  %v740 = vmax.f32 %v738, %v739
  %v741 = vsel %vm533, %v178, -inf
  %v742 = vsel %vm533, %v184, -inf
  %v743 = vmax.f32 %v741, %v742
  %v744 = vrot.slane %v743, 4
  %v745 = vmax.f32 %v743, %v744
  %v746 = vrot.slane %v745, 2
  %v747 = vmax.f32 %v745, %v746
  %v748 = vrot.slane %v747, 1
  %v749 = vmax.f32 %v747, %v748
  %v750 = vsel %vm533, %v33, -inf
  %v751 = vsel %vm533, %v35, -inf
  %v752 = vmax.f32 %v750, %v751
  %v753 = vrot.slane %v752, 4
  %v754 = vmax.f32 %v752, %v753
  %v755 = vrot.slane %v754, 2
  %v756 = vmax.f32 %v754, %v755
  %v757 = vrot.slane %v756, 1
  %v758 = vmax.f32 %v756, %v757
  %v759 = vsel %vm533, %v185, -inf
  %v760 = vsel %vm533, %v191, -inf
  %v761 = vmax.f32 %v759, %v760
  %v762 = vrot.slane %v761, 4
  %v763 = vmax.f32 %v761, %v762
  %v764 = vrot.slane %v763, 2
  %v765 = vmax.f32 %v763, %v764
  %v766 = vrot.slane %v765, 1
  %v767 = vmax.f32 %v765, %v766
  %v768 = vsel %vm533, %v186, -inf
  %v769 = vsel %vm533, %v192, -inf
  %v770 = vmax.f32 %v768, %v769
  %v771 = vrot.slane %v770, 4
  %v772 = vmax.f32 %v770, %v771
  %v773 = vrot.slane %v772, 2
  %v774 = vmax.f32 %v772, %v773
  %v775 = vrot.slane %v774, 1
  %v776 = vmax.f32 %v774, %v775
  %v777 = vsel %vm533, %v187, -inf
  %v778 = vsel %vm533, %v193, -inf
  %v779 = vmax.f32 %v777, %v778
  %v780 = vrot.slane %v779, 4
  %v781 = vmax.f32 %v779, %v780
  %v782 = vrot.slane %v781, 2
  %v783 = vmax.f32 %v781, %v782
  %v784 = vrot.slane %v783, 1
  %v785 = vmax.f32 %v783, %v784
  %v786 = vsel %vm533, %v34, -inf
  %v787 = vsel %vm533, %v36, -inf
  %v788 = vmax.f32 %v786, %v787
  %v789 = vrot.slane %v788, 4
  %v790 = vmax.f32 %v788, %v789
  %v791 = vrot.slane %v790, 2
  %v792 = vmax.f32 %v790, %v791
  %v793 = vrot.slane %v792, 1
  %v794 = vmax.f32 %v792, %v793
  %v795 = vsel %vm533, %v188, -inf
  %v796 = vsel %vm533, %v194, -inf
  %v797 = vmax.f32 %v795, %v796
  %v798 = vrot.slane %v797, 4
  %v799 = vmax.f32 %v797, %v798
  %v800 = vrot.slane %v799, 2
  %v801 = vmax.f32 %v799, %v800
  %v802 = vrot.slane %v801, 1
  %v803 = vmax.f32 %v801, %v802
  %v804 = vsel %vm533, %v189, -inf
  %v805 = vsel %vm533, %v195, -inf
  %v806 = vmax.f32 %v804, %v805
  %v807 = vrot.slane %v806, 4
  %v808 = vmax.f32 %v806, %v807
  %v809 = vrot.slane %v808, 2
  %v810 = vmax.f32 %v808, %v809
  %v811 = vrot.slane %v810, 1
  %v812 = vmax.f32 %v810, %v811
  %v813 = vsel %vm533, %v190, -inf
  %v814 = vsel %vm533, %v196, -inf
  %v815 = vmax.f32 %v813, %v814
  %v816 = vrot.slane %v815, 4
  %v817 = vmax.f32 %v815, %v816
  %v818 = vrot.slane %v817, 2
  %v819 = vmax.f32 %v817, %v818
  %v820 = vrot.slane %v819, 1
  %v821 = vmax.f32 %v819, %v820
  %v822 = vsel %vm533, %v37, -inf
  %v823 = vsel %vm533, %v39, -inf
  %v824 = vmax.f32 %v822, %v823
  %v825 = vrot.slane %v824, 4
  %v826 = vmax.f32 %v824, %v825
  %v827 = vrot.slane %v826, 2
  %v828 = vmax.f32 %v826, %v827
  %v829 = vrot.slane %v828, 1
  %v830 = vmax.f32 %v828, %v829
  %v831 = vsel %vm533, %v197, -inf
  %v832 = vsel %vm533, %v203, -inf
  %v833 = vmax.f32 %v831, %v832
  %v834 = vrot.slane %v833, 4
  %v835 = vmax.f32 %v833, %v834
  %v836 = vrot.slane %v835, 2
  %v837 = vmax.f32 %v835, %v836
  %v838 = vrot.slane %v837, 1
  %v839 = vmax.f32 %v837, %v838
  %v840 = vsel %vm533, %v198, -inf
  %v841 = vsel %vm533, %v204, -inf
  %v842 = vmax.f32 %v840, %v841
  %v843 = vrot.slane %v842, 4
  %v844 = vmax.f32 %v842, %v843
  %v845 = vrot.slane %v844, 2
  %v846 = vmax.f32 %v844, %v845
  %v847 = vrot.slane %v846, 1
  %v848 = vmax.f32 %v846, %v847
  %v849 = vsel %vm533, %v199, -inf
  %v850 = vsel %vm533, %v205, -inf
  %v851 = vmax.f32 %v849, %v850
  %v852 = vrot.slane %v851, 4
  %v853 = vmax.f32 %v851, %v852
  %v854 = vrot.slane %v853, 2
  %v855 = vmax.f32 %v853, %v854
  %v856 = vrot.slane %v855, 1
  %v857 = vmax.f32 %v855, %v856
  %v858 = vsel %vm533, %v38, -inf
  %v859 = vsel %vm533, %v40, -inf
  %v860 = vmax.f32 %v858, %v859
  %v861 = vrot.slane %v860, 4
  %v862 = vmax.f32 %v860, %v861
  %v863 = vrot.slane %v862, 2
  %v864 = vmax.f32 %v862, %v863
  %v865 = vrot.slane %v864, 1
  %v866 = vmax.f32 %v864, %v865
  %v867 = vsel %vm533, %v200, -inf
  %v868 = vsel %vm533, %v206, -inf
  %v869 = vmax.f32 %v867, %v868
  %v870 = vrot.slane %v869, 4
  %v871 = vmax.f32 %v869, %v870
  %v872 = vrot.slane %v871, 2
  %v873 = vmax.f32 %v871, %v872
  %v874 = vrot.slane %v873, 1
  %v875 = vmax.f32 %v873, %v874
  %v876 = vsel %vm533, %v201, -inf
  %v877 = vsel %vm533, %v207, -inf
  %v878 = vmax.f32 %v876, %v877
  %v879 = vrot.slane %v878, 4
  %v880 = vmax.f32 %v878, %v879
  %v881 = vrot.slane %v880, 2
  %v882 = vmax.f32 %v880, %v881
  %v883 = vrot.slane %v882, 1
  %v884 = vmax.f32 %v882, %v883
  %v885 = vsel %vm533, %v202, -inf
  %v886 = vsel %vm533, %v208, -inf
  %v887 = vmax.f32 %v885, %v886
  %v888 = vrot.slane %v887, 4
  %v889 = vmax.f32 %v887, %v888
  %v890 = vrot.slane %v889, 2
  %v891 = vmax.f32 %v889, %v890
  %v892 = vrot.slane %v891, 1
  %v893 = vmax.f32 %v891, %v892
  %v894 = vsel %vm533, %v41, -inf
  %v895 = vsel %vm533, %v43, -inf
  %v896 = vmax.f32 %v894, %v895
  %v897 = vrot.slane %v896, 4
  %v898 = vmax.f32 %v896, %v897
  %v899 = vrot.slane %v898, 2
  %v900 = vmax.f32 %v898, %v899
  %v901 = vrot.slane %v900, 1
  %v902 = vmax.f32 %v900, %v901
  %v903 = vsel %vm533, %v209, -inf
  %v904 = vsel %vm533, %v215, -inf
  %v905 = vmax.f32 %v903, %v904
  %v906 = vrot.slane %v905, 4
  %v907 = vmax.f32 %v905, %v906
  %v908 = vrot.slane %v907, 2
  %v909 = vmax.f32 %v907, %v908
  %v910 = vrot.slane %v909, 1
  %v911 = vmax.f32 %v909, %v910
  %v912 = vsel %vm533, %v210, -inf
  %v913 = vsel %vm533, %v216, -inf
  %v914 = vmax.f32 %v912, %v913
  %v915 = vrot.slane %v914, 4
  %v916 = vmax.f32 %v914, %v915
  %v917 = vrot.slane %v916, 2
  %v918 = vmax.f32 %v916, %v917
  %v919 = vrot.slane %v918, 1
  %v920 = vmax.f32 %v918, %v919
  %v921 = vsel %vm533, %v211, -inf
  %v922 = vsel %vm533, %v217, -inf
  %v923 = vmax.f32 %v921, %v922
  %v924 = vrot.slane %v923, 4
  %v925 = vmax.f32 %v923, %v924
  %v926 = vrot.slane %v925, 2
  %v927 = vmax.f32 %v925, %v926
  %v928 = vrot.slane %v927, 1
  %v929 = vmax.f32 %v927, %v928
  %v930 = vsel %vm533, %v42, -inf
  %v931 = vsel %vm533, %v44, -inf
  %v932 = vmax.f32 %v930, %v931
  %v933 = vrot.slane %v932, 4
  %v934 = vmax.f32 %v932, %v933
  %v935 = vrot.slane %v934, 2
  %v936 = vmax.f32 %v934, %v935
  %v937 = vrot.slane %v936, 1
  %v938 = vmax.f32 %v936, %v937
  %v939 = vsel %vm533, %v212, -inf
  %v940 = vsel %vm533, %v218, -inf
  %v941 = vmax.f32 %v939, %v940
  %v942 = vrot.slane %v941, 4
  %v943 = vmax.f32 %v941, %v942
  %v944 = vrot.slane %v943, 2
  %v945 = vmax.f32 %v943, %v944
  %v946 = vrot.slane %v945, 1
  %v947 = vmax.f32 %v945, %v946
  %v948 = vsel %vm533, %v213, -inf
  %v949 = vsel %vm533, %v219, -inf
  %v950 = vmax.f32 %v948, %v949
  %v951 = vrot.slane %v950, 4
  %v952 = vmax.f32 %v950, %v951
  %v953 = vrot.slane %v952, 2
  %v954 = vmax.f32 %v952, %v953
  %v955 = vrot.slane %v954, 1
  %v956 = vmax.f32 %v954, %v955
  %v957 = vsel %vm533, %v214, -inf
  %v958 = vsel %vm533, %v220, -inf
  %v959 = vmax.f32 %v957, %v958
  %v960 = vrot.slane %v959, 4
  %v961 = vmax.f32 %v959, %v960
  %v962 = vrot.slane %v961, 2
  %v963 = vmax.f32 %v961, %v962
  %v964 = vrot.slane %v963, 1
  %v965 = vmax.f32 %v963, %v964
  %v966 = vsel %vm533, %v45, -inf
  %v967 = vsel %vm533, %v47, -inf
  %v968 = vmax.f32 %v966, %v967
  %v969 = vrot.slane %v968, 4
  %v970 = vmax.f32 %v968, %v969
  %v971 = vrot.slane %v970, 2
  %v972 = vmax.f32 %v970, %v971
  %v973 = vrot.slane %v972, 1
  %v974 = vmax.f32 %v972, %v973
  %v975 = vsel %vm533, %v221, -inf
  %v976 = vsel %vm533, %v227, -inf
  %v977 = vmax.f32 %v975, %v976
  %v978 = vrot.slane %v977, 4
  %v979 = vmax.f32 %v977, %v978
  %v980 = vrot.slane %v979, 2
  %v981 = vmax.f32 %v979, %v980
  %v982 = vrot.slane %v981, 1
  %v983 = vmax.f32 %v981, %v982
  %v984 = vsel %vm533, %v222, -inf
  %v985 = vsel %vm533, %v228, -inf
  %v986 = vmax.f32 %v984, %v985
  %v987 = vrot.slane %v986, 4
  %v988 = vmax.f32 %v986, %v987
  %v989 = vrot.slane %v988, 2
  %v990 = vmax.f32 %v988, %v989
  %v991 = vrot.slane %v990, 1
  %v992 = vmax.f32 %v990, %v991
  %v993 = vsel %vm533, %v223, -inf
  %v994 = vsel %vm533, %v229, -inf
  %v995 = vmax.f32 %v993, %v994
  %v996 = vrot.slane %v995, 4
  %v997 = vmax.f32 %v995, %v996
  %v998 = vrot.slane %v997, 2
  %v999 = vmax.f32 %v997, %v998
  %v1000 = vrot.slane %v999, 1
  %v1001 = vmax.f32 %v999, %v1000
  %v1002 = vsel %vm533, %v46, -inf
  %v1003 = vsel %vm533, %v48, -inf
  %v1004 = vmax.f32 %v1002, %v1003
  %v1005 = vrot.slane %v1004, 4
  %v1006 = vmax.f32 %v1004, %v1005
  %v1007 = vrot.slane %v1006, 2
  %v1008 = vmax.f32 %v1006, %v1007
  %v1009 = vrot.slane %v1008, 1
  %v1010 = vmax.f32 %v1008, %v1009
  %v1011 = vsel %vm533, %v224, -inf
  %v1012 = vsel %vm533, %v230, -inf
  %v1013 = vmax.f32 %v1011, %v1012
  %v1014 = vrot.slane %v1013, 4
  %v1015 = vmax.f32 %v1013, %v1014
  %v1016 = vrot.slane %v1015, 2
  %v1017 = vmax.f32 %v1015, %v1016
  %v1018 = vrot.slane %v1017, 1
  %v1019 = vmax.f32 %v1017, %v1018
  %v1020 = vsel %vm533, %v225, -inf
  %v1021 = vsel %vm533, %v231, -inf
  %v1022 = vmax.f32 %v1020, %v1021
  %v1023 = vrot.slane %v1022, 4
  %v1024 = vmax.f32 %v1022, %v1023
  %v1025 = vrot.slane %v1024, 2
  %v1026 = vmax.f32 %v1024, %v1025
  %v1027 = vrot.slane %v1026, 1
  %v1028 = vmax.f32 %v1026, %v1027
  %v1029 = vsel %vm533, %v226, -inf
  %v1030 = vsel %vm533, %v232, -inf
  %v1031 = vmax.f32 %v1029, %v1030
  %v1032 = vrot.slane %v1031, 4
  %v1033 = vmax.f32 %v1031, %v1032
  %v1034 = vrot.slane %v1033, 2
  %v1035 = vmax.f32 %v1033, %v1034
  %v1036 = vrot.slane %v1035, 1
  %v1037 = vmax.f32 %v1035, %v1036
  %v1038 = vsel %vm533, %v49, -inf
  %v1039 = vsel %vm533, %v51, -inf
  %v1040 = vmax.f32 %v1038, %v1039
  %v1041 = vrot.slane %v1040, 4
  %v1042 = vmax.f32 %v1040, %v1041
  %v1043 = vrot.slane %v1042, 2
  %v1044 = vmax.f32 %v1042, %v1043
  %v1045 = vrot.slane %v1044, 1
  %v1046 = vmax.f32 %v1044, %v1045
  %v1047 = vsel %vm533, %v233, -inf
  %v1048 = vsel %vm533, %v239, -inf
  %v1049 = vmax.f32 %v1047, %v1048
  %v1050 = vrot.slane %v1049, 4
  %v1051 = vmax.f32 %v1049, %v1050
  %v1052 = vrot.slane %v1051, 2
  %v1053 = vmax.f32 %v1051, %v1052
  %v1054 = vrot.slane %v1053, 1
  %v1055 = vmax.f32 %v1053, %v1054
  %v1056 = vsel %vm533, %v234, -inf
  %v1057 = vsel %vm533, %v240, -inf
  %v1058 = vmax.f32 %v1056, %v1057
  %v1059 = vrot.slane %v1058, 4
  %v1060 = vmax.f32 %v1058, %v1059
  %v1061 = vrot.slane %v1060, 2
  %v1062 = vmax.f32 %v1060, %v1061
  %v1063 = vrot.slane %v1062, 1
  %v1064 = vmax.f32 %v1062, %v1063
  %v1065 = vsel %vm533, %v235, -inf
  %v1066 = vsel %vm533, %v241, -inf
  %v1067 = vmax.f32 %v1065, %v1066
  %v1068 = vrot.slane %v1067, 4
  %v1069 = vmax.f32 %v1067, %v1068
  %v1070 = vrot.slane %v1069, 2
  %v1071 = vmax.f32 %v1069, %v1070
  %v1072 = vrot.slane %v1071, 1
  %v1073 = vmax.f32 %v1071, %v1072
  %v1074 = vsel %vm533, %v50, -inf
  %v1075 = vsel %vm533, %v52, -inf
  %v1076 = vmax.f32 %v1074, %v1075
  %v1077 = vrot.slane %v1076, 4
  %v1078 = vmax.f32 %v1076, %v1077
  %v1079 = vrot.slane %v1078, 2
  %v1080 = vmax.f32 %v1078, %v1079
  %v1081 = vrot.slane %v1080, 1
  %v1082 = vmax.f32 %v1080, %v1081
  %v1083 = vsel %vm533, %v236, -inf
  %v1084 = vsel %vm533, %v242, -inf
  %v1085 = vmax.f32 %v1083, %v1084
  %v1086 = vrot.slane %v1085, 4
  %v1087 = vmax.f32 %v1085, %v1086
  %v1088 = vrot.slane %v1087, 2
  %v1089 = vmax.f32 %v1087, %v1088
  %v1090 = vrot.slane %v1089, 1
  %v1091 = vmax.f32 %v1089, %v1090
  %v1092 = vsel %vm533, %v237, -inf
  %v1093 = vsel %vm533, %v243, -inf
  %v1094 = vmax.f32 %v1092, %v1093
  %v1095 = vrot.slane %v1094, 4
  %v1096 = vmax.f32 %v1094, %v1095
  %v1097 = vrot.slane %v1096, 2
  %v1098 = vmax.f32 %v1096, %v1097
  %v1099 = vrot.slane %v1098, 1
  %v1100 = vmax.f32 %v1098, %v1099
  %v1101 = vsel %vm533, %v238, -inf
  %v1102 = vsel %vm533, %v244, -inf
  %v1103 = vmax.f32 %v1101, %v1102
  %v1104 = vrot.slane %v1103, 4
  %v1105 = vmax.f32 %v1103, %v1104
  %v1106 = vrot.slane %v1105, 2
  %v1107 = vmax.f32 %v1105, %v1106
  %v1108 = vrot.slane %v1107, 1
  %v1109 = vmax.f32 %v1107, %v1108
  %v1110 = vsel %vm533, %v53, -inf
  %v1111 = vsel %vm533, %v55, -inf
  %v1112 = vmax.f32 %v1110, %v1111
  %v1113 = vrot.slane %v1112, 4
  %v1114 = vmax.f32 %v1112, %v1113
  %v1115 = vrot.slane %v1114, 2
  %v1116 = vmax.f32 %v1114, %v1115
  %v1117 = vrot.slane %v1116, 1
  %v1118 = vmax.f32 %v1116, %v1117
  %v1119 = vsel %vm533, %v245, -inf
  %v1120 = vsel %vm533, %v251, -inf
  %v1121 = vmax.f32 %v1119, %v1120
  %v1122 = vrot.slane %v1121, 4
  %v1123 = vmax.f32 %v1121, %v1122
  %v1124 = vrot.slane %v1123, 2
  %v1125 = vmax.f32 %v1123, %v1124
  %v1126 = vrot.slane %v1125, 1
  %v1127 = vmax.f32 %v1125, %v1126
  %v1128 = vsel %vm533, %v246, -inf
  %v1129 = vsel %vm533, %v252, -inf
  %v1130 = vmax.f32 %v1128, %v1129
  %v1131 = vrot.slane %v1130, 4
  %v1132 = vmax.f32 %v1130, %v1131
  %v1133 = vrot.slane %v1132, 2
  %v1134 = vmax.f32 %v1132, %v1133
  %v1135 = vrot.slane %v1134, 1
  %v1136 = vmax.f32 %v1134, %v1135
  %v1137 = vsel %vm533, %v247, -inf
  %v1138 = vsel %vm533, %v253, -inf
  %v1139 = vmax.f32 %v1137, %v1138
  %v1140 = vrot.slane %v1139, 4
  %v1141 = vmax.f32 %v1139, %v1140
  %v1142 = vrot.slane %v1141, 2
  %v1143 = vmax.f32 %v1141, %v1142
  %v1144 = vrot.slane %v1143, 1
  %v1145 = vmax.f32 %v1143, %v1144
  %v1146 = vsel %vm533, %v54, -inf
  %v1147 = vsel %vm533, %v56, -inf
  %v1148 = vmax.f32 %v1146, %v1147
  %v1149 = vrot.slane %v1148, 4
  %v1150 = vmax.f32 %v1148, %v1149
  %v1151 = vrot.slane %v1150, 2
  %v1152 = vmax.f32 %v1150, %v1151
  %v1153 = vrot.slane %v1152, 1
  %v1154 = vmax.f32 %v1152, %v1153
  %v1155 = vsel %vm533, %v248, -inf
  %v1156 = vsel %vm533, %v254, -inf
  %v1157 = vmax.f32 %v1155, %v1156
  %v1158 = vrot.slane %v1157, 4
  %v1159 = vmax.f32 %v1157, %v1158
  %v1160 = vrot.slane %v1159, 2
  %v1161 = vmax.f32 %v1159, %v1160
  %v1162 = vrot.slane %v1161, 1
  %v1163 = vmax.f32 %v1161, %v1162
  %v1164 = vsel %vm533, %v249, -inf
  %v1165 = vsel %vm533, %v255, -inf
  %v1166 = vmax.f32 %v1164, %v1165
  %v1167 = vrot.slane %v1166, 4
  %v1168 = vmax.f32 %v1166, %v1167
  %v1169 = vrot.slane %v1168, 2
  %v1170 = vmax.f32 %v1168, %v1169
  %v1171 = vrot.slane %v1170, 1
  %v1172 = vmax.f32 %v1170, %v1171
  %v1173 = vsel %vm533, %v250, -inf
  %v1174 = vsel %vm533, %v256, -inf
  %v1175 = vmax.f32 %v1173, %v1174
  %v1176 = vrot.slane %v1175, 4
  %v1177 = vmax.f32 %v1175, %v1176
  %v1178 = vrot.slane %v1177, 2
  %v1179 = vmax.f32 %v1177, %v1178
  %v1180 = vrot.slane %v1179, 1
  %v1181 = vmax.f32 %v1179, %v1180
  %v1182 = vsel %vm533, %v57, -inf
  %v1183 = vsel %vm533, %v59, -inf
  %v1184 = vmax.f32 %v1182, %v1183
  %v1185 = vrot.slane %v1184, 4
  %v1186 = vmax.f32 %v1184, %v1185
  %v1187 = vrot.slane %v1186, 2
  %v1188 = vmax.f32 %v1186, %v1187
  %v1189 = vrot.slane %v1188, 1
  %v1190 = vmax.f32 %v1188, %v1189
  %v1191 = vsel %vm533, %v257, -inf
  %v1192 = vsel %vm533, %v263, -inf
  %v1193 = vmax.f32 %v1191, %v1192
  %v1194 = vrot.slane %v1193, 4
  %v1195 = vmax.f32 %v1193, %v1194
  %v1196 = vrot.slane %v1195, 2
  %v1197 = vmax.f32 %v1195, %v1196
  %v1198 = vrot.slane %v1197, 1
  %v1199 = vmax.f32 %v1197, %v1198
  %v1200 = vsel %vm533, %v258, -inf
  %v1201 = vsel %vm533, %v264, -inf
  %v1202 = vmax.f32 %v1200, %v1201
  %v1203 = vrot.slane %v1202, 4
  %v1204 = vmax.f32 %v1202, %v1203
  %v1205 = vrot.slane %v1204, 2
  %v1206 = vmax.f32 %v1204, %v1205
  %v1207 = vrot.slane %v1206, 1
  %v1208 = vmax.f32 %v1206, %v1207
  %v1209 = vsel %vm533, %v259, -inf
  %v1210 = vsel %vm533, %v265, -inf
  %v1211 = vmax.f32 %v1209, %v1210
  %v1212 = vrot.slane %v1211, 4
  %v1213 = vmax.f32 %v1211, %v1212
  %v1214 = vrot.slane %v1213, 2
  %v1215 = vmax.f32 %v1213, %v1214
  %v1216 = vrot.slane %v1215, 1
  %v1217 = vmax.f32 %v1215, %v1216
  %v1218 = vsel %vm533, %v58, -inf
  %v1219 = vsel %vm533, %v60, -inf
  %v1220 = vmax.f32 %v1218, %v1219
  %v1221 = vrot.slane %v1220, 4
  %v1222 = vmax.f32 %v1220, %v1221
  %v1223 = vrot.slane %v1222, 2
  %v1224 = vmax.f32 %v1222, %v1223
  %v1225 = vrot.slane %v1224, 1
  %v1226 = vmax.f32 %v1224, %v1225
  %v1227 = vsel %vm533, %v260, -inf
  %v1228 = vsel %vm533, %v266, -inf
  %v1229 = vmax.f32 %v1227, %v1228
  %v1230 = vrot.slane %v1229, 4
  %v1231 = vmax.f32 %v1229, %v1230
  %v1232 = vrot.slane %v1231, 2
  %v1233 = vmax.f32 %v1231, %v1232
  %v1234 = vrot.slane %v1233, 1
  %v1235 = vmax.f32 %v1233, %v1234
  %v1236 = vsel %vm533, %v261, -inf
  %v1237 = vsel %vm533, %v267, -inf
  %v1238 = vmax.f32 %v1236, %v1237
  %v1239 = vrot.slane %v1238, 4
  %v1240 = vmax.f32 %v1238, %v1239
  %v1241 = vrot.slane %v1240, 2
  %v1242 = vmax.f32 %v1240, %v1241
  %v1243 = vrot.slane %v1242, 1
  %v1244 = vmax.f32 %v1242, %v1243
  %v1245 = vsel %vm533, %v262, -inf
  %v1246 = vsel %vm533, %v268, -inf
  %v1247 = vmax.f32 %v1245, %v1246
  %v1248 = vrot.slane %v1247, 4
  %v1249 = vmax.f32 %v1247, %v1248
  %v1250 = vrot.slane %v1249, 2
  %v1251 = vmax.f32 %v1249, %v1250
  %v1252 = vrot.slane %v1251, 1
  %v1253 = vmax.f32 %v1251, %v1252
  %v1254 = vsel %vm533, %v61, -inf
  %v1255 = vsel %vm533, %v63, -inf
  %v1256 = vmax.f32 %v1254, %v1255
  %v1257 = vrot.slane %v1256, 4
  %v1258 = vmax.f32 %v1256, %v1257
  %v1259 = vrot.slane %v1258, 2
  %v1260 = vmax.f32 %v1258, %v1259
  %v1261 = vrot.slane %v1260, 1
  %v1262 = vmax.f32 %v1260, %v1261
  %v1263 = vsel %vm533, %v269, -inf
  %v1264 = vsel %vm533, %v275, -inf
  %v1265 = vmax.f32 %v1263, %v1264
  %v1266 = vrot.slane %v1265, 4
  %v1267 = vmax.f32 %v1265, %v1266
  %v1268 = vrot.slane %v1267, 2
  %v1269 = vmax.f32 %v1267, %v1268
  %v1270 = vrot.slane %v1269, 1
  %v1271 = vmax.f32 %v1269, %v1270
  %v1272 = vsel %vm533, %v270, -inf
  %v1273 = vsel %vm533, %v276, -inf
  %v1274 = vmax.f32 %v1272, %v1273
  %v1275 = vrot.slane %v1274, 4
  %v1276 = vmax.f32 %v1274, %v1275
  %v1277 = vrot.slane %v1276, 2
  %v1278 = vmax.f32 %v1276, %v1277
  %v1279 = vrot.slane %v1278, 1
  %v1280 = vmax.f32 %v1278, %v1279
  %v1281 = vsel %vm533, %v271, -inf
  %v1282 = vsel %vm533, %v277, -inf
  %v1283 = vmax.f32 %v1281, %v1282
  %v1284 = vrot.slane %v1283, 4
  %v1285 = vmax.f32 %v1283, %v1284
  %v1286 = vrot.slane %v1285, 2
  %v1287 = vmax.f32 %v1285, %v1286
  %v1288 = vrot.slane %v1287, 1
  %v1289 = vmax.f32 %v1287, %v1288
  %v1290 = vsel %vm533, %v62, -inf
  %v1291 = vsel %vm533, %v64, -inf
  %v1292 = vmax.f32 %v1290, %v1291
  %v1293 = vrot.slane %v1292, 4
  %v1294 = vmax.f32 %v1292, %v1293
  %v1295 = vrot.slane %v1294, 2
  %v1296 = vmax.f32 %v1294, %v1295
  %v1297 = vrot.slane %v1296, 1
  %v1298 = vmax.f32 %v1296, %v1297
  %v1299 = vsel %vm533, %v272, -inf
  %v1300 = vsel %vm533, %v278, -inf
  %v1301 = vmax.f32 %v1299, %v1300
  %v1302 = vrot.slane %v1301, 4
  %v1303 = vmax.f32 %v1301, %v1302
  %v1304 = vrot.slane %v1303, 2
  %v1305 = vmax.f32 %v1303, %v1304
  %v1306 = vrot.slane %v1305, 1
  %v1307 = vmax.f32 %v1305, %v1306
  %v1308 = vsel %vm533, %v273, -inf
  %v1309 = vsel %vm533, %v279, -inf
  %v1310 = vmax.f32 %v1308, %v1309
  %v1311 = vrot.slane %v1310, 4
  %v1312 = vmax.f32 %v1310, %v1311
  %v1313 = vrot.slane %v1312, 2
  %v1314 = vmax.f32 %v1312, %v1313
  %v1315 = vrot.slane %v1314, 1
  %v1316 = vmax.f32 %v1314, %v1315
  %v1317 = vsel %vm533, %v274, -inf
  %v1318 = vsel %vm533, %v280, -inf
  %v1319 = vmax.f32 %v1317, %v1318
  %v1320 = vrot.slane %v1319, 4
  %v1321 = vmax.f32 %v1319, %v1320
  %v1322 = vrot.slane %v1321, 2
  %v1323 = vmax.f32 %v1321, %v1322
  %v1324 = vrot.slane %v1323, 1
  %v1325 = vmax.f32 %v1323, %v1324
  %v1326 = vsel %vm533, %v65, -inf
  %v1327 = vsel %vm533, %v67, -inf
  %v1328 = vmax.f32 %v1326, %v1327
  %v1329 = vrot.slane %v1328, 4
  %v1330 = vmax.f32 %v1328, %v1329
  %v1331 = vrot.slane %v1330, 2
  %v1332 = vmax.f32 %v1330, %v1331
  %v1333 = vrot.slane %v1332, 1
  %v1334 = vmax.f32 %v1332, %v1333
  %v1335 = vsel %vm533, %v281, -inf
  %v1336 = vsel %vm533, %v287, -inf
  %v1337 = vmax.f32 %v1335, %v1336
  %v1338 = vrot.slane %v1337, 4
  %v1339 = vmax.f32 %v1337, %v1338
  %v1340 = vrot.slane %v1339, 2
  %v1341 = vmax.f32 %v1339, %v1340
  %v1342 = vrot.slane %v1341, 1
  %v1343 = vmax.f32 %v1341, %v1342
  %v1344 = vsel %vm533, %v282, -inf
  %v1345 = vsel %vm533, %v288, -inf
  %v1346 = vmax.f32 %v1344, %v1345
  %v1347 = vrot.slane %v1346, 4
  %v1348 = vmax.f32 %v1346, %v1347
  %v1349 = vrot.slane %v1348, 2
  %v1350 = vmax.f32 %v1348, %v1349
  %v1351 = vrot.slane %v1350, 1
  %v1352 = vmax.f32 %v1350, %v1351
  %v1353 = vsel %vm533, %v283, -inf
  %v1354 = vsel %vm533, %v289, -inf
  %v1355 = vmax.f32 %v1353, %v1354
  %v1356 = vrot.slane %v1355, 4
  %v1357 = vmax.f32 %v1355, %v1356
  %v1358 = vrot.slane %v1357, 2
  %v1359 = vmax.f32 %v1357, %v1358
  %v1360 = vrot.slane %v1359, 1
  %v1361 = vmax.f32 %v1359, %v1360
  %v1362 = vsel %vm533, %v66, -inf
  %v1363 = vsel %vm533, %v68, -inf
  %v1364 = vmax.f32 %v1362, %v1363
  %v1365 = vrot.slane %v1364, 4
  %v1366 = vmax.f32 %v1364, %v1365
  %v1367 = vrot.slane %v1366, 2
  %v1368 = vmax.f32 %v1366, %v1367
  %v1369 = vrot.slane %v1368, 1
  %v1370 = vmax.f32 %v1368, %v1369
  %v1371 = vsel %vm533, %v284, -inf
  %v1372 = vsel %vm533, %v290, -inf
  %v1373 = vmax.f32 %v1371, %v1372
  %v1374 = vrot.slane %v1373, 4
  %v1375 = vmax.f32 %v1373, %v1374
  %v1376 = vrot.slane %v1375, 2
  %v1377 = vmax.f32 %v1375, %v1376
  %v1378 = vrot.slane %v1377, 1
  %v1379 = vmax.f32 %v1377, %v1378
  %v1380 = vsel %vm533, %v285, -inf
  %v1381 = vsel %vm533, %v291, -inf
  %v1382 = vmax.f32 %v1380, %v1381
  %v1383 = vrot.slane %v1382, 4
  %v1384 = vmax.f32 %v1382, %v1383
  %v1385 = vrot.slane %v1384, 2
  %v1386 = vmax.f32 %v1384, %v1385
  %v1387 = vrot.slane %v1386, 1
  %v1388 = vmax.f32 %v1386, %v1387
  %v1389 = vsel %vm533, %v286, -inf
  %v1390 = vsel %vm533, %v292, -inf
  %v1391 = vmax.f32 %v1389, %v1390
  %v1392 = vrot.slane %v1391, 4
  %v1393 = vmax.f32 %v1391, %v1392
  %v1394 = vrot.slane %v1393, 2
  %v1395 = vmax.f32 %v1393, %v1394
  %v1396 = vrot.slane %v1395, 1
  %v1397 = vmax.f32 %v1395, %v1396
  %v1398 = vsel %vm533, %v69, -inf
  %v1399 = vsel %vm533, %v71, -inf
  %v1400 = vmax.f32 %v1398, %v1399
  %v1401 = vrot.slane %v1400, 4
  %v1402 = vmax.f32 %v1400, %v1401
  %v1403 = vrot.slane %v1402, 2
  %v1404 = vmax.f32 %v1402, %v1403
  %v1405 = vrot.slane %v1404, 1
  %v1406 = vmax.f32 %v1404, %v1405
  %v1407 = vsel %vm533, %v293, -inf
  %v1408 = vsel %vm533, %v299, -inf
  %v1409 = vmax.f32 %v1407, %v1408
  %v1410 = vrot.slane %v1409, 4
  %v1411 = vmax.f32 %v1409, %v1410
  %v1412 = vrot.slane %v1411, 2
  %v1413 = vmax.f32 %v1411, %v1412
  %v1414 = vrot.slane %v1413, 1
  %v1415 = vmax.f32 %v1413, %v1414
  %v1416 = vsel %vm533, %v294, -inf
  %v1417 = vsel %vm533, %v300, -inf
  %v1418 = vmax.f32 %v1416, %v1417
  %v1419 = vrot.slane %v1418, 4
  %v1420 = vmax.f32 %v1418, %v1419
  %v1421 = vrot.slane %v1420, 2
  %v1422 = vmax.f32 %v1420, %v1421
  %v1423 = vrot.slane %v1422, 1
  %v1424 = vmax.f32 %v1422, %v1423
  %v1425 = vsel %vm533, %v295, -inf
  %v1426 = vsel %vm533, %v301, -inf
  %v1427 = vmax.f32 %v1425, %v1426
  %v1428 = vrot.slane %v1427, 4
  %v1429 = vmax.f32 %v1427, %v1428
  %v1430 = vrot.slane %v1429, 2
  %v1431 = vmax.f32 %v1429, %v1430
  %v1432 = vrot.slane %v1431, 1
  %v1433 = vmax.f32 %v1431, %v1432
  %v1434 = vsel %vm533, %v70, -inf
  %v1435 = vsel %vm533, %v72, -inf
  %v1436 = vmax.f32 %v1434, %v1435
  %v1437 = vrot.slane %v1436, 4
  %v1438 = vmax.f32 %v1436, %v1437
  %v1439 = vrot.slane %v1438, 2
  %v1440 = vmax.f32 %v1438, %v1439
  %v1441 = vrot.slane %v1440, 1
  %v1442 = vmax.f32 %v1440, %v1441
  %v1443 = vsel %vm533, %v296, -inf
  %v1444 = vsel %vm533, %v302, -inf
  %v1445 = vmax.f32 %v1443, %v1444
  %v1446 = vrot.slane %v1445, 4
  %v1447 = vmax.f32 %v1445, %v1446
  %v1448 = vrot.slane %v1447, 2
  %v1449 = vmax.f32 %v1447, %v1448
  %v1450 = vrot.slane %v1449, 1
  %v1451 = vmax.f32 %v1449, %v1450
  %v1452 = vsel %vm533, %v297, -inf
  %v1453 = vsel %vm533, %v303, -inf
  %v1454 = vmax.f32 %v1452, %v1453
  %v1455 = vrot.slane %v1454, 4
  %v1456 = vmax.f32 %v1454, %v1455
  %v1457 = vrot.slane %v1456, 2
  %v1458 = vmax.f32 %v1456, %v1457
  %v1459 = vrot.slane %v1458, 1
  %v1460 = vmax.f32 %v1458, %v1459
  %v1461 = vsel %vm533, %v298, -inf
  %v1462 = vsel %vm533, %v304, -inf
  %v1463 = vmax.f32 %v1461, %v1462
  %v1464 = vrot.slane %v1463, 4
  %v1465 = vmax.f32 %v1463, %v1464
  %v1466 = vrot.slane %v1465, 2
  %v1467 = vmax.f32 %v1465, %v1466
  %v1468 = vrot.slane %v1467, 1
  %v1469 = vmax.f32 %v1467, %v1468
  %v1470 = vsel %vm533, %v73, -inf
  %v1471 = vsel %vm533, %v75, -inf
  %v1472 = vmax.f32 %v1470, %v1471
  %v1473 = vrot.slane %v1472, 4
  %v1474 = vmax.f32 %v1472, %v1473
  %v1475 = vrot.slane %v1474, 2
  %v1476 = vmax.f32 %v1474, %v1475
  %v1477 = vrot.slane %v1476, 1
  %v1478 = vmax.f32 %v1476, %v1477
  %v1479 = vsel %vm533, %v305, -inf
  %v1480 = vsel %vm533, %v311, -inf
  %v1481 = vmax.f32 %v1479, %v1480
  %v1482 = vrot.slane %v1481, 4
  %v1483 = vmax.f32 %v1481, %v1482
  %v1484 = vrot.slane %v1483, 2
  %v1485 = vmax.f32 %v1483, %v1484
  %v1486 = vrot.slane %v1485, 1
  %v1487 = vmax.f32 %v1485, %v1486
  %v1488 = vsel %vm533, %v306, -inf
  %v1489 = vsel %vm533, %v312, -inf
  %v1490 = vmax.f32 %v1488, %v1489
  %v1491 = vrot.slane %v1490, 4
  %v1492 = vmax.f32 %v1490, %v1491
  %v1493 = vrot.slane %v1492, 2
  %v1494 = vmax.f32 %v1492, %v1493
  %v1495 = vrot.slane %v1494, 1
  %v1496 = vmax.f32 %v1494, %v1495
  %v1497 = vsel %vm533, %v307, -inf
  %v1498 = vsel %vm533, %v313, -inf
  %v1499 = vmax.f32 %v1497, %v1498
  %v1500 = vrot.slane %v1499, 4
  %v1501 = vmax.f32 %v1499, %v1500
  %v1502 = vrot.slane %v1501, 2
  %v1503 = vmax.f32 %v1501, %v1502
  %v1504 = vrot.slane %v1503, 1
  %v1505 = vmax.f32 %v1503, %v1504
  %v1506 = vsel %vm533, %v74, -inf
  %v1507 = vsel %vm533, %v76, -inf
  %v1508 = vmax.f32 %v1506, %v1507
  %v1509 = vrot.slane %v1508, 4
  %v1510 = vmax.f32 %v1508, %v1509
  %v1511 = vrot.slane %v1510, 2
  %v1512 = vmax.f32 %v1510, %v1511
  %v1513 = vrot.slane %v1512, 1
  %v1514 = vmax.f32 %v1512, %v1513
  %v1515 = vsel %vm533, %v308, -inf
  %v1516 = vsel %vm533, %v314, -inf
  %v1517 = vmax.f32 %v1515, %v1516
  %v1518 = vrot.slane %v1517, 4
  %v1519 = vmax.f32 %v1517, %v1518
  %v1520 = vrot.slane %v1519, 2
  %v1521 = vmax.f32 %v1519, %v1520
  %v1522 = vrot.slane %v1521, 1
  %v1523 = vmax.f32 %v1521, %v1522
  %v1524 = vsel %vm533, %v309, -inf
  %v1525 = vsel %vm533, %v315, -inf
  %v1526 = vmax.f32 %v1524, %v1525
  %v1527 = vrot.slane %v1526, 4
  %v1528 = vmax.f32 %v1526, %v1527
  %v1529 = vrot.slane %v1528, 2
  %v1530 = vmax.f32 %v1528, %v1529
  %v1531 = vrot.slane %v1530, 1
  %v1532 = vmax.f32 %v1530, %v1531
  %v1533 = vsel %vm533, %v310, -inf
  %v1534 = vsel %vm533, %v316, -inf
  %v1535 = vmax.f32 %v1533, %v1534
  %v1536 = vrot.slane %v1535, 4
  %v1537 = vmax.f32 %v1535, %v1536
  %v1538 = vrot.slane %v1537, 2
  %v1539 = vmax.f32 %v1537, %v1538
  %v1540 = vrot.slane %v1539, 1
  %v1541 = vmax.f32 %v1539, %v1540
  %v1542 = vsel %vm533, %v77, -inf
  %v1543 = vsel %vm533, %v79, -inf
  %v1544 = vmax.f32 %v1542, %v1543
  %v1545 = vrot.slane %v1544, 4
  %v1546 = vmax.f32 %v1544, %v1545
  %v1547 = vrot.slane %v1546, 2
  %v1548 = vmax.f32 %v1546, %v1547
  %v1549 = vrot.slane %v1548, 1
  %v1550 = vmax.f32 %v1548, %v1549
  %v1551 = vsel %vm533, %v317, -inf
  %v1552 = vsel %vm533, %v323, -inf
  %v1553 = vmax.f32 %v1551, %v1552
  %v1554 = vrot.slane %v1553, 4
  %v1555 = vmax.f32 %v1553, %v1554
  %v1556 = vrot.slane %v1555, 2
  %v1557 = vmax.f32 %v1555, %v1556
  %v1558 = vrot.slane %v1557, 1
  %v1559 = vmax.f32 %v1557, %v1558
  %v1560 = vsel %vm533, %v318, -inf
  %v1561 = vsel %vm533, %v324, -inf
  %v1562 = vmax.f32 %v1560, %v1561
  %v1563 = vrot.slane %v1562, 4
  %v1564 = vmax.f32 %v1562, %v1563
  %v1565 = vrot.slane %v1564, 2
  %v1566 = vmax.f32 %v1564, %v1565
  %v1567 = vrot.slane %v1566, 1
  %v1568 = vmax.f32 %v1566, %v1567
  %v1569 = vsel %vm533, %v319, -inf
  %v1570 = vsel %vm533, %v325, -inf
  %v1571 = vmax.f32 %v1569, %v1570
  %v1572 = vrot.slane %v1571, 4
  %v1573 = vmax.f32 %v1571, %v1572
  %v1574 = vrot.slane %v1573, 2
  %v1575 = vmax.f32 %v1573, %v1574
  %v1576 = vrot.slane %v1575, 1
  %v1577 = vmax.f32 %v1575, %v1576
  %v1578 = vsel %vm533, %v78, -inf
  %v1579 = vsel %vm533, %v80, -inf
  %v1580 = vmax.f32 %v1578, %v1579
  %v1581 = vrot.slane %v1580, 4
  %v1582 = vmax.f32 %v1580, %v1581
  %v1583 = vrot.slane %v1582, 2
  %v1584 = vmax.f32 %v1582, %v1583
  %v1585 = vrot.slane %v1584, 1
  %v1586 = vmax.f32 %v1584, %v1585
  %v1587 = vsel %vm533, %v320, -inf
  %v1588 = vsel %vm533, %v326, -inf
  %v1589 = vmax.f32 %v1587, %v1588
  %v1590 = vrot.slane %v1589, 4
  %v1591 = vmax.f32 %v1589, %v1590
  %v1592 = vrot.slane %v1591, 2
  %v1593 = vmax.f32 %v1591, %v1592
  %v1594 = vrot.slane %v1593, 1
  %v1595 = vmax.f32 %v1593, %v1594
  %v1596 = vsel %vm533, %v321, -inf
  %v1597 = vsel %vm533, %v327, -inf
  %v1598 = vmax.f32 %v1596, %v1597
  %v1599 = vrot.slane %v1598, 4
  %v1600 = vmax.f32 %v1598, %v1599
  %v1601 = vrot.slane %v1600, 2
  %v1602 = vmax.f32 %v1600, %v1601
  %v1603 = vrot.slane %v1602, 1
  %v1604 = vmax.f32 %v1602, %v1603
  %v1605 = vsel %vm533, %v322, -inf
  %v1606 = vsel %vm533, %v328, -inf
  %v1607 = vmax.f32 %v1605, %v1606
  %v1608 = vrot.slane %v1607, 4
  %v1609 = vmax.f32 %v1607, %v1608
  %v1610 = vrot.slane %v1609, 2
  %v1611 = vmax.f32 %v1609, %v1610
  %v1612 = vrot.slane %v1611, 1
  %v1613 = vmax.f32 %v1611, %v1612
  %v1614 = vsel %vm533, %v81, -inf
  %v1615 = vsel %vm533, %v83, -inf
  %v1616 = vmax.f32 %v1614, %v1615
  %v1617 = vrot.slane %v1616, 4
  %v1618 = vmax.f32 %v1616, %v1617
  %v1619 = vrot.slane %v1618, 2
  %v1620 = vmax.f32 %v1618, %v1619
  %v1621 = vrot.slane %v1620, 1
  %v1622 = vmax.f32 %v1620, %v1621
  %v1623 = vsel %vm533, %v329, -inf
  %v1624 = vsel %vm533, %v335, -inf
  %v1625 = vmax.f32 %v1623, %v1624
  %v1626 = vrot.slane %v1625, 4
  %v1627 = vmax.f32 %v1625, %v1626
  %v1628 = vrot.slane %v1627, 2
  %v1629 = vmax.f32 %v1627, %v1628
  %v1630 = vrot.slane %v1629, 1
  %v1631 = vmax.f32 %v1629, %v1630
  %v1632 = vsel %vm533, %v330, -inf
  %v1633 = vsel %vm533, %v336, -inf
  %v1634 = vmax.f32 %v1632, %v1633
  %v1635 = vrot.slane %v1634, 4
  %v1636 = vmax.f32 %v1634, %v1635
  %v1637 = vrot.slane %v1636, 2
  %v1638 = vmax.f32 %v1636, %v1637
  %v1639 = vrot.slane %v1638, 1
  %v1640 = vmax.f32 %v1638, %v1639
  %v1641 = vsel %vm533, %v331, -inf
  %v1642 = vsel %vm533, %v337, -inf
  %v1643 = vmax.f32 %v1641, %v1642
  %v1644 = vrot.slane %v1643, 4
  %v1645 = vmax.f32 %v1643, %v1644
  %v1646 = vrot.slane %v1645, 2
  %v1647 = vmax.f32 %v1645, %v1646
  %v1648 = vrot.slane %v1647, 1
  %v1649 = vmax.f32 %v1647, %v1648
  %v1650 = vsel %vm533, %v82, -inf
  %v1651 = vsel %vm533, %v84, -inf
  %v1652 = vmax.f32 %v1650, %v1651
  %v1653 = vrot.slane %v1652, 4
  %v1654 = vmax.f32 %v1652, %v1653
  %v1655 = vrot.slane %v1654, 2
  %v1656 = vmax.f32 %v1654, %v1655
  %v1657 = vrot.slane %v1656, 1
  %v1658 = vmax.f32 %v1656, %v1657
  %v1659 = vsel %vm533, %v332, -inf
  %v1660 = vsel %vm533, %v338, -inf
  %v1661 = vmax.f32 %v1659, %v1660
  %v1662 = vrot.slane %v1661, 4
  %v1663 = vmax.f32 %v1661, %v1662
  %v1664 = vrot.slane %v1663, 2
  %v1665 = vmax.f32 %v1663, %v1664
  %v1666 = vrot.slane %v1665, 1
  %v1667 = vmax.f32 %v1665, %v1666
  %v1668 = vsel %vm533, %v333, -inf
  %v1669 = vsel %vm533, %v339, -inf
  %v1670 = vmax.f32 %v1668, %v1669
  %v1671 = vrot.slane %v1670, 4
  %v1672 = vmax.f32 %v1670, %v1671
  %v1673 = vrot.slane %v1672, 2
  %v1674 = vmax.f32 %v1672, %v1673
  %v1675 = vrot.slane %v1674, 1
  %v1676 = vmax.f32 %v1674, %v1675
  %v1677 = vsel %vm533, %v334, -inf
  %v1678 = vsel %vm533, %v340, -inf
  %v1679 = vmax.f32 %v1677, %v1678
  %v1680 = vrot.slane %v1679, 4
  %v1681 = vmax.f32 %v1679, %v1680
  %v1682 = vrot.slane %v1681, 2
  %v1683 = vmax.f32 %v1681, %v1682
  %v1684 = vrot.slane %v1683, 1
  %v1685 = vmax.f32 %v1683, %v1684
  %vm1686 = vcmask 31744
  %1687 = vst.msk [vmem:[#allocation2] sm:$0xff] %vm1686, 0.0
  %1688 = vst.msk [vmem:[#allocation2 + $0x8] sm:$0x3] %vm533, 0.0
  %1689 = vst.msk [vmem:[#allocation2 + $0x10] sm:$0xff] %vm1686, 0.0
  %1690 = vst.msk [vmem:[#allocation2 + $0x18] sm:$0x3] %vm533, 0.0
  %1691 = vst.msk [vmem:[#allocation2 + $0x20] sm:$0xff] %vm1686, 0.0
  %1692 = vst.msk [vmem:[#allocation2 + $0x28] sm:$0x3] %vm533, 0.0
  %1693 = vst.msk [vmem:[#allocation2 + $0x30] sm:$0xff] %vm1686, 0.0
  %1694 = vst.msk [vmem:[#allocation2 + $0x38] sm:$0x3] %vm533, 0.0
  %1695 = vst.msk [vmem:[#allocation2 + $0x40] sm:$0xff] %vm1686, 0.0
  %1696 = vst.msk [vmem:[#allocation2 + $0x48] sm:$0x3] %vm533, 0.0
  %1697 = vst.msk [vmem:[#allocation2 + $0x50] sm:$0xff] %vm1686, 0.0
  %1698 = vst.msk [vmem:[#allocation2 + $0x58] sm:$0x3] %vm533, 0.0
  %1699 = vst.msk [vmem:[#allocation2 + $0x60] sm:$0xff] %vm1686, 0.0
  %1700 = vst.msk [vmem:[#allocation2 + $0x68] sm:$0x3] %vm533, 0.0
  %1701 = vst.msk [vmem:[#allocation2 + $0x70] sm:$0xff] %vm1686, 0.0
  %1702 = vst.msk [vmem:[#allocation2 + $0x78] sm:$0x3] %vm533, 0.0
  %1703 = vst.msk [vmem:[#allocation2 + $0x80] sm:$0xff] %vm1686, 0.0
  %1704 = vst.msk [vmem:[#allocation2 + $0x88] sm:$0x3] %vm533, 0.0
  %1705 = vst.msk [vmem:[#allocation2 + $0x90] sm:$0xff] %vm1686, 0.0
  %1706 = vst.msk [vmem:[#allocation2 + $0x98] sm:$0x3] %vm533, 0.0
  %1707 = vst.msk [vmem:[#allocation2 + $0xa0] sm:$0xff] %vm1686, 0.0
  %1708 = vst.msk [vmem:[#allocation2 + $0xa8] sm:$0x3] %vm533, 0.0
  %1709 = vst.msk [vmem:[#allocation2 + $0xb0] sm:$0xff] %vm1686, 0.0
  %1710 = vst.msk [vmem:[#allocation2 + $0xb8] sm:$0x3] %vm533, 0.0
  %1711 = vst.msk [vmem:[#allocation2 + $0xc0] sm:$0xff] %vm1686, 0.0
  %1712 = vst.msk [vmem:[#allocation2 + $0xc8] sm:$0x3] %vm533, 0.0
  %1713 = vst.msk [vmem:[#allocation2 + $0xd0] sm:$0xff] %vm1686, 0.0
  %1714 = vst.msk [vmem:[#allocation2 + $0xd8] sm:$0x3] %vm533, 0.0
  %1715 = vst.msk [vmem:[#allocation2 + $0xe0] sm:$0xff] %vm1686, 0.0
  %1716 = vst.msk [vmem:[#allocation2 + $0xe8] sm:$0x3] %vm533, 0.0
  %1717 = vst.msk [vmem:[#allocation2 + $0xf0] sm:$0xff] %vm1686, 0.0
  %1718 = vst.msk [vmem:[#allocation2 + $0xf8] sm:$0x3] %vm533, 0.0
  %1719 = vst.msk [vmem:[#allocation2 + $0x100] sm:$0xff] %vm1686, 0.0
  %1720 = vst.msk [vmem:[#allocation2 + $0x108] sm:$0x3] %vm533, 0.0
  %1721 = vst.msk [vmem:[#allocation2 + $0x110] sm:$0xff] %vm1686, 0.0
  %1722 = vst.msk [vmem:[#allocation2 + $0x118] sm:$0x3] %vm533, 0.0
  %1723 = vst.msk [vmem:[#allocation2 + $0x120] sm:$0xff] %vm1686, 0.0
  %1724 = vst.msk [vmem:[#allocation2 + $0x128] sm:$0x3] %vm533, 0.0
  %1725 = vst.msk [vmem:[#allocation2 + $0x130] sm:$0xff] %vm1686, 0.0
  %1726 = vst.msk [vmem:[#allocation2 + $0x138] sm:$0x3] %vm533, 0.0
  %vm1855 = vcmask 1041409
  %v1856 = vsel %vm1855, %v551, %v542
  %vm1857 = vcmask 1042434
  %v1858 = vsel %vm1857, %v560, %v1856
  %vm1859 = vcmask 1043459
  %v1860 = vsel %vm1859, %v569, %v1858
  %vm1861 = vcmask 1044484
  %v1862 = vsel %vm1861, %v578, %v1860
  %vm1863 = vcmask 1045509
  %v1864 = vsel %vm1863, %v587, %v1862
  %vm1865 = vcmask 1046534
  %v1866 = vsel %vm1865, %v596, %v1864
  %vm1867 = vcmask 1047559
  %v1868 = vsel %vm1867, %v605, %v1866
  %v1869 = vsel %vm1855, %v623, %v614
  %v1870 = vsel %vm1857, %v632, %v1869
  %v1871 = vsel %vm1859, %v641, %v1870
  %v1872 = vsel %vm1861, %v650, %v1871
  %v1873 = vsel %vm1863, %v659, %v1872
  %v1874 = vsel %vm1865, %v668, %v1873
  %v1875 = vsel %vm1867, %v677, %v1874
  %v1876 = vsel %vm1855, %v695, %v686
  %v1877 = vsel %vm1857, %v704, %v1876
  %v1878 = vsel %vm1859, %v713, %v1877
  %v1879 = vsel %vm1861, %v722, %v1878
  %v1880 = vsel %vm1863, %v731, %v1879
  %v1881 = vsel %vm1865, %v740, %v1880
  %v1882 = vsel %vm1867, %v749, %v1881
  %v1883 = vsel %vm1855, %v767, %v758
  %v1884 = vsel %vm1857, %v776, %v1883
  %v1885 = vsel %vm1859, %v785, %v1884
  %v1886 = vsel %vm1861, %v794, %v1885
  %v1887 = vsel %vm1863, %v803, %v1886
  %v1888 = vsel %vm1865, %v812, %v1887
  %v1889 = vsel %vm1867, %v821, %v1888
  %v1890 = vsel %vm1855, %v839, %v830
  %v1891 = vsel %vm1857, %v848, %v1890
  %v1892 = vsel %vm1859, %v857, %v1891
  %v1893 = vsel %vm1861, %v866, %v1892
  %v1894 = vsel %vm1863, %v875, %v1893
  %v1895 = vsel %vm1865, %v884, %v1894
  %v1896 = vsel %vm1867, %v893, %v1895
  %v1897 = vsel %vm1855, %v911, %v902
  %v1898 = vsel %vm1857, %v920, %v1897
  %v1899 = vsel %vm1859, %v929, %v1898
  %v1900 = vsel %vm1861, %v938, %v1899
  %v1901 = vsel %vm1863, %v947, %v1900
  %v1902 = vsel %vm1865, %v956, %v1901
  %v1903 = vsel %vm1867, %v965, %v1902
  %v1904 = vsel %vm1855, %v983, %v974
  %v1905 = vsel %vm1857, %v992, %v1904
  %v1906 = vsel %vm1859, %v1001, %v1905
  %v1907 = vsel %vm1861, %v1010, %v1906
  %v1908 = vsel %vm1863, %v1019, %v1907
  %v1909 = vsel %vm1865, %v1028, %v1908
  %v1910 = vsel %vm1867, %v1037, %v1909
  %v1911 = vsel %vm1855, %v1055, %v1046
  %v1912 = vsel %vm1857, %v1064, %v1911
  %v1913 = vsel %vm1859, %v1073, %v1912
  %v1914 = vsel %vm1861, %v1082, %v1913
  %v1915 = vsel %vm1863, %v1091, %v1914
  %v1916 = vsel %vm1865, %v1100, %v1915
  %v1917 = vsel %vm1867, %v1109, %v1916
  %v1918 = vsel %vm1855, %v1127, %v1118
  %v1919 = vsel %vm1857, %v1136, %v1918
  %v1920 = vsel %vm1859, %v1145, %v1919
  %v1921 = vsel %vm1861, %v1154, %v1920
  %v1922 = vsel %vm1863, %v1163, %v1921
  %v1923 = vsel %vm1865, %v1172, %v1922
  %v1924 = vsel %vm1867, %v1181, %v1923
  %v1925 = vsel %vm1855, %v1199, %v1190
  %v1926 = vsel %vm1857, %v1208, %v1925
  %v1927 = vsel %vm1859, %v1217, %v1926
  %v1928 = vsel %vm1861, %v1226, %v1927
  %v1929 = vsel %vm1863, %v1235, %v1928
  %v1930 = vsel %vm1865, %v1244, %v1929
  %v1931 = vsel %vm1867, %v1253, %v1930
  %v1932 = vsel %vm1855, %v1271, %v1262
  %v1933 = vsel %vm1857, %v1280, %v1932
  %v1934 = vsel %vm1859, %v1289, %v1933
  %v1935 = vsel %vm1861, %v1298, %v1934
  %v1936 = vsel %vm1863, %v1307, %v1935
  %v1937 = vsel %vm1865, %v1316, %v1936
  %v1938 = vsel %vm1867, %v1325, %v1937
  %v1939 = vsel %vm1855, %v1343, %v1334
  %v1940 = vsel %vm1857, %v1352, %v1939
  %v1941 = vsel %vm1859, %v1361, %v1940
  %v1942 = vsel %vm1861, %v1370, %v1941
  %v1943 = vsel %vm1863, %v1379, %v1942
  %v1944 = vsel %vm1865, %v1388, %v1943
  %v1945 = vsel %vm1867, %v1397, %v1944
  %v1946 = vsel %vm1855, %v1415, %v1406
  %v1947 = vsel %vm1857, %v1424, %v1946
  %v1948 = vsel %vm1859, %v1433, %v1947
  %v1949 = vsel %vm1861, %v1442, %v1948
  %v1950 = vsel %vm1863, %v1451, %v1949
  %v1951 = vsel %vm1865, %v1460, %v1950
  %v1952 = vsel %vm1867, %v1469, %v1951
  %v1953 = vsel %vm1855, %v1487, %v1478
  %v1954 = vsel %vm1857, %v1496, %v1953
  %v1955 = vsel %vm1859, %v1505, %v1954
  %v1956 = vsel %vm1861, %v1514, %v1955
  %v1957 = vsel %vm1863, %v1523, %v1956
  %v1958 = vsel %vm1865, %v1532, %v1957
  %v1959 = vsel %vm1867, %v1541, %v1958
  %v1960 = vsel %vm1855, %v1559, %v1550
  %v1961 = vsel %vm1857, %v1568, %v1960
  %v1962 = vsel %vm1859, %v1577, %v1961
  %v1963 = vsel %vm1861, %v1586, %v1962
  %v1964 = vsel %vm1863, %v1595, %v1963
  %v1965 = vsel %vm1865, %v1604, %v1964
  %v1966 = vsel %vm1867, %v1613, %v1965
  %v1967 = vsel %vm1855, %v1631, %v1622
  %v1968 = vsel %vm1857, %v1640, %v1967
  %v1969 = vsel %vm1859, %v1649, %v1968
  %v1970 = vsel %vm1861, %v1658, %v1969
  %v1971 = vsel %vm1863, %v1667, %v1970
  %v1972 = vsel %vm1865, %v1676, %v1971
  %v1973 = vsel %vm1867, %v1685, %v1972
  %s1990 = scalar_lea.vmem [#allocation2], 16
  %1991 = vst.msk [vmem:[%s1990 + $0x1] sm:$0xff] %vm1686, %v1868
  %1992 = vst.msk [vmem:[%s1990 + $0x11] sm:$0xff] %vm1686, %v1875
  %1993 = vst.msk [vmem:[%s1990 + $0x21] sm:$0xff] %vm1686, %v1882
  %1994 = vst.msk [vmem:[%s1990 + $0x31] sm:$0xff] %vm1686, %v1889
  %1995 = vst.msk [vmem:[%s1990 + $0x41] sm:$0xff] %vm1686, %v1896
  %1996 = vst.msk [vmem:[%s1990 + $0x51] sm:$0xff] %vm1686, %v1903
  %1997 = vst.msk [vmem:[%s1990 + $0x61] sm:$0xff] %vm1686, %v1910
  %1998 = vst.msk [vmem:[%s1990 + $0x71] sm:$0xff] %vm1686, %v1917
  %1999 = vst.msk [vmem:[%s1990 + $0xa1] sm:$0xff] %vm1686, %v1924
  %2000 = vst.msk [vmem:[%s1990 + $0xb1] sm:$0xff] %vm1686, %v1931
  %2001 = vst.msk [vmem:[%s1990 + $0xc1] sm:$0xff] %vm1686, %v1938
  %2002 = vst.msk [vmem:[%s1990 + $0xd1] sm:$0xff] %vm1686, %v1945
  %2003 = vst.msk [vmem:[%s1990 + $0xe1] sm:$0xff] %vm1686, %v1952
  %2004 = vst.msk [vmem:[%s1990 + $0xf1] sm:$0xff] %vm1686, %v1959
  %2005 = vst.msk [vmem:[%s1990 + $0x101] sm:$0xff] %vm1686, %v1966
  %2006 = vst.msk [vmem:[%s1990 + $0x111] sm:$0xff] %vm1686, %v1973
  %v2007 = vld [vmem:[#allocation2] sm:$0xff]
  %v2008 = vld [vmem:[#allocation2 + $0x8] sm:$0x3]
  %v2009 = vld [vmem:[#allocation2 + $0x10] sm:$0xff]
  %v2010 = vld [vmem:[#allocation2 + $0x18] sm:$0x3]
  %v2011 = vld [vmem:[#allocation2 + $0x20] sm:$0xff]
  %v2012 = vld [vmem:[#allocation2 + $0x28] sm:$0x3]
  %v2013 = vld [vmem:[#allocation2 + $0x30] sm:$0xff]
  %v2014 = vld [vmem:[#allocation2 + $0x38] sm:$0x3]
  %v2015 = vld [vmem:[#allocation2 + $0x40] sm:$0xff]
  %v2016 = vld [vmem:[#allocation2 + $0x48] sm:$0x3]
  %v2017 = vld [vmem:[#allocation2 + $0x50] sm:$0xff]
  %v2018 = vld [vmem:[#allocation2 + $0x58] sm:$0x3]
  %v2019 = vld [vmem:[#allocation2 + $0x60] sm:$0xff]
  %v2020 = vld [vmem:[#allocation2 + $0x68] sm:$0x3]
  %v2021 = vld [vmem:[#allocation2 + $0x70] sm:$0xff]
  %v2022 = vld [vmem:[#allocation2 + $0x78] sm:$0x3]
  %v2023 = vld [vmem:[#allocation2 + $0x80] sm:$0xff]
  %v2024 = vld [vmem:[#allocation2 + $0x88] sm:$0x3]
  %v2025 = vld [vmem:[#allocation2 + $0x90] sm:$0xff]
  %v2026 = vld [vmem:[#allocation2 + $0x98] sm:$0x3]
  %v2027 = vld [vmem:[#allocation2 + $0xa0] sm:$0xff]
  %v2028 = vld [vmem:[#allocation2 + $0xa8] sm:$0x3]
  %v2029 = vld [vmem:[#allocation2 + $0xb0] sm:$0xff]
  %v2030 = vld [vmem:[#allocation2 + $0xb8] sm:$0x3]
  %v2031 = vld [vmem:[#allocation2 + $0xc0] sm:$0xff]
  %v2032 = vld [vmem:[#allocation2 + $0xc8] sm:$0x3]
  %v2033 = vld [vmem:[#allocation2 + $0xd0] sm:$0xff]
  %v2034 = vld [vmem:[#allocation2 + $0xd8] sm:$0x3]
  %v2035 = vld [vmem:[#allocation2 + $0xe0] sm:$0xff]
  %v2036 = vld [vmem:[#allocation2 + $0xe8] sm:$0x3]
  %v2037 = vld [vmem:[#allocation2 + $0xf0] sm:$0xff]
  %v2038 = vld [vmem:[#allocation2 + $0xf8] sm:$0x3]
  %v2039 = vld [vmem:[#allocation2 + $0x100] sm:$0xff]
  %v2040 = vld [vmem:[#allocation2 + $0x108] sm:$0x3]
  %v2041 = vld [vmem:[#allocation2 + $0x110] sm:$0xff]
  %v2042 = vld [vmem:[#allocation2 + $0x118] sm:$0x3]
  %v2043 = vld [vmem:[#allocation2 + $0x120] sm:$0xff]
  %v2044 = vld [vmem:[#allocation2 + $0x128] sm:$0x3]
  %v2045 = vld [vmem:[#allocation2 + $0x130] sm:$0xff]
  %v2046 = vld [vmem:[#allocation2 + $0x138] sm:$0x3]
  %v2047 = vpack.c.bf16 %v2007, %v2007
  %v2048 = vpack.c.bf16 %v2009, %v2009
  %v2049 = vpack.c.bf16 %v2011, %v2011
  %v2050 = vpack.c.bf16 %v2013, %v2013
  %v2051 = vpack.c.bf16 %v2015, %v2015
  %v2052 = vpack.c.bf16 %v2017, %v2017
  %v2053 = vpack.c.bf16 %v2019, %v2019
  %v2054 = vpack.c.bf16 %v2021, %v2021
  %v2055 = vpack.c.bf16 %v2027, %v2027
  %v2056 = vpack.c.bf16 %v2029, %v2029
  %v2057 = vpack.c.bf16 %v2031, %v2031
  %v2058 = vpack.c.bf16 %v2033, %v2033
  %v2059 = vpack.c.bf16 %v2035, %v2035
  %v2060 = vpack.c.bf16 %v2037, %v2037
  %v2061 = vpack.c.bf16 %v2039, %v2039
  %v2062 = vpack.c.bf16 %v2041, %v2041
  %vm2063 = vcmask 27648
  %2064 = vst.msk [vmem:[#allocation3] sm:$0xf] %vm2063, %v2047
  %2065 = vst.msk [vmem:[#allocation3 + $0x4] sm:$0xf] %vm2063, %v2048
  %2066 = vst.msk [vmem:[#allocation3 + $0x8] sm:$0xf] %vm2063, %v2049
  %2067 = vst.msk [vmem:[#allocation3 + $0xc] sm:$0xf] %vm2063, %v2050
  %2068 = vst.msk [vmem:[#allocation3 + $0x10] sm:$0xf] %vm2063, %v2051
  %2069 = vst.msk [vmem:[#allocation3 + $0x14] sm:$0xf] %vm2063, %v2052
  %2070 = vst.msk [vmem:[#allocation3 + $0x18] sm:$0xf] %vm2063, %v2053
  %2071 = vst.msk [vmem:[#allocation3 + $0x1c] sm:$0xf] %vm2063, %v2054
  %2072 = vst.msk [vmem:[#allocation3 + $0x20] sm:$0xf] %vm2063, %v2055
  %2073 = vst.msk [vmem:[#allocation3 + $0x24] sm:$0xf] %vm2063, %v2056
  %2074 = vst.msk [vmem:[#allocation3 + $0x28] sm:$0xf] %vm2063, %v2057
  %2075 = vst.msk [vmem:[#allocation3 + $0x2c] sm:$0xf] %vm2063, %v2058
  %2076 = vst.msk [vmem:[#allocation3 + $0x30] sm:$0xf] %vm2063, %v2059
  %2077 = vst.msk [vmem:[#allocation3 + $0x34] sm:$0xf] %vm2063, %v2060
  %2078 = vst.msk [vmem:[#allocation3 + $0x38] sm:$0xf] %vm2063, %v2061
  %2079 = vst.msk [vmem:[#allocation3 + $0x3c] sm:$0xf] %vm2063, %v2062
  %v2080 = vpack.c.bf16 %v2008, %v2008
  %v2081 = vpack.c.bf16 %v2010, %v2010
  %v2082 = vpack.c.bf16 %v2012, %v2012
  %v2083 = vpack.c.bf16 %v2014, %v2014
  %v2084 = vpack.c.bf16 %v2016, %v2016
  %v2085 = vpack.c.bf16 %v2018, %v2018
  %v2086 = vpack.c.bf16 %v2020, %v2020
  %v2087 = vpack.c.bf16 %v2022, %v2022
  %v2088 = vpack.c.bf16 %v2028, %v2028
  %v2089 = vpack.c.bf16 %v2030, %v2030
  %v2090 = vpack.c.bf16 %v2032, %v2032
  %v2091 = vpack.c.bf16 %v2034, %v2034
  %v2092 = vpack.c.bf16 %v2036, %v2036
  %v2093 = vpack.c.bf16 %v2038, %v2038
  %v2094 = vpack.c.bf16 %v2040, %v2040
  %v2095 = vpack.c.bf16 %v2042, %v2042
  %vm2096 = vsmask.f32 3328
  %vm2097 = vsmask.f32 7440
  %vm2098 = vmor %vm2096, %vm2097
  %v2100 = vshrl.u32 %v2047, 16
  %v2102 = vrot.slane %v2100, 4
  %v2103 = vshll.u32 %v2047, 16
  %v2105 = vrot.slane %v2103, 5
  %v2106 = vor.u32 %v2102, %v2105
  %v2107 = vrot.slane %v2106, 4
  %v2109 = vshll.u32 %v2080, 16
  %v2111 = vrot.slane %v2109, 5
  %v2112 = vsel %vm2098, %v2107, %v2111
  %v2114 = vshrl.u32 %v2048, 16
  %v2116 = vrot.slane %v2114, 4
  %v2117 = vshll.u32 %v2048, 16
  %v2119 = vrot.slane %v2117, 5
  %v2120 = vor.u32 %v2116, %v2119
  %v2121 = vrot.slane %v2120, 4
  %v2123 = vshll.u32 %v2081, 16
  %v2125 = vrot.slane %v2123, 5
  %v2126 = vsel %vm2098, %v2121, %v2125
  %v2128 = vshrl.u32 %v2049, 16
  %v2130 = vrot.slane %v2128, 4
  %v2131 = vshll.u32 %v2049, 16
  %v2133 = vrot.slane %v2131, 5
  %v2134 = vor.u32 %v2130, %v2133
  %v2135 = vrot.slane %v2134, 4
  %v2137 = vshll.u32 %v2082, 16
  %v2139 = vrot.slane %v2137, 5
  %v2140 = vsel %vm2098, %v2135, %v2139
  %v2142 = vshrl.u32 %v2050, 16
  %v2144 = vrot.slane %v2142, 4
  %v2145 = vshll.u32 %v2050, 16
  %v2147 = vrot.slane %v2145, 5
  %v2148 = vor.u32 %v2144, %v2147
  %v2149 = vrot.slane %v2148, 4
  %v2151 = vshll.u32 %v2083, 16
  %v2153 = vrot.slane %v2151, 5
  %v2154 = vsel %vm2098, %v2149, %v2153
  %v2156 = vshrl.u32 %v2051, 16
  %v2158 = vrot.slane %v2156, 4
  %v2159 = vshll.u32 %v2051, 16
  %v2161 = vrot.slane %v2159, 5
  %v2162 = vor.u32 %v2158, %v2161
  %v2163 = vrot.slane %v2162, 4
  %v2165 = vshll.u32 %v2084, 16
  %v2167 = vrot.slane %v2165, 5
  %v2168 = vsel %vm2098, %v2163, %v2167
  %v2170 = vshrl.u32 %v2052, 16
  %v2172 = vrot.slane %v2170, 4
  %v2173 = vshll.u32 %v2052, 16
  %v2175 = vrot.slane %v2173, 5
  %v2176 = vor.u32 %v2172, %v2175
  %v2177 = vrot.slane %v2176, 4
  %v2179 = vshll.u32 %v2085, 16
  %v2181 = vrot.slane %v2179, 5
  %v2182 = vsel %vm2098, %v2177, %v2181
  %v2184 = vshrl.u32 %v2053, 16
  %v2186 = vrot.slane %v2184, 4
  %v2187 = vshll.u32 %v2053, 16
  %v2189 = vrot.slane %v2187, 5
  %v2190 = vor.u32 %v2186, %v2189
  %v2191 = vrot.slane %v2190, 4
  %v2193 = vshll.u32 %v2086, 16
  %v2195 = vrot.slane %v2193, 5
  %v2196 = vsel %vm2098, %v2191, %v2195
  %v2198 = vshrl.u32 %v2054, 16
  %v2200 = vrot.slane %v2198, 4
  %v2201 = vshll.u32 %v2054, 16
  %v2203 = vrot.slane %v2201, 5
  %v2204 = vor.u32 %v2200, %v2203
  %v2205 = vrot.slane %v2204, 4
  %v2207 = vshll.u32 %v2087, 16
  %v2209 = vrot.slane %v2207, 5
  %v2210 = vsel %vm2098, %v2205, %v2209
  %v2212 = vshrl.u32 %v2055, 16
  %v2214 = vrot.slane %v2212, 4
  %v2215 = vshll.u32 %v2055, 16
  %v2217 = vrot.slane %v2215, 5
  %v2218 = vor.u32 %v2214, %v2217
  %v2219 = vrot.slane %v2218, 4
  %v2221 = vshll.u32 %v2088, 16
  %v2223 = vrot.slane %v2221, 5
  %v2224 = vsel %vm2098, %v2219, %v2223
  %v2226 = vshrl.u32 %v2056, 16
  %v2228 = vrot.slane %v2226, 4
  %v2229 = vshll.u32 %v2056, 16
  %v2231 = vrot.slane %v2229, 5
  %v2232 = vor.u32 %v2228, %v2231
  %v2233 = vrot.slane %v2232, 4
  %v2235 = vshll.u32 %v2089, 16
  %v2237 = vrot.slane %v2235, 5
  %v2238 = vsel %vm2098, %v2233, %v2237
  %v2240 = vshrl.u32 %v2057, 16
  %v2242 = vrot.slane %v2240, 4
  %v2243 = vshll.u32 %v2057, 16
  %v2245 = vrot.slane %v2243, 5
  %v2246 = vor.u32 %v2242, %v2245
  %v2247 = vrot.slane %v2246, 4
  %v2249 = vshll.u32 %v2090, 16
  %v2251 = vrot.slane %v2249, 5
  %v2252 = vsel %vm2098, %v2247, %v2251
  %v2254 = vshrl.u32 %v2058, 16
  %v2256 = vrot.slane %v2254, 4
  %v2257 = vshll.u32 %v2058, 16
  %v2259 = vrot.slane %v2257, 5
  %v2260 = vor.u32 %v2256, %v2259
  %v2261 = vrot.slane %v2260, 4
  %v2263 = vshll.u32 %v2091, 16
  %v2265 = vrot.slane %v2263, 5
  %v2266 = vsel %vm2098, %v2261, %v2265
  %v2268 = vshrl.u32 %v2059, 16
  %v2270 = vrot.slane %v2268, 4
  %v2271 = vshll.u32 %v2059, 16
  %v2273 = vrot.slane %v2271, 5
  %v2274 = vor.u32 %v2270, %v2273
  %v2275 = vrot.slane %v2274, 4
  %v2277 = vshll.u32 %v2092, 16
  %v2279 = vrot.slane %v2277, 5
  %v2280 = vsel %vm2098, %v2275, %v2279
  %v2282 = vshrl.u32 %v2060, 16
  %v2284 = vrot.slane %v2282, 4
  %v2285 = vshll.u32 %v2060, 16
  %v2287 = vrot.slane %v2285, 5
  %v2288 = vor.u32 %v2284, %v2287
  %v2289 = vrot.slane %v2288, 4
  %v2291 = vshll.u32 %v2093, 16
  %v2293 = vrot.slane %v2291, 5
  %v2294 = vsel %vm2098, %v2289, %v2293
  %v2296 = vshrl.u32 %v2061, 16
  %v2298 = vrot.slane %v2296, 4
  %v2299 = vshll.u32 %v2061, 16
  %v2301 = vrot.slane %v2299, 5
  %v2302 = vor.u32 %v2298, %v2301
  %v2303 = vrot.slane %v2302, 4
  %v2305 = vshll.u32 %v2094, 16
  %v2307 = vrot.slane %v2305, 5
  %v2308 = vsel %vm2098, %v2303, %v2307
  %v2310 = vshrl.u32 %v2062, 16
  %v2312 = vrot.slane %v2310, 4
  %v2313 = vshll.u32 %v2062, 16
  %v2315 = vrot.slane %v2313, 5
  %v2316 = vor.u32 %v2312, %v2315
  %v2317 = vrot.slane %v2316, 4
  %v2319 = vshll.u32 %v2095, 16
  %v2321 = vrot.slane %v2319, 5
  %v2322 = vsel %vm2098, %v2317, %v2321
  %2323 = vrot.lane.b32.xlu0 %v2112, 4
  %v2324 = vpop.permute.xlu0 %2323
  %2325 = vrot.lane.b32.xlu0 %v2126, 4
  %v2326 = vpop.permute.xlu0 %2325
  %2327 = vrot.lane.b32.xlu0 %v2140, 4
  %v2328 = vpop.permute.xlu0 %2327
  %2329 = vrot.lane.b32.xlu0 %v2154, 4
  %v2330 = vpop.permute.xlu0 %2329
  %2331 = vrot.lane.b32.xlu0 %v2168, 4
  %v2332 = vpop.permute.xlu0 %2331
  %2333 = vrot.lane.b32.xlu0 %v2182, 4
  %v2334 = vpop.permute.xlu0 %2333
  %2335 = vrot.lane.b32.xlu0 %v2196, 4
  %v2336 = vpop.permute.xlu0 %2335
  %2337 = vrot.lane.b32.xlu0 %v2210, 4
  %v2338 = vpop.permute.xlu0 %2337
  %2339 = vrot.lane.b32.xlu0 %v2224, 4
  %v2340 = vpop.permute.xlu0 %2339
  %2341 = vrot.lane.b32.xlu0 %v2238, 4
  %v2342 = vpop.permute.xlu0 %2341
  %2343 = vrot.lane.b32.xlu0 %v2252, 4
  %v2344 = vpop.permute.xlu0 %2343
  %2345 = vrot.lane.b32.xlu0 %v2266, 4
  %v2346 = vpop.permute.xlu0 %2345
  %2347 = vrot.lane.b32.xlu0 %v2280, 4
  %v2348 = vpop.permute.xlu0 %2347
  %2349 = vrot.lane.b32.xlu0 %v2294, 4
  %v2350 = vpop.permute.xlu0 %2349
  %2351 = vrot.lane.b32.xlu0 %v2308, 4
  %v2352 = vpop.permute.xlu0 %2351
  %2353 = vrot.lane.b32.xlu0 %v2322, 4
  %v2354 = vpop.permute.xlu0 %2353
  %vm2371 = vcmask 60448
  %2372 = vst.msk [vmem:[#allocation3] sm:$0xf] %vm2371, %v2324
  %2373 = vst.msk [vmem:[#allocation3 + $0x4] sm:$0xf] %vm2371, %v2326
  %2374 = vst.msk [vmem:[#allocation3 + $0x8] sm:$0xf] %vm2371, %v2328
  %2375 = vst.msk [vmem:[#allocation3 + $0xc] sm:$0xf] %vm2371, %v2330
  %2376 = vst.msk [vmem:[#allocation3 + $0x10] sm:$0xf] %vm2371, %v2332
  %2377 = vst.msk [vmem:[#allocation3 + $0x14] sm:$0xf] %vm2371, %v2334
  %2378 = vst.msk [vmem:[#allocation3 + $0x18] sm:$0xf] %vm2371, %v2336
  %2379 = vst.msk [vmem:[#allocation3 + $0x1c] sm:$0xf] %vm2371, %v2338
  %2380 = vst.msk [vmem:[#allocation3 + $0x20] sm:$0xf] %vm2371, %v2340
  %2381 = vst.msk [vmem:[#allocation3 + $0x24] sm:$0xf] %vm2371, %v2342
  %2382 = vst.msk [vmem:[#allocation3 + $0x28] sm:$0xf] %vm2371, %v2344
  %2383 = vst.msk [vmem:[#allocation3 + $0x2c] sm:$0xf] %vm2371, %v2346
  %2384 = vst.msk [vmem:[#allocation3 + $0x30] sm:$0xf] %vm2371, %v2348
  %2385 = vst.msk [vmem:[#allocation3 + $0x34] sm:$0xf] %vm2371, %v2350
  %2386 = vst.msk [vmem:[#allocation3 + $0x38] sm:$0xf] %vm2371, %v2352
  %2387 = vst.msk [vmem:[#allocation3 + $0x3c] sm:$0xf] %vm2371, %v2354
  %vm2420 = vcmask 1042432
  %vm2421 = vcmask 1046532
  %vm2422 = vmor %vm2420, %vm2421
  %v2423 = vrot.slane %v2047, 5
  %v2424 = vrot.slane %v2423, 4
  %v2425 = vrot.slane %v2080, 5
  %v2426 = vsel %vm2422, %v2424, %v2425
  %v2427 = vrot.slane %v2048, 5
  %v2428 = vrot.slane %v2427, 4
  %v2429 = vrot.slane %v2081, 5
  %v2430 = vsel %vm2422, %v2428, %v2429
  %v2431 = vrot.slane %v2049, 5
  %v2432 = vrot.slane %v2431, 4
  %v2433 = vrot.slane %v2082, 5
  %v2434 = vsel %vm2422, %v2432, %v2433
  %v2435 = vrot.slane %v2050, 5
  %v2436 = vrot.slane %v2435, 4
  %v2437 = vrot.slane %v2083, 5
  %v2438 = vsel %vm2422, %v2436, %v2437
  %v2439 = vrot.slane %v2051, 5
  %v2440 = vrot.slane %v2439, 4
  %v2441 = vrot.slane %v2084, 5
  %v2442 = vsel %vm2422, %v2440, %v2441
  %v2443 = vrot.slane %v2052, 5
  %v2444 = vrot.slane %v2443, 4
  %v2445 = vrot.slane %v2085, 5
  %v2446 = vsel %vm2422, %v2444, %v2445
  %v2447 = vrot.slane %v2053, 5
  %v2448 = vrot.slane %v2447, 4
  %v2449 = vrot.slane %v2086, 5
  %v2450 = vsel %vm2422, %v2448, %v2449
  %v2451 = vrot.slane %v2054, 5
  %v2452 = vrot.slane %v2451, 4
  %v2453 = vrot.slane %v2087, 5
  %v2454 = vsel %vm2422, %v2452, %v2453
  %v2455 = vrot.slane %v2055, 5
  %v2456 = vrot.slane %v2455, 4
  %v2457 = vrot.slane %v2088, 5
  %v2458 = vsel %vm2422, %v2456, %v2457
  %v2459 = vrot.slane %v2056, 5
  %v2460 = vrot.slane %v2459, 4
  %v2461 = vrot.slane %v2089, 5
  %v2462 = vsel %vm2422, %v2460, %v2461
  %v2463 = vrot.slane %v2057, 5
  %v2464 = vrot.slane %v2463, 4
  %v2465 = vrot.slane %v2090, 5
  %v2466 = vsel %vm2422, %v2464, %v2465
  %v2467 = vrot.slane %v2058, 5
  %v2468 = vrot.slane %v2467, 4
  %v2469 = vrot.slane %v2091, 5
  %v2470 = vsel %vm2422, %v2468, %v2469
  %v2471 = vrot.slane %v2059, 5
  %v2472 = vrot.slane %v2471, 4
  %v2473 = vrot.slane %v2092, 5
  %v2474 = vsel %vm2422, %v2472, %v2473
  %v2475 = vrot.slane %v2060, 5
  %v2476 = vrot.slane %v2475, 4
  %v2477 = vrot.slane %v2093, 5
  %v2478 = vsel %vm2422, %v2476, %v2477
  %v2479 = vrot.slane %v2061, 5
  %v2480 = vrot.slane %v2479, 4
  %v2481 = vrot.slane %v2094, 5
  %v2482 = vsel %vm2422, %v2480, %v2481
  %v2483 = vrot.slane %v2062, 5
  %v2484 = vrot.slane %v2483, 4
  %v2485 = vrot.slane %v2095, 5
  %v2486 = vsel %vm2422, %v2484, %v2485
  %2487 = vrot.lane.b32.xlu0 %v2426, 8
  %v2488 = vpop.permute.xlu0 %2487
  %2489 = vrot.lane.b32.xlu0 %v2430, 8
  %v2490 = vpop.permute.xlu0 %2489
  %2491 = vrot.lane.b32.xlu0 %v2434, 8
  %v2492 = vpop.permute.xlu0 %2491
  %2493 = vrot.lane.b32.xlu0 %v2438, 8
  %v2494 = vpop.permute.xlu0 %2493
  %2495 = vrot.lane.b32.xlu0 %v2442, 8
  %v2496 = vpop.permute.xlu0 %2495
  %2497 = vrot.lane.b32.xlu0 %v2446, 8
  %v2498 = vpop.permute.xlu0 %2497
  %2499 = vrot.lane.b32.xlu0 %v2450, 8
  %v2500 = vpop.permute.xlu0 %2499
  %2501 = vrot.lane.b32.xlu0 %v2454, 8
  %v2502 = vpop.permute.xlu0 %2501
  %2503 = vrot.lane.b32.xlu0 %v2458, 8
  %v2504 = vpop.permute.xlu0 %2503
  %2505 = vrot.lane.b32.xlu0 %v2462, 8
  %v2506 = vpop.permute.xlu0 %2505
  %2507 = vrot.lane.b32.xlu0 %v2466, 8
  %v2508 = vpop.permute.xlu0 %2507
  %2509 = vrot.lane.b32.xlu0 %v2470, 8
  %v2510 = vpop.permute.xlu0 %2509
  %2511 = vrot.lane.b32.xlu0 %v2474, 8
  %v2512 = vpop.permute.xlu0 %2511
  %2513 = vrot.lane.b32.xlu0 %v2478, 8
  %v2514 = vpop.permute.xlu0 %2513
  %2515 = vrot.lane.b32.xlu0 %v2482, 8
  %v2516 = vpop.permute.xlu0 %2515
  %2517 = vrot.lane.b32.xlu0 %v2486, 8
  %v2518 = vpop.permute.xlu0 %2517
  %vm2535 = vcmask 93248
  %2536 = vst.msk [vmem:[#allocation3] sm:$0xf] %vm2535, %v2488
  %2537 = vst.msk [vmem:[#allocation3 + $0x4] sm:$0xf] %vm2535, %v2490
  %2538 = vst.msk [vmem:[#allocation3 + $0x8] sm:$0xf] %vm2535, %v2492
  %2539 = vst.msk [vmem:[#allocation3 + $0xc] sm:$0xf] %vm2535, %v2494
  %2540 = vst.msk [vmem:[#allocation3 + $0x10] sm:$0xf] %vm2535, %v2496
  %2541 = vst.msk [vmem:[#allocation3 + $0x14] sm:$0xf] %vm2535, %v2498
  %2542 = vst.msk [vmem:[#allocation3 + $0x18] sm:$0xf] %vm2535, %v2500
  %2543 = vst.msk [vmem:[#allocation3 + $0x1c] sm:$0xf] %vm2535, %v2502
  %2544 = vst.msk [vmem:[#allocation3 + $0x20] sm:$0xf] %vm2535, %v2504
  %2545 = vst.msk [vmem:[#allocation3 + $0x24] sm:$0xf] %vm2535, %v2506
  %2546 = vst.msk [vmem:[#allocation3 + $0x28] sm:$0xf] %vm2535, %v2508
  %2547 = vst.msk [vmem:[#allocation3 + $0x2c] sm:$0xf] %vm2535, %v2510
  %2548 = vst.msk [vmem:[#allocation3 + $0x30] sm:$0xf] %vm2535, %v2512
  %2549 = vst.msk [vmem:[#allocation3 + $0x34] sm:$0xf] %vm2535, %v2514
  %2550 = vst.msk [vmem:[#allocation3 + $0x38] sm:$0xf] %vm2535, %v2516
  %2551 = vst.msk [vmem:[#allocation3 + $0x3c] sm:$0xf] %vm2535, %v2518
  %v2552 = vpack.c.bf16 %v2023, %v2023
  %v2553 = vpack.c.bf16 %v2043, %v2043
  %2556 = vrot.lane.b32.xlu0 %v2048, 12
  %v2557 = vpop.permute.xlu0 %2556
  %2558 = vrot.lane.b32.xlu0 %v2049, 12
  %v2559 = vpop.permute.xlu0 %2558
  %2560 = vrot.lane.b32.xlu0 %v2050, 12
  %v2561 = vpop.permute.xlu0 %2560
  %2562 = vrot.lane.b32.xlu0 %v2051, 12
  %v2563 = vpop.permute.xlu0 %2562
  %2564 = vrot.lane.b32.xlu0 %v2052, 12
  %v2565 = vpop.permute.xlu0 %2564
  %2566 = vrot.lane.b32.xlu0 %v2053, 12
  %v2567 = vpop.permute.xlu0 %2566
  %2568 = vrot.lane.b32.xlu0 %v2054, 12
  %v2569 = vpop.permute.xlu0 %2568
  %2570 = vrot.lane.b32.xlu0 %v2552, 12
  %v2571 = vpop.permute.xlu0 %2570
  %2572 = vrot.lane.b32.xlu0 %v2056, 12
  %v2573 = vpop.permute.xlu0 %2572
  %2574 = vrot.lane.b32.xlu0 %v2057, 12
  %v2575 = vpop.permute.xlu0 %2574
  %2576 = vrot.lane.b32.xlu0 %v2058, 12
  %v2577 = vpop.permute.xlu0 %2576
  %2578 = vrot.lane.b32.xlu0 %v2059, 12
  %v2579 = vpop.permute.xlu0 %2578
  %2580 = vrot.lane.b32.xlu0 %v2060, 12
  %v2581 = vpop.permute.xlu0 %2580
  %2582 = vrot.lane.b32.xlu0 %v2061, 12
  %v2583 = vpop.permute.xlu0 %2582
  %2584 = vrot.lane.b32.xlu0 %v2062, 12
  %v2585 = vpop.permute.xlu0 %2584
  %2586 = vrot.lane.b32.xlu0 %v2553, 12
  %v2587 = vpop.permute.xlu0 %2586
  %vm2604 = vcmask 126048
  %2605 = vst.msk [vmem:[#allocation3] sm:$0xf] %vm2604, %v2557
  %2606 = vst.msk [vmem:[#allocation3 + $0x4] sm:$0xf] %vm2604, %v2559
  %2607 = vst.msk [vmem:[#allocation3 + $0x8] sm:$0xf] %vm2604, %v2561
  %2608 = vst.msk [vmem:[#allocation3 + $0xc] sm:$0xf] %vm2604, %v2563
  %2609 = vst.msk [vmem:[#allocation3 + $0x10] sm:$0xf] %vm2604, %v2565
  %2610 = vst.msk [vmem:[#allocation3 + $0x14] sm:$0xf] %vm2604, %v2567
  %2611 = vst.msk [vmem:[#allocation3 + $0x18] sm:$0xf] %vm2604, %v2569
  %2612 = vst.msk [vmem:[#allocation3 + $0x1c] sm:$0xf] %vm2604, %v2571
  %2613 = vst.msk [vmem:[#allocation3 + $0x20] sm:$0xf] %vm2604, %v2573
  %2614 = vst.msk [vmem:[#allocation3 + $0x24] sm:$0xf] %vm2604, %v2575
  %2615 = vst.msk [vmem:[#allocation3 + $0x28] sm:$0xf] %vm2604, %v2577
  %2616 = vst.msk [vmem:[#allocation3 + $0x2c] sm:$0xf] %vm2604, %v2579
  %2617 = vst.msk [vmem:[#allocation3 + $0x30] sm:$0xf] %vm2604, %v2581
  %2618 = vst.msk [vmem:[#allocation3 + $0x34] sm:$0xf] %vm2604, %v2583
  %2619 = vst.msk [vmem:[#allocation3 + $0x38] sm:$0xf] %vm2604, %v2585
  %2620 = vst.msk [vmem:[#allocation3 + $0x3c] sm:$0xf] %vm2604, %v2587
  %v2621 = vpack.c.bf16 %v2024, %v2024
  %v2622 = vpack.c.bf16 %v2044, %v2044
  %v2624 = vshrl.u32 %v2552, 16
  %v2626 = vrot.slane %v2624, 4
  %v2627 = vshll.u32 %v2552, 16
  %v2629 = vrot.slane %v2627, 5
  %v2630 = vor.u32 %v2626, %v2629
  %v2631 = vrot.slane %v2630, 4
  %v2633 = vshll.u32 %v2621, 16
  %v2635 = vrot.slane %v2633, 5
  %v2636 = vsel %vm2098, %v2631, %v2635
  %v2638 = vshrl.u32 %v2553, 16
  %v2640 = vrot.slane %v2638, 4
  %v2641 = vshll.u32 %v2553, 16
  %v2643 = vrot.slane %v2641, 5
  %v2644 = vor.u32 %v2640, %v2643
  %v2645 = vrot.slane %v2644, 4
  %v2647 = vshll.u32 %v2622, 16
  %v2649 = vrot.slane %v2647, 5
  %v2650 = vsel %vm2098, %v2645, %v2649
  %2651 = vrot.lane.b32.xlu0 %v2126, 16
  %v2652 = vpop.permute.xlu0 %2651
  %2653 = vrot.lane.b32.xlu0 %v2140, 16
  %v2654 = vpop.permute.xlu0 %2653
  %2655 = vrot.lane.b32.xlu0 %v2154, 16
  %v2656 = vpop.permute.xlu0 %2655
  %2657 = vrot.lane.b32.xlu0 %v2168, 16
  %v2658 = vpop.permute.xlu0 %2657
  %2659 = vrot.lane.b32.xlu0 %v2182, 16
  %v2660 = vpop.permute.xlu0 %2659
  %2661 = vrot.lane.b32.xlu0 %v2196, 16
  %v2662 = vpop.permute.xlu0 %2661
  %2663 = vrot.lane.b32.xlu0 %v2210, 16
  %v2664 = vpop.permute.xlu0 %2663
  %2665 = vrot.lane.b32.xlu0 %v2636, 16
  %v2666 = vpop.permute.xlu0 %2665
  %2667 = vrot.lane.b32.xlu0 %v2238, 16
  %v2668 = vpop.permute.xlu0 %2667
  %2669 = vrot.lane.b32.xlu0 %v2252, 16
  %v2670 = vpop.permute.xlu0 %2669
  %2671 = vrot.lane.b32.xlu0 %v2266, 16
  %v2672 = vpop.permute.xlu0 %2671
  %2673 = vrot.lane.b32.xlu0 %v2280, 16
  %v2674 = vpop.permute.xlu0 %2673
  %2675 = vrot.lane.b32.xlu0 %v2294, 16
  %v2676 = vpop.permute.xlu0 %2675
  %2677 = vrot.lane.b32.xlu0 %v2308, 16
  %v2678 = vpop.permute.xlu0 %2677
  %2679 = vrot.lane.b32.xlu0 %v2322, 16
  %v2680 = vpop.permute.xlu0 %2679
  %2681 = vrot.lane.b32.xlu0 %v2650, 16
  %v2682 = vpop.permute.xlu0 %2681
  %vm2699 = vcmask 158848
  %2700 = vst.msk [vmem:[#allocation3] sm:$0xf] %vm2699, %v2652
  %2701 = vst.msk [vmem:[#allocation3 + $0x4] sm:$0xf] %vm2699, %v2654
  %2702 = vst.msk [vmem:[#allocation3 + $0x8] sm:$0xf] %vm2699, %v2656
  %2703 = vst.msk [vmem:[#allocation3 + $0xc] sm:$0xf] %vm2699, %v2658
  %2704 = vst.msk [vmem:[#allocation3 + $0x10] sm:$0xf] %vm2699, %v2660
  %2705 = vst.msk [vmem:[#allocation3 + $0x14] sm:$0xf] %vm2699, %v2662
  %2706 = vst.msk [vmem:[#allocation3 + $0x18] sm:$0xf] %vm2699, %v2664
  %2707 = vst.msk [vmem:[#allocation3 + $0x1c] sm:$0xf] %vm2699, %v2666
  %2708 = vst.msk [vmem:[#allocation3 + $0x20] sm:$0xf] %vm2699, %v2668
  %2709 = vst.msk [vmem:[#allocation3 + $0x24] sm:$0xf] %vm2699, %v2670
  %2710 = vst.msk [vmem:[#allocation3 + $0x28] sm:$0xf] %vm2699, %v2672
  %2711 = vst.msk [vmem:[#allocation3 + $0x2c] sm:$0xf] %vm2699, %v2674
  %2712 = vst.msk [vmem:[#allocation3 + $0x30] sm:$0xf] %vm2699, %v2676
  %2713 = vst.msk [vmem:[#allocation3 + $0x34] sm:$0xf] %vm2699, %v2678
  %2714 = vst.msk [vmem:[#allocation3 + $0x38] sm:$0xf] %vm2699, %v2680
  %2715 = vst.msk [vmem:[#allocation3 + $0x3c] sm:$0xf] %vm2699, %v2682
  %v2718 = vrot.slane %v2552, 5
  %v2719 = vrot.slane %v2718, 4
  %v2720 = vrot.slane %v2621, 5
  %v2721 = vsel %vm2422, %v2719, %v2720
  %v2722 = vrot.slane %v2553, 5
  %v2723 = vrot.slane %v2722, 4
  %v2724 = vrot.slane %v2622, 5
  %v2725 = vsel %vm2422, %v2723, %v2724
  %2726 = vrot.lane.b32.xlu0 %v2430, 20
  %v2727 = vpop.permute.xlu0 %2726
  %2728 = vrot.lane.b32.xlu0 %v2434, 20
  %v2729 = vpop.permute.xlu0 %2728
  %2730 = vrot.lane.b32.xlu0 %v2438, 20
  %v2731 = vpop.permute.xlu0 %2730
  %2732 = vrot.lane.b32.xlu0 %v2442, 20
  %v2733 = vpop.permute.xlu0 %2732
  %2734 = vrot.lane.b32.xlu0 %v2446, 20
  %v2735 = vpop.permute.xlu0 %2734
  %2736 = vrot.lane.b32.xlu0 %v2450, 20
  %v2737 = vpop.permute.xlu0 %2736
  %2738 = vrot.lane.b32.xlu0 %v2454, 20
  %v2739 = vpop.permute.xlu0 %2738
  %2740 = vrot.lane.b32.xlu0 %v2721, 20
  %v2741 = vpop.permute.xlu0 %2740
  %2742 = vrot.lane.b32.xlu0 %v2462, 20
  %v2743 = vpop.permute.xlu0 %2742
  %2744 = vrot.lane.b32.xlu0 %v2466, 20
  %v2745 = vpop.permute.xlu0 %2744
  %2746 = vrot.lane.b32.xlu0 %v2470, 20
  %v2747 = vpop.permute.xlu0 %2746
  %2748 = vrot.lane.b32.xlu0 %v2474, 20
  %v2749 = vpop.permute.xlu0 %2748
  %2750 = vrot.lane.b32.xlu0 %v2478, 20
  %v2751 = vpop.permute.xlu0 %2750
  %2752 = vrot.lane.b32.xlu0 %v2482, 20
  %v2753 = vpop.permute.xlu0 %2752
  %2754 = vrot.lane.b32.xlu0 %v2486, 20
  %v2755 = vpop.permute.xlu0 %2754
  %2756 = vrot.lane.b32.xlu0 %v2725, 20
  %v2757 = vpop.permute.xlu0 %2756
  %vm2774 = vcmask 191648
  %2775 = vst.msk [vmem:[#allocation3] sm:$0xf] %vm2774, %v2727
  %2776 = vst.msk [vmem:[#allocation3 + $0x4] sm:$0xf] %vm2774, %v2729
  %2777 = vst.msk [vmem:[#allocation3 + $0x8] sm:$0xf] %vm2774, %v2731
  %2778 = vst.msk [vmem:[#allocation3 + $0xc] sm:$0xf] %vm2774, %v2733
  %2779 = vst.msk [vmem:[#allocation3 + $0x10] sm:$0xf] %vm2774, %v2735
  %2780 = vst.msk [vmem:[#allocation3 + $0x14] sm:$0xf] %vm2774, %v2737
  %2781 = vst.msk [vmem:[#allocation3 + $0x18] sm:$0xf] %vm2774, %v2739
  %2782 = vst.msk [vmem:[#allocation3 + $0x1c] sm:$0xf] %vm2774, %v2741
  %2783 = vst.msk [vmem:[#allocation3 + $0x20] sm:$0xf] %vm2774, %v2743
  %2784 = vst.msk [vmem:[#allocation3 + $0x24] sm:$0xf] %vm2774, %v2745
  %2785 = vst.msk [vmem:[#allocation3 + $0x28] sm:$0xf] %vm2774, %v2747
  %2786 = vst.msk [vmem:[#allocation3 + $0x2c] sm:$0xf] %vm2774, %v2749
  %2787 = vst.msk [vmem:[#allocation3 + $0x30] sm:$0xf] %vm2774, %v2751
  %2788 = vst.msk [vmem:[#allocation3 + $0x34] sm:$0xf] %vm2774, %v2753
  %2789 = vst.msk [vmem:[#allocation3 + $0x38] sm:$0xf] %vm2774, %v2755
  %2790 = vst.msk [vmem:[#allocation3 + $0x3c] sm:$0xf] %vm2774, %v2757
  %v2791 = vpack.c.bf16 %v2025, %v2025
  %v2792 = vpack.c.bf16 %v2045, %v2045
  %2795 = vrot.lane.b32.xlu0 %v2049, 24
  %v2796 = vpop.permute.xlu0 %2795
  %2797 = vrot.lane.b32.xlu0 %v2050, 24
  %v2798 = vpop.permute.xlu0 %2797
  %2799 = vrot.lane.b32.xlu0 %v2051, 24
  %v2800 = vpop.permute.xlu0 %2799
  %2801 = vrot.lane.b32.xlu0 %v2052, 24
  %v2802 = vpop.permute.xlu0 %2801
  %2803 = vrot.lane.b32.xlu0 %v2053, 24
  %v2804 = vpop.permute.xlu0 %2803
  %2805 = vrot.lane.b32.xlu0 %v2054, 24
  %v2806 = vpop.permute.xlu0 %2805
  %2807 = vrot.lane.b32.xlu0 %v2552, 24
  %v2808 = vpop.permute.xlu0 %2807
  %2809 = vrot.lane.b32.xlu0 %v2791, 24
  %v2810 = vpop.permute.xlu0 %2809
  %2811 = vrot.lane.b32.xlu0 %v2057, 24
  %v2812 = vpop.permute.xlu0 %2811
  %2813 = vrot.lane.b32.xlu0 %v2058, 24
  %v2814 = vpop.permute.xlu0 %2813
  %2815 = vrot.lane.b32.xlu0 %v2059, 24
  %v2816 = vpop.permute.xlu0 %2815
  %2817 = vrot.lane.b32.xlu0 %v2060, 24
  %v2818 = vpop.permute.xlu0 %2817
  %2819 = vrot.lane.b32.xlu0 %v2061, 24
  %v2820 = vpop.permute.xlu0 %2819
  %2821 = vrot.lane.b32.xlu0 %v2062, 24
  %v2822 = vpop.permute.xlu0 %2821
  %2823 = vrot.lane.b32.xlu0 %v2553, 24
  %v2824 = vpop.permute.xlu0 %2823
  %2825 = vrot.lane.b32.xlu0 %v2792, 24
  %v2826 = vpop.permute.xlu0 %2825
  %vm2843 = vcmask 224448
  %2844 = vst.msk [vmem:[#allocation3] sm:$0xf] %vm2843, %v2796
  %2845 = vst.msk [vmem:[#allocation3 + $0x4] sm:$0xf] %vm2843, %v2798
  %2846 = vst.msk [vmem:[#allocation3 + $0x8] sm:$0xf] %vm2843, %v2800
  %2847 = vst.msk [vmem:[#allocation3 + $0xc] sm:$0xf] %vm2843, %v2802
  %2848 = vst.msk [vmem:[#allocation3 + $0x10] sm:$0xf] %vm2843, %v2804
  %2849 = vst.msk [vmem:[#allocation3 + $0x14] sm:$0xf] %vm2843, %v2806
  %2850 = vst.msk [vmem:[#allocation3 + $0x18] sm:$0xf] %vm2843, %v2808
  %2851 = vst.msk [vmem:[#allocation3 + $0x1c] sm:$0xf] %vm2843, %v2810
  %2852 = vst.msk [vmem:[#allocation3 + $0x20] sm:$0xf] %vm2843, %v2812
  %2853 = vst.msk [vmem:[#allocation3 + $0x24] sm:$0xf] %vm2843, %v2814
  %2854 = vst.msk [vmem:[#allocation3 + $0x28] sm:$0xf] %vm2843, %v2816
  %2855 = vst.msk [vmem:[#allocation3 + $0x2c] sm:$0xf] %vm2843, %v2818
  %2856 = vst.msk [vmem:[#allocation3 + $0x30] sm:$0xf] %vm2843, %v2820
  %2857 = vst.msk [vmem:[#allocation3 + $0x34] sm:$0xf] %vm2843, %v2822
  %2858 = vst.msk [vmem:[#allocation3 + $0x38] sm:$0xf] %vm2843, %v2824
  %2859 = vst.msk [vmem:[#allocation3 + $0x3c] sm:$0xf] %vm2843, %v2826
  %v2860 = vpack.c.bf16 %v2026, %v2026
  %v2861 = vpack.c.bf16 %v2046, %v2046
  %v2863 = vshrl.u32 %v2791, 16
  %v2865 = vrot.slane %v2863, 4
  %v2866 = vshll.u32 %v2791, 16
  %v2868 = vrot.slane %v2866, 5
  %v2869 = vor.u32 %v2865, %v2868
  %v2870 = vrot.slane %v2869, 4
  %v2872 = vshll.u32 %v2860, 16
  %v2874 = vrot.slane %v2872, 5
  %v2875 = vsel %vm2098, %v2870, %v2874
  %v2877 = vshrl.u32 %v2792, 16
  %v2879 = vrot.slane %v2877, 4
  %v2880 = vshll.u32 %v2792, 16
  %v2882 = vrot.slane %v2880, 5
  %v2883 = vor.u32 %v2879, %v2882
  %v2884 = vrot.slane %v2883, 4
  %v2886 = vshll.u32 %v2861, 16
  %v2888 = vrot.slane %v2886, 5
  %v2889 = vsel %vm2098, %v2884, %v2888
  %2890 = vrot.lane.b32.xlu0 %v2140, 28
  %v2891 = vpop.permute.xlu0 %2890
  %2892 = vrot.lane.b32.xlu0 %v2154, 28
  %v2893 = vpop.permute.xlu0 %2892
  %2894 = vrot.lane.b32.xlu0 %v2168, 28
  %v2895 = vpop.permute.xlu0 %2894
  %2896 = vrot.lane.b32.xlu0 %v2182, 28
  %v2897 = vpop.permute.xlu0 %2896
  %2898 = vrot.lane.b32.xlu0 %v2196, 28
  %v2899 = vpop.permute.xlu0 %2898
  %2900 = vrot.lane.b32.xlu0 %v2210, 28
  %v2901 = vpop.permute.xlu0 %2900
  %2902 = vrot.lane.b32.xlu0 %v2636, 28
  %v2903 = vpop.permute.xlu0 %2902
  %2904 = vrot.lane.b32.xlu0 %v2875, 28
  %v2905 = vpop.permute.xlu0 %2904
  %2906 = vrot.lane.b32.xlu0 %v2252, 28
  %v2907 = vpop.permute.xlu0 %2906
  %2908 = vrot.lane.b32.xlu0 %v2266, 28
  %v2909 = vpop.permute.xlu0 %2908
  %2910 = vrot.lane.b32.xlu0 %v2280, 28
  %v2911 = vpop.permute.xlu0 %2910
  %2912 = vrot.lane.b32.xlu0 %v2294, 28
  %v2913 = vpop.permute.xlu0 %2912
  %2914 = vrot.lane.b32.xlu0 %v2308, 28
  %v2915 = vpop.permute.xlu0 %2914
  %2916 = vrot.lane.b32.xlu0 %v2322, 28
  %v2917 = vpop.permute.xlu0 %2916
  %2918 = vrot.lane.b32.xlu0 %v2650, 28
  %v2919 = vpop.permute.xlu0 %2918
  %2920 = vrot.lane.b32.xlu0 %v2889, 28
  %v2921 = vpop.permute.xlu0 %2920
  %vm2938 = vcmask 257248
  %2939 = vst.msk [vmem:[#allocation3] sm:$0xf] %vm2938, %v2891
  %2940 = vst.msk [vmem:[#allocation3 + $0x4] sm:$0xf] %vm2938, %v2893
  %2941 = vst.msk [vmem:[#allocation3 + $0x8] sm:$0xf] %vm2938, %v2895
  %2942 = vst.msk [vmem:[#allocation3 + $0xc] sm:$0xf] %vm2938, %v2897
  %2943 = vst.msk [vmem:[#allocation3 + $0x10] sm:$0xf] %vm2938, %v2899
  %2944 = vst.msk [vmem:[#allocation3 + $0x14] sm:$0xf] %vm2938, %v2901
  %2945 = vst.msk [vmem:[#allocation3 + $0x18] sm:$0xf] %vm2938, %v2903
  %2946 = vst.msk [vmem:[#allocation3 + $0x1c] sm:$0xf] %vm2938, %v2905
  %2947 = vst.msk [vmem:[#allocation3 + $0x20] sm:$0xf] %vm2938, %v2907
  %2948 = vst.msk [vmem:[#allocation3 + $0x24] sm:$0xf] %vm2938, %v2909
  %2949 = vst.msk [vmem:[#allocation3 + $0x28] sm:$0xf] %vm2938, %v2911
  %2950 = vst.msk [vmem:[#allocation3 + $0x2c] sm:$0xf] %vm2938, %v2913
  %2951 = vst.msk [vmem:[#allocation3 + $0x30] sm:$0xf] %vm2938, %v2915
  %2952 = vst.msk [vmem:[#allocation3 + $0x34] sm:$0xf] %vm2938, %v2917
  %2953 = vst.msk [vmem:[#allocation3 + $0x38] sm:$0xf] %vm2938, %v2919
  %2954 = vst.msk [vmem:[#allocation3 + $0x3c] sm:$0xf] %vm2938, %v2921
  %v2957 = vrot.slane %v2791, 5
  %v2958 = vrot.slane %v2957, 4
  %v2959 = vrot.slane %v2860, 5
  %v2960 = vsel %vm2422, %v2958, %v2959
  %v2961 = vrot.slane %v2792, 5
  %v2962 = vrot.slane %v2961, 4
  %v2963 = vrot.slane %v2861, 5
  %v2964 = vsel %vm2422, %v2962, %v2963
  %2965 = vrot.lane.b32.xlu0 %v2434, 32
  %v2966 = vpop.permute.xlu0 %2965
  %2967 = vrot.lane.b32.xlu0 %v2438, 32
  %v2968 = vpop.permute.xlu0 %2967
  %2969 = vrot.lane.b32.xlu0 %v2442, 32
  %v2970 = vpop.permute.xlu0 %2969
  %2971 = vrot.lane.b32.xlu0 %v2446, 32
  %v2972 = vpop.permute.xlu0 %2971
  %2973 = vrot.lane.b32.xlu0 %v2450, 32
  %v2974 = vpop.permute.xlu0 %2973
  %2975 = vrot.lane.b32.xlu0 %v2454, 32
  %v2976 = vpop.permute.xlu0 %2975
  %2977 = vrot.lane.b32.xlu0 %v2721, 32
  %v2978 = vpop.permute.xlu0 %2977
  %2979 = vrot.lane.b32.xlu0 %v2960, 32
  %v2980 = vpop.permute.xlu0 %2979
  %2981 = vrot.lane.b32.xlu0 %v2466, 32
  %v2982 = vpop.permute.xlu0 %2981
  %2983 = vrot.lane.b32.xlu0 %v2470, 32
  %v2984 = vpop.permute.xlu0 %2983
  %2985 = vrot.lane.b32.xlu0 %v2474, 32
  %v2986 = vpop.permute.xlu0 %2985
  %2987 = vrot.lane.b32.xlu0 %v2478, 32
  %v2988 = vpop.permute.xlu0 %2987
  %2989 = vrot.lane.b32.xlu0 %v2482, 32
  %v2990 = vpop.permute.xlu0 %2989
  %2991 = vrot.lane.b32.xlu0 %v2486, 32
  %v2992 = vpop.permute.xlu0 %2991
  %2993 = vrot.lane.b32.xlu0 %v2725, 32
  %v2994 = vpop.permute.xlu0 %2993
  %2995 = vrot.lane.b32.xlu0 %v2964, 32
  %v2996 = vpop.permute.xlu0 %2995
  %vm3013 = vcmask 290048
  %3014 = vst.msk [vmem:[#allocation3] sm:$0xf] %vm3013, %v2966
  %3015 = vst.msk [vmem:[#allocation3 + $0x4] sm:$0xf] %vm3013, %v2968
  %3016 = vst.msk [vmem:[#allocation3 + $0x8] sm:$0xf] %vm3013, %v2970
  %3017 = vst.msk [vmem:[#allocation3 + $0xc] sm:$0xf] %vm3013, %v2972
  %3018 = vst.msk [vmem:[#allocation3 + $0x10] sm:$0xf] %vm3013, %v2974
  %3019 = vst.msk [vmem:[#allocation3 + $0x14] sm:$0xf] %vm3013, %v2976
  %3020 = vst.msk [vmem:[#allocation3 + $0x18] sm:$0xf] %vm3013, %v2978
  %3021 = vst.msk [vmem:[#allocation3 + $0x1c] sm:$0xf] %vm3013, %v2980
  %3022 = vst.msk [vmem:[#allocation3 + $0x20] sm:$0xf] %vm3013, %v2982
  %3023 = vst.msk [vmem:[#allocation3 + $0x24] sm:$0xf] %vm3013, %v2984
  %3024 = vst.msk [vmem:[#allocation3 + $0x28] sm:$0xf] %vm3013, %v2986
  %3025 = vst.msk [vmem:[#allocation3 + $0x2c] sm:$0xf] %vm3013, %v2988
  %3026 = vst.msk [vmem:[#allocation3 + $0x30] sm:$0xf] %vm3013, %v2990
  %3027 = vst.msk [vmem:[#allocation3 + $0x34] sm:$0xf] %vm3013, %v2992
  %3028 = vst.msk [vmem:[#allocation3 + $0x38] sm:$0xf] %vm3013, %v2994
  %3029 = vst.msk [vmem:[#allocation3 + $0x3c] sm:$0xf] %vm3013, %v2996
  %v3030 = vld [vmem:[#allocation3] sm:$0xf]
  %v3031 = vld [vmem:[#allocation3 + $0x4] sm:$0xf]
  %v3032 = vld [vmem:[#allocation3 + $0x8] sm:$0xf]
  %v3033 = vld [vmem:[#allocation3 + $0xc] sm:$0xf]
  %v3034 = vld [vmem:[#allocation3 + $0x10] sm:$0xf]
  %v3035 = vld [vmem:[#allocation3 + $0x14] sm:$0xf]
  %v3036 = vld [vmem:[#allocation3 + $0x18] sm:$0xf]
  %v3037 = vld [vmem:[#allocation3 + $0x1c] sm:$0xf]
  %v3038 = vld [vmem:[#allocation3 + $0x20] sm:$0xf]
  %v3039 = vld [vmem:[#allocation3 + $0x24] sm:$0xf]
  %v3040 = vld [vmem:[#allocation3 + $0x28] sm:$0xf]
  %v3041 = vld [vmem:[#allocation3 + $0x2c] sm:$0xf]
  %v3042 = vld [vmem:[#allocation3 + $0x30] sm:$0xf]
  %v3043 = vld [vmem:[#allocation3 + $0x34] sm:$0xf]
  %v3044 = vld [vmem:[#allocation3 + $0x38] sm:$0xf]
  %v3045 = vld [vmem:[#allocation3 + $0x3c] sm:$0xf]
  %v3046 = vld [vmem:[%s1] sm:$0xf]
  %v3047 = vld [vmem:[%s1 + $0x4] sm:$0xf]
  %v3048 = vld [vmem:[%s1 + $0x8] sm:$0xf]
  %v3049 = vld [vmem:[%s1 + $0xc] sm:$0xf]
  %v3050 = vld [vmem:[%s1 + $0x10] sm:$0x3]
  %v3051 = vld [vmem:[%s2] sm:$0x1]
  %v3053 = vperm.slane %v3051, 0
  %v3071 = vunpack.c.l.b16 %v3030
  %v3072 = vunpack.c.l.b16 %v3031
  %v3073 = vunpack.c.l.b16 %v3032
  %v3074 = vunpack.c.l.b16 %v3033
  %v3075 = vunpack.c.l.b16 %v3034
  %v3076 = vunpack.c.l.b16 %v3035
  %v3077 = vunpack.c.l.b16 %v3036
  %v3078 = vunpack.c.l.b16 %v3037
  %v3079 = vunpack.c.l.b16 %v3038
  %v3080 = vunpack.c.l.b16 %v3039
  %v3081 = vunpack.c.l.b16 %v3040
  %v3082 = vunpack.c.l.b16 %v3041
  %v3083 = vunpack.c.l.b16 %v3042
  %v3084 = vunpack.c.l.b16 %v3043
  %v3085 = vunpack.c.l.b16 %v3044
  %v3086 = vunpack.c.l.b16 %v3045
  %v3087 = vpack.c.b16 %v3072, %v3071
  %v3088 = vpack.c.b16 %v3074, %v3073
  %v3089 = vpack.c.b16 %v3076, %v3075
  %v3090 = vpack.c.b16 %v3078, %v3077
  %v3091 = vpack.c.b16 %v3080, %v3079
  %v3092 = vpack.c.b16 %v3082, %v3081
  %v3093 = vpack.c.b16 %v3084, %v3083
  %v3094 = vpack.c.b16 %v3086, %v3085
  %v3100 = vunpack.c.l.b16 %v3046
  %v3101 = vunpack.c.l.b16 %v3047
  %v3102 = vunpack.c.l.b16 %v3048
  %v3103 = vunpack.c.l.b16 %v3049
  %v3104 = vunpack.c.l.b16 %v3050
  %v3105 = vpack.c.b16 %v3101, %v3100
  %v3106 = vpack.c.b16 %v3103, %v3102
  %v3107 = vpack.c.b16 %v3104, %v3104
  %vm3110 = vcmask 293888
  %v3112 = vsel %vm3110, %v3087, 0
  %v3115 = vsel %vm3110, %v3088, 0
  %v3118 = vsel %vm3110, %v3089, 0
  %v3121 = vsel %vm3110, %v3090, 0
  %v3124 = vsel %vm3110, %v3091, 0
  %v3127 = vsel %vm3110, %v3092, 0
  %v3130 = vsel %vm3110, %v3093, 0
  %v3133 = vsel %vm3110, %v3094, 0
  %vm3135 = vcmask 1041408
  %v3137 = vsel %vm3135, %v3107, 0
  %3139 = vmatpush.bf16.msra.mxu0 0
  %3140 = vmatpush.bf16.msra.mxu0 0
  %3141 = vmatpush.bf16.msra.mxu0 0
  %3142 = vmatpush.bf16.msra.mxu0 0
  %3143 = vmatpush.bf16.msra.mxu0 0
  %3144 = vmatpush.bf16.msra.mxu0 %v3137
  %3145 = vmatpush.bf16.msra.mxu0 %v3106
  %3146 = vmatpush.bf16.msra.mxu0 %v3105
  %3147 = vmatmul.bf16.gmra.mxu0 %v3112
  %v3148 = vpop.f32.mrf.mxu0
  %v3149 = vadd.f32 %v3053, %v3148
  %v3150 = vpop.f32.mrf.mxu0
  %v3151 = vadd.f32 %v3053, %v3150
  %3152 = vmatmul.bf16.gmra.mxu0 %v3115
  %v3153 = vpop.f32.mrf.mxu0
  %v3154 = vadd.f32 %v3053, %v3153
  %v3155 = vpop.f32.mrf.mxu0
  %v3156 = vadd.f32 %v3053, %v3155
  %3157 = vmatmul.bf16.gmra.mxu0 %v3118
  %v3158 = vpop.f32.mrf.mxu0
  %v3159 = vadd.f32 %v3053, %v3158
  %v3160 = vpop.f32.mrf.mxu0
  %v3161 = vadd.f32 %v3053, %v3160
  %3162 = vmatmul.bf16.gmra.mxu0 %v3121
  %v3163 = vpop.f32.mrf.mxu0
  %v3164 = vadd.f32 %v3053, %v3163
  %v3165 = vpop.f32.mrf.mxu0
  %v3166 = vadd.f32 %v3053, %v3165
  %3167 = vmatmul.bf16.gmra.mxu0 %v3124
  %v3168 = vpop.f32.mrf.mxu0
  %v3169 = vadd.f32 %v3053, %v3168
  %v3170 = vpop.f32.mrf.mxu0
  %v3171 = vadd.f32 %v3053, %v3170
  %3172 = vmatmul.bf16.gmra.mxu0 %v3127
  %v3173 = vpop.f32.mrf.mxu0
  %v3174 = vadd.f32 %v3053, %v3173
  %v3175 = vpop.f32.mrf.mxu0
  %v3176 = vadd.f32 %v3053, %v3175
  %3177 = vmatmul.bf16.gmra.mxu0 %v3130
  %v3178 = vpop.f32.mrf.mxu0
  %v3179 = vadd.f32 %v3053, %v3178
  %v3180 = vpop.f32.mrf.mxu0
  %v3181 = vadd.f32 %v3053, %v3180
  %3182 = vmatmul.bf16.gmra.mxu0 %v3133
  %v3183 = vpop.f32.mrf.mxu0
  %v3184 = vadd.f32 %v3053, %v3183
  %v3185 = vpop.f32.mrf.mxu0
  %v3186 = vadd.f32 %v3053, %v3185
  %3187 = vdwg.mxu0
  %v3188 = vmax.f32 %v3149, 0.0
  %v3189 = vmax.f32 %v3151, 0.0
  %v3190 = vmax.f32 %v3154, 0.0
  %v3191 = vmax.f32 %v3156, 0.0
  %v3192 = vmax.f32 %v3159, 0.0
  %v3193 = vmax.f32 %v3161, 0.0
  %v3194 = vmax.f32 %v3164, 0.0
  %v3195 = vmax.f32 %v3166, 0.0
  %v3196 = vmax.f32 %v3169, 0.0
  %v3197 = vmax.f32 %v3171, 0.0
  %v3198 = vmax.f32 %v3174, 0.0
  %v3199 = vmax.f32 %v3176, 0.0
  %v3200 = vmax.f32 %v3179, 0.0
  %v3201 = vmax.f32 %v3181, 0.0
  %v3202 = vmax.f32 %v3184, 0.0
  %v3203 = vmax.f32 %v3186, 0.0
  %vm3204 = vcmask 64512
  %3205 = vst.msk [vmem:[#allocation4] sm:$0xff] %vm3204, 0.0
  %vm3206 = vcmask 58368
  %3207 = vst.msk [vmem:[#allocation4 + $0x8] sm:$0x3] %vm3206, 0.0
  %3208 = vst.msk [vmem:[#allocation4 + $0x10] sm:$0xff] %vm3204, 0.0
  %3209 = vst.msk [vmem:[#allocation4 + $0x18] sm:$0x3] %vm3206, 0.0
  %3210 = vst.msk [vmem:[#allocation4 + $0x20] sm:$0xff] %vm3204, 0.0
  %3211 = vst.msk [vmem:[#allocation4 + $0x28] sm:$0x3] %vm3206, 0.0
  %3212 = vst.msk [vmem:[#allocation4 + $0x30] sm:$0xff] %vm3204, 0.0
  %3213 = vst.msk [vmem:[#allocation4 + $0x38] sm:$0x3] %vm3206, 0.0
  %3214 = vst.msk [vmem:[#allocation4 + $0x40] sm:$0xff] %vm3204, 0.0
  %3215 = vst.msk [vmem:[#allocation4 + $0x48] sm:$0x3] %vm3206, 0.0
  %3216 = vst.msk [vmem:[#allocation4 + $0x50] sm:$0xff] %vm3204, 0.0
  %3217 = vst.msk [vmem:[#allocation4 + $0x58] sm:$0x3] %vm3206, 0.0
  %3218 = vst.msk [vmem:[#allocation4 + $0x60] sm:$0xff] %vm3204, 0.0
  %3219 = vst.msk [vmem:[#allocation4 + $0x68] sm:$0x3] %vm3206, 0.0
  %3220 = vst.msk [vmem:[#allocation4 + $0x70] sm:$0xff] %vm3204, 0.0
  %3221 = vst.msk [vmem:[#allocation4 + $0x78] sm:$0x3] %vm3206, 0.0
  %3222 = vst.msk [vmem:[#allocation4 + $0x80] sm:$0xff] %vm3204, 0.0
  %3223 = vst.msk [vmem:[#allocation4 + $0x88] sm:$0x3] %vm3206, 0.0
  %3224 = vst.msk [vmem:[#allocation4 + $0x90] sm:$0xff] %vm3204, 0.0
  %3225 = vst.msk [vmem:[#allocation4 + $0x98] sm:$0x3] %vm3206, 0.0
  %3226 = vst.msk [vmem:[#allocation4 + $0xa0] sm:$0xff] %vm3204, 0.0
  %3227 = vst.msk [vmem:[#allocation4 + $0xa8] sm:$0x3] %vm3206, 0.0
  %3228 = vst.msk [vmem:[#allocation4 + $0xb0] sm:$0xff] %vm3204, 0.0
  %3229 = vst.msk [vmem:[#allocation4 + $0xb8] sm:$0x3] %vm3206, 0.0
  %3230 = vst.msk [vmem:[#allocation4 + $0xc0] sm:$0xff] %vm3204, 0.0
  %3231 = vst.msk [vmem:[#allocation4 + $0xc8] sm:$0x3] %vm3206, 0.0
  %3232 = vst.msk [vmem:[#allocation4 + $0xd0] sm:$0xff] %vm3204, 0.0
  %3233 = vst.msk [vmem:[#allocation4 + $0xd8] sm:$0x3] %vm3206, 0.0
  %3234 = vst.msk [vmem:[#allocation4 + $0xe0] sm:$0xff] %vm3204, 0.0
  %3235 = vst.msk [vmem:[#allocation4 + $0xe8] sm:$0x3] %vm3206, 0.0
  %3236 = vst.msk [vmem:[#allocation4 + $0xf0] sm:$0xff] %vm3204, 0.0
  %3237 = vst.msk [vmem:[#allocation4 + $0xf8] sm:$0x3] %vm3206, 0.0
  %3238 = vst.msk [vmem:[#allocation4 + $0x100] sm:$0xff] %vm3204, 0.0
  %3239 = vst.msk [vmem:[#allocation4 + $0x108] sm:$0x3] %vm3206, 0.0
  %3240 = vst.msk [vmem:[#allocation4 + $0x110] sm:$0xff] %vm3204, 0.0
  %3241 = vst.msk [vmem:[#allocation4 + $0x118] sm:$0x3] %vm3206, 0.0
  %3242 = vst.msk [vmem:[#allocation4 + $0x120] sm:$0xff] %vm3204, 0.0
  %3243 = vst.msk [vmem:[#allocation4 + $0x128] sm:$0x3] %vm3206, 0.0
  %3244 = vst.msk [vmem:[#allocation4 + $0x130] sm:$0xff] %vm3204, 0.0
  %3245 = vst.msk [vmem:[#allocation4 + $0x138] sm:$0x3] %vm3206, 0.0
  %s3246 = scalar_lea.vmem [#allocation4], 16
  %3247 = vst.msk [vmem:[%s3246 + $0x1] sm:$0xff] %vm3204, %v3188
  %3248 = vst.msk [vmem:[%s3246 + $0x11] sm:$0xff] %vm3204, %v3189
  %3249 = vst.msk [vmem:[%s3246 + $0x21] sm:$0xff] %vm3204, %v3190
  %3250 = vst.msk [vmem:[%s3246 + $0x31] sm:$0xff] %vm3204, %v3191
  %3251 = vst.msk [vmem:[%s3246 + $0x41] sm:$0xff] %vm3204, %v3192
  %3252 = vst.msk [vmem:[%s3246 + $0x51] sm:$0xff] %vm3204, %v3193
  %3253 = vst.msk [vmem:[%s3246 + $0x61] sm:$0xff] %vm3204, %v3194
  %3254 = vst.msk [vmem:[%s3246 + $0x71] sm:$0xff] %vm3204, %v3195
  %3255 = vst.msk [vmem:[%s3246 + $0xa1] sm:$0xff] %vm3204, %v3196
  %3256 = vst.msk [vmem:[%s3246 + $0xb1] sm:$0xff] %vm3204, %v3197
  %3257 = vst.msk [vmem:[%s3246 + $0xc1] sm:$0xff] %vm3204, %v3198
  %3258 = vst.msk [vmem:[%s3246 + $0xd1] sm:$0xff] %vm3204, %v3199
  %3259 = vst.msk [vmem:[%s3246 + $0xe1] sm:$0xff] %vm3204, %v3200
  %3260 = vst.msk [vmem:[%s3246 + $0xf1] sm:$0xff] %vm3204, %v3201
  %3261 = vst.msk [vmem:[%s3246 + $0x101] sm:$0xff] %vm3204, %v3202
  %3262 = vst.msk [vmem:[%s3246 + $0x111] sm:$0xff] %vm3204, %v3203
  %v3263 = vld [vmem:[#allocation4] sm:$0xff]
  %v3264 = vld [vmem:[#allocation4 + $0x8] sm:$0x3]
  %v3265 = vld [vmem:[#allocation4 + $0x10] sm:$0xff]
  %v3266 = vld [vmem:[#allocation4 + $0x18] sm:$0x3]
  %v3267 = vld [vmem:[#allocation4 + $0x20] sm:$0xff]
  %v3268 = vld [vmem:[#allocation4 + $0x28] sm:$0x3]
  %v3269 = vld [vmem:[#allocation4 + $0x30] sm:$0xff]
  %v3270 = vld [vmem:[#allocation4 + $0x38] sm:$0x3]
  %v3271 = vld [vmem:[#allocation4 + $0x40] sm:$0xff]
  %v3272 = vld [vmem:[#allocation4 + $0x48] sm:$0x3]
  %v3273 = vld [vmem:[#allocation4 + $0x50] sm:$0xff]
  %v3274 = vld [vmem:[#allocation4 + $0x58] sm:$0x3]
  %v3275 = vld [vmem:[#allocation4 + $0x60] sm:$0xff]
  %v3276 = vld [vmem:[#allocation4 + $0x68] sm:$0x3]
  %v3277 = vld [vmem:[#allocation4 + $0x70] sm:$0xff]
  %v3278 = vld [vmem:[#allocation4 + $0x78] sm:$0x3]
  %v3279 = vld [vmem:[#allocation4 + $0x80] sm:$0xff]
  %v3280 = vld [vmem:[#allocation4 + $0x88] sm:$0x3]
  %v3281 = vld [vmem:[#allocation4 + $0x90] sm:$0xff]
  %v3282 = vld [vmem:[#allocation4 + $0x98] sm:$0x3]
  %v3283 = vld [vmem:[#allocation4 + $0xa0] sm:$0xff]
  %v3284 = vld [vmem:[#allocation4 + $0xa8] sm:$0x3]
  %v3285 = vld [vmem:[#allocation4 + $0xb0] sm:$0xff]
  %v3286 = vld [vmem:[#allocation4 + $0xb8] sm:$0x3]
  %v3287 = vld [vmem:[#allocation4 + $0xc0] sm:$0xff]
  %v3288 = vld [vmem:[#allocation4 + $0xc8] sm:$0x3]
  %v3289 = vld [vmem:[#allocation4 + $0xd0] sm:$0xff]
  %v3290 = vld [vmem:[#allocation4 + $0xd8] sm:$0x3]
  %v3291 = vld [vmem:[#allocation4 + $0xe0] sm:$0xff]
  %v3292 = vld [vmem:[#allocation4 + $0xe8] sm:$0x3]
  %v3293 = vld [vmem:[#allocation4 + $0xf0] sm:$0xff]
  %v3294 = vld [vmem:[#allocation4 + $0xf8] sm:$0x3]
  %v3295 = vld [vmem:[#allocation4 + $0x100] sm:$0xff]
  %v3296 = vld [vmem:[#allocation4 + $0x108] sm:$0x3]
  %v3297 = vld [vmem:[#allocation4 + $0x110] sm:$0xff]
  %v3298 = vld [vmem:[#allocation4 + $0x118] sm:$0x3]
  %v3299 = vld [vmem:[#allocation4 + $0x120] sm:$0xff]
  %v3300 = vld [vmem:[#allocation4 + $0x128] sm:$0x3]
  %v3301 = vld [vmem:[#allocation4 + $0x130] sm:$0xff]
  %v3302 = vld [vmem:[#allocation4 + $0x138] sm:$0x3]
  %v3303 = vpack.c.bf16 %v3263, %v3263
  %v3304 = vpack.c.bf16 %v3265, %v3265
  %v3305 = vpack.c.bf16 %v3267, %v3267
  %v3306 = vpack.c.bf16 %v3269, %v3269
  %v3307 = vpack.c.bf16 %v3271, %v3271
  %v3308 = vpack.c.bf16 %v3273, %v3273
  %v3309 = vpack.c.bf16 %v3275, %v3275
  %v3310 = vpack.c.bf16 %v3277, %v3277
  %v3311 = vpack.c.bf16 %v3283, %v3283
  %v3312 = vpack.c.bf16 %v3285, %v3285
  %v3313 = vpack.c.bf16 %v3287, %v3287
  %v3314 = vpack.c.bf16 %v3289, %v3289
  %v3315 = vpack.c.bf16 %v3291, %v3291
  %v3316 = vpack.c.bf16 %v3293, %v3293
  %v3317 = vpack.c.bf16 %v3295, %v3295
  %v3318 = vpack.c.bf16 %v3297, %v3297
  %vm3319 = vcmask 60416
  %3320 = vst.msk [vmem:[#allocation5] sm:$0xf] %vm3319, %v3303
  %3321 = vst.msk [vmem:[#allocation5 + $0x4] sm:$0xf] %vm3319, %v3304
  %3322 = vst.msk [vmem:[#allocation5 + $0x8] sm:$0xf] %vm3319, %v3305
  %3323 = vst.msk [vmem:[#allocation5 + $0xc] sm:$0xf] %vm3319, %v3306
  %3324 = vst.msk [vmem:[#allocation5 + $0x10] sm:$0xf] %vm3319, %v3307
  %3325 = vst.msk [vmem:[#allocation5 + $0x14] sm:$0xf] %vm3319, %v3308
  %3326 = vst.msk [vmem:[#allocation5 + $0x18] sm:$0xf] %vm3319, %v3309
  %3327 = vst.msk [vmem:[#allocation5 + $0x1c] sm:$0xf] %vm3319, %v3310
  %3328 = vst.msk [vmem:[#allocation5 + $0x20] sm:$0xf] %vm3319, %v3311
  %3329 = vst.msk [vmem:[#allocation5 + $0x24] sm:$0xf] %vm3319, %v3312
  %3330 = vst.msk [vmem:[#allocation5 + $0x28] sm:$0xf] %vm3319, %v3313
  %3331 = vst.msk [vmem:[#allocation5 + $0x2c] sm:$0xf] %vm3319, %v3314
  %3332 = vst.msk [vmem:[#allocation5 + $0x30] sm:$0xf] %vm3319, %v3315
  %3333 = vst.msk [vmem:[#allocation5 + $0x34] sm:$0xf] %vm3319, %v3316
  %3334 = vst.msk [vmem:[#allocation5 + $0x38] sm:$0xf] %vm3319, %v3317
  %3335 = vst.msk [vmem:[#allocation5 + $0x3c] sm:$0xf] %vm3319, %v3318
  %v3336 = vpack.c.bf16 %v3264, %v3264
  %v3337 = vpack.c.bf16 %v3266, %v3266
  %v3338 = vpack.c.bf16 %v3268, %v3268
  %v3339 = vpack.c.bf16 %v3270, %v3270
  %v3340 = vpack.c.bf16 %v3272, %v3272
  %v3341 = vpack.c.bf16 %v3274, %v3274
  %v3342 = vpack.c.bf16 %v3276, %v3276
  %v3343 = vpack.c.bf16 %v3278, %v3278
  %v3344 = vpack.c.bf16 %v3284, %v3284
  %v3345 = vpack.c.bf16 %v3286, %v3286
  %v3346 = vpack.c.bf16 %v3288, %v3288
  %v3347 = vpack.c.bf16 %v3290, %v3290
  %v3348 = vpack.c.bf16 %v3292, %v3292
  %v3349 = vpack.c.bf16 %v3294, %v3294
  %v3350 = vpack.c.bf16 %v3296, %v3296
  %v3351 = vpack.c.bf16 %v3298, %v3298
  %v3353 = vshrl.u32 %v3303, 16
  %v3355 = vrot.slane %v3353, 4
  %v3356 = vshll.u32 %v3303, 16
  %v3358 = vrot.slane %v3356, 5
  %v3359 = vor.u32 %v3355, %v3358
  %v3360 = vrot.slane %v3359, 4
  %v3362 = vshll.u32 %v3336, 16
  %v3364 = vrot.slane %v3362, 5
  %v3365 = vsel %vm2098, %v3360, %v3364
  %v3367 = vshrl.u32 %v3304, 16
  %v3369 = vrot.slane %v3367, 4
  %v3370 = vshll.u32 %v3304, 16
  %v3372 = vrot.slane %v3370, 5
  %v3373 = vor.u32 %v3369, %v3372
  %v3374 = vrot.slane %v3373, 4
  %v3376 = vshll.u32 %v3337, 16
  %v3378 = vrot.slane %v3376, 5
  %v3379 = vsel %vm2098, %v3374, %v3378
  %v3381 = vshrl.u32 %v3305, 16
  %v3383 = vrot.slane %v3381, 4
  %v3384 = vshll.u32 %v3305, 16
  %v3386 = vrot.slane %v3384, 5
  %v3387 = vor.u32 %v3383, %v3386
  %v3388 = vrot.slane %v3387, 4
  %v3390 = vshll.u32 %v3338, 16
  %v3392 = vrot.slane %v3390, 5
  %v3393 = vsel %vm2098, %v3388, %v3392
  %v3395 = vshrl.u32 %v3306, 16
  %v3397 = vrot.slane %v3395, 4
  %v3398 = vshll.u32 %v3306, 16
  %v3400 = vrot.slane %v3398, 5
  %v3401 = vor.u32 %v3397, %v3400
  %v3402 = vrot.slane %v3401, 4
  %v3404 = vshll.u32 %v3339, 16
  %v3406 = vrot.slane %v3404, 5
  %v3407 = vsel %vm2098, %v3402, %v3406
  %v3409 = vshrl.u32 %v3307, 16
  %v3411 = vrot.slane %v3409, 4
  %v3412 = vshll.u32 %v3307, 16
  %v3414 = vrot.slane %v3412, 5
  %v3415 = vor.u32 %v3411, %v3414
  %v3416 = vrot.slane %v3415, 4
  %v3418 = vshll.u32 %v3340, 16
  %v3420 = vrot.slane %v3418, 5
  %v3421 = vsel %vm2098, %v3416, %v3420
  %v3423 = vshrl.u32 %v3308, 16
  %v3425 = vrot.slane %v3423, 4
  %v3426 = vshll.u32 %v3308, 16
  %v3428 = vrot.slane %v3426, 5
  %v3429 = vor.u32 %v3425, %v3428
  %v3430 = vrot.slane %v3429, 4
  %v3432 = vshll.u32 %v3341, 16
  %v3434 = vrot.slane %v3432, 5
  %v3435 = vsel %vm2098, %v3430, %v3434
  %v3437 = vshrl.u32 %v3309, 16
  %v3439 = vrot.slane %v3437, 4
  %v3440 = vshll.u32 %v3309, 16
  %v3442 = vrot.slane %v3440, 5
  %v3443 = vor.u32 %v3439, %v3442
  %v3444 = vrot.slane %v3443, 4
  %v3446 = vshll.u32 %v3342, 16
  %v3448 = vrot.slane %v3446, 5
  %v3449 = vsel %vm2098, %v3444, %v3448
  %v3451 = vshrl.u32 %v3310, 16
  %v3453 = vrot.slane %v3451, 4
  %v3454 = vshll.u32 %v3310, 16
  %v3456 = vrot.slane %v3454, 5
  %v3457 = vor.u32 %v3453, %v3456
  %v3458 = vrot.slane %v3457, 4
  %v3460 = vshll.u32 %v3343, 16
  %v3462 = vrot.slane %v3460, 5
  %v3463 = vsel %vm2098, %v3458, %v3462
  %v3465 = vshrl.u32 %v3311, 16
  %v3467 = vrot.slane %v3465, 4
  %v3468 = vshll.u32 %v3311, 16
  %v3470 = vrot.slane %v3468, 5
  %v3471 = vor.u32 %v3467, %v3470
  %v3472 = vrot.slane %v3471, 4
  %v3474 = vshll.u32 %v3344, 16
  %v3476 = vrot.slane %v3474, 5
  %v3477 = vsel %vm2098, %v3472, %v3476
  %v3479 = vshrl.u32 %v3312, 16
  %v3481 = vrot.slane %v3479, 4
  %v3482 = vshll.u32 %v3312, 16
  %v3484 = vrot.slane %v3482, 5
  %v3485 = vor.u32 %v3481, %v3484
  %v3486 = vrot.slane %v3485, 4
  %v3488 = vshll.u32 %v3345, 16
  %v3490 = vrot.slane %v3488, 5
  %v3491 = vsel %vm2098, %v3486, %v3490
  %v3493 = vshrl.u32 %v3313, 16
  %v3495 = vrot.slane %v3493, 4
  %v3496 = vshll.u32 %v3313, 16
  %v3498 = vrot.slane %v3496, 5
  %v3499 = vor.u32 %v3495, %v3498
  %v3500 = vrot.slane %v3499, 4
  %v3502 = vshll.u32 %v3346, 16
  %v3504 = vrot.slane %v3502, 5
  %v3505 = vsel %vm2098, %v3500, %v3504
  %v3507 = vshrl.u32 %v3314, 16
  %v3509 = vrot.slane %v3507, 4
  %v3510 = vshll.u32 %v3314, 16
  %v3512 = vrot.slane %v3510, 5
  %v3513 = vor.u32 %v3509, %v3512
  %v3514 = vrot.slane %v3513, 4
  %v3516 = vshll.u32 %v3347, 16
  %v3518 = vrot.slane %v3516, 5
  %v3519 = vsel %vm2098, %v3514, %v3518
  %v3521 = vshrl.u32 %v3315, 16
  %v3523 = vrot.slane %v3521, 4
  %v3524 = vshll.u32 %v3315, 16
  %v3526 = vrot.slane %v3524, 5
  %v3527 = vor.u32 %v3523, %v3526
  %v3528 = vrot.slane %v3527, 4
  %v3530 = vshll.u32 %v3348, 16
  %v3532 = vrot.slane %v3530, 5
  %v3533 = vsel %vm2098, %v3528, %v3532
  %v3535 = vshrl.u32 %v3316, 16
  %v3537 = vrot.slane %v3535, 4
  %v3538 = vshll.u32 %v3316, 16
  %v3540 = vrot.slane %v3538, 5
  %v3541 = vor.u32 %v3537, %v3540
  %v3542 = vrot.slane %v3541, 4
  %v3544 = vshll.u32 %v3349, 16
  %v3546 = vrot.slane %v3544, 5
  %v3547 = vsel %vm2098, %v3542, %v3546
  %v3549 = vshrl.u32 %v3317, 16
  %v3551 = vrot.slane %v3549, 4
  %v3552 = vshll.u32 %v3317, 16
  %v3554 = vrot.slane %v3552, 5
  %v3555 = vor.u32 %v3551, %v3554
  %v3556 = vrot.slane %v3555, 4
  %v3558 = vshll.u32 %v3350, 16
  %v3560 = vrot.slane %v3558, 5
  %v3561 = vsel %vm2098, %v3556, %v3560
  %v3563 = vshrl.u32 %v3318, 16
  %v3565 = vrot.slane %v3563, 4
  %v3566 = vshll.u32 %v3318, 16
  %v3568 = vrot.slane %v3566, 5
  %v3569 = vor.u32 %v3565, %v3568
  %v3570 = vrot.slane %v3569, 4
  %v3572 = vshll.u32 %v3351, 16
  %v3574 = vrot.slane %v3572, 5
  %v3575 = vsel %vm2098, %v3570, %v3574
  %3576 = vrot.lane.b32.xlu0 %v3365, 8
  %v3577 = vpop.permute.xlu0 %3576
  %3578 = vrot.lane.b32.xlu0 %v3379, 8
  %v3579 = vpop.permute.xlu0 %3578
  %3580 = vrot.lane.b32.xlu0 %v3393, 8
  %v3581 = vpop.permute.xlu0 %3580
  %3582 = vrot.lane.b32.xlu0 %v3407, 8
  %v3583 = vpop.permute.xlu0 %3582
  %3584 = vrot.lane.b32.xlu0 %v3421, 8
  %v3585 = vpop.permute.xlu0 %3584
  %3586 = vrot.lane.b32.xlu0 %v3435, 8
  %v3587 = vpop.permute.xlu0 %3586
  %3588 = vrot.lane.b32.xlu0 %v3449, 8
  %v3589 = vpop.permute.xlu0 %3588
  %3590 = vrot.lane.b32.xlu0 %v3463, 8
  %v3591 = vpop.permute.xlu0 %3590
  %3592 = vrot.lane.b32.xlu0 %v3477, 8
  %v3593 = vpop.permute.xlu0 %3592
  %3594 = vrot.lane.b32.xlu0 %v3491, 8
  %v3595 = vpop.permute.xlu0 %3594
  %3596 = vrot.lane.b32.xlu0 %v3505, 8
  %v3597 = vpop.permute.xlu0 %3596
  %3598 = vrot.lane.b32.xlu0 %v3519, 8
  %v3599 = vpop.permute.xlu0 %3598
  %3600 = vrot.lane.b32.xlu0 %v3533, 8
  %v3601 = vpop.permute.xlu0 %3600
  %3602 = vrot.lane.b32.xlu0 %v3547, 8
  %v3603 = vpop.permute.xlu0 %3602
  %3604 = vrot.lane.b32.xlu0 %v3561, 8
  %v3605 = vpop.permute.xlu0 %3604
  %3606 = vrot.lane.b32.xlu0 %v3575, 8
  %v3607 = vpop.permute.xlu0 %3606
  %vm3624 = vcmask 126016
  %3625 = vst.msk [vmem:[#allocation5] sm:$0xf] %vm3624, %v3577
  %3626 = vst.msk [vmem:[#allocation5 + $0x4] sm:$0xf] %vm3624, %v3579
  %3627 = vst.msk [vmem:[#allocation5 + $0x8] sm:$0xf] %vm3624, %v3581
  %3628 = vst.msk [vmem:[#allocation5 + $0xc] sm:$0xf] %vm3624, %v3583
  %3629 = vst.msk [vmem:[#allocation5 + $0x10] sm:$0xf] %vm3624, %v3585
  %3630 = vst.msk [vmem:[#allocation5 + $0x14] sm:$0xf] %vm3624, %v3587
  %3631 = vst.msk [vmem:[#allocation5 + $0x18] sm:$0xf] %vm3624, %v3589
  %3632 = vst.msk [vmem:[#allocation5 + $0x1c] sm:$0xf] %vm3624, %v3591
  %3633 = vst.msk [vmem:[#allocation5 + $0x20] sm:$0xf] %vm3624, %v3593
  %3634 = vst.msk [vmem:[#allocation5 + $0x24] sm:$0xf] %vm3624, %v3595
  %3635 = vst.msk [vmem:[#allocation5 + $0x28] sm:$0xf] %vm3624, %v3597
  %3636 = vst.msk [vmem:[#allocation5 + $0x2c] sm:$0xf] %vm3624, %v3599
  %3637 = vst.msk [vmem:[#allocation5 + $0x30] sm:$0xf] %vm3624, %v3601
  %3638 = vst.msk [vmem:[#allocation5 + $0x34] sm:$0xf] %vm3624, %v3603
  %3639 = vst.msk [vmem:[#allocation5 + $0x38] sm:$0xf] %vm3624, %v3605
  %3640 = vst.msk [vmem:[#allocation5 + $0x3c] sm:$0xf] %vm3624, %v3607
  %v3673 = vrot.slane %v3303, 5
  %v3674 = vrot.slane %v3673, 4
  %v3675 = vrot.slane %v3336, 5
  %v3676 = vsel %vm2422, %v3674, %v3675
  %v3677 = vrot.slane %v3304, 5
  %v3678 = vrot.slane %v3677, 4
  %v3679 = vrot.slane %v3337, 5
  %v3680 = vsel %vm2422, %v3678, %v3679
  %v3681 = vrot.slane %v3305, 5
  %v3682 = vrot.slane %v3681, 4
  %v3683 = vrot.slane %v3338, 5
  %v3684 = vsel %vm2422, %v3682, %v3683
  %v3685 = vrot.slane %v3306, 5
  %v3686 = vrot.slane %v3685, 4
  %v3687 = vrot.slane %v3339, 5
  %v3688 = vsel %vm2422, %v3686, %v3687
  %v3689 = vrot.slane %v3307, 5
  %v3690 = vrot.slane %v3689, 4
  %v3691 = vrot.slane %v3340, 5
  %v3692 = vsel %vm2422, %v3690, %v3691
  %v3693 = vrot.slane %v3308, 5
  %v3694 = vrot.slane %v3693, 4
  %v3695 = vrot.slane %v3341, 5
  %v3696 = vsel %vm2422, %v3694, %v3695
  %v3697 = vrot.slane %v3309, 5
  %v3698 = vrot.slane %v3697, 4
  %v3699 = vrot.slane %v3342, 5
  %v3700 = vsel %vm2422, %v3698, %v3699
  %v3701 = vrot.slane %v3310, 5
  %v3702 = vrot.slane %v3701, 4
  %v3703 = vrot.slane %v3343, 5
  %v3704 = vsel %vm2422, %v3702, %v3703
  %v3705 = vrot.slane %v3311, 5
  %v3706 = vrot.slane %v3705, 4
  %v3707 = vrot.slane %v3344, 5
  %v3708 = vsel %vm2422, %v3706, %v3707
  %v3709 = vrot.slane %v3312, 5
  %v3710 = vrot.slane %v3709, 4
  %v3711 = vrot.slane %v3345, 5
  %v3712 = vsel %vm2422, %v3710, %v3711
  %v3713 = vrot.slane %v3313, 5
  %v3714 = vrot.slane %v3713, 4
  %v3715 = vrot.slane %v3346, 5
  %v3716 = vsel %vm2422, %v3714, %v3715
  %v3717 = vrot.slane %v3314, 5
  %v3718 = vrot.slane %v3717, 4
  %v3719 = vrot.slane %v3347, 5
  %v3720 = vsel %vm2422, %v3718, %v3719
  %v3721 = vrot.slane %v3315, 5
  %v3722 = vrot.slane %v3721, 4
  %v3723 = vrot.slane %v3348, 5
  %v3724 = vsel %vm2422, %v3722, %v3723
  %v3725 = vrot.slane %v3316, 5
  %v3726 = vrot.slane %v3725, 4
  %v3727 = vrot.slane %v3349, 5
  %v3728 = vsel %vm2422, %v3726, %v3727
  %v3729 = vrot.slane %v3317, 5
  %v3730 = vrot.slane %v3729, 4
  %v3731 = vrot.slane %v3350, 5
  %v3732 = vsel %vm2422, %v3730, %v3731
  %v3733 = vrot.slane %v3318, 5
  %v3734 = vrot.slane %v3733, 4
  %v3735 = vrot.slane %v3351, 5
  %v3736 = vsel %vm2422, %v3734, %v3735
  %3737 = vrot.lane.b32.xlu0 %v3676, 16
  %v3738 = vpop.permute.xlu0 %3737
  %3739 = vrot.lane.b32.xlu0 %v3680, 16
  %v3740 = vpop.permute.xlu0 %3739
  %3741 = vrot.lane.b32.xlu0 %v3684, 16
  %v3742 = vpop.permute.xlu0 %3741
  %3743 = vrot.lane.b32.xlu0 %v3688, 16
  %v3744 = vpop.permute.xlu0 %3743
  %3745 = vrot.lane.b32.xlu0 %v3692, 16
  %v3746 = vpop.permute.xlu0 %3745
  %3747 = vrot.lane.b32.xlu0 %v3696, 16
  %v3748 = vpop.permute.xlu0 %3747
  %3749 = vrot.lane.b32.xlu0 %v3700, 16
  %v3750 = vpop.permute.xlu0 %3749
  %3751 = vrot.lane.b32.xlu0 %v3704, 16
  %v3752 = vpop.permute.xlu0 %3751
  %3753 = vrot.lane.b32.xlu0 %v3708, 16
  %v3754 = vpop.permute.xlu0 %3753
  %3755 = vrot.lane.b32.xlu0 %v3712, 16
  %v3756 = vpop.permute.xlu0 %3755
  %3757 = vrot.lane.b32.xlu0 %v3716, 16
  %v3758 = vpop.permute.xlu0 %3757
  %3759 = vrot.lane.b32.xlu0 %v3720, 16
  %v3760 = vpop.permute.xlu0 %3759
  %3761 = vrot.lane.b32.xlu0 %v3724, 16
  %v3762 = vpop.permute.xlu0 %3761
  %3763 = vrot.lane.b32.xlu0 %v3728, 16
  %v3764 = vpop.permute.xlu0 %3763
  %3765 = vrot.lane.b32.xlu0 %v3732, 16
  %v3766 = vpop.permute.xlu0 %3765
  %3767 = vrot.lane.b32.xlu0 %v3736, 16
  %v3768 = vpop.permute.xlu0 %3767
  %vm3785 = vcmask 191616
  %3786 = vst.msk [vmem:[#allocation5] sm:$0xf] %vm3785, %v3738
  %3787 = vst.msk [vmem:[#allocation5 + $0x4] sm:$0xf] %vm3785, %v3740
  %3788 = vst.msk [vmem:[#allocation5 + $0x8] sm:$0xf] %vm3785, %v3742
  %3789 = vst.msk [vmem:[#allocation5 + $0xc] sm:$0xf] %vm3785, %v3744
  %3790 = vst.msk [vmem:[#allocation5 + $0x10] sm:$0xf] %vm3785, %v3746
  %3791 = vst.msk [vmem:[#allocation5 + $0x14] sm:$0xf] %vm3785, %v3748
  %3792 = vst.msk [vmem:[#allocation5 + $0x18] sm:$0xf] %vm3785, %v3750
  %3793 = vst.msk [vmem:[#allocation5 + $0x1c] sm:$0xf] %vm3785, %v3752
  %3794 = vst.msk [vmem:[#allocation5 + $0x20] sm:$0xf] %vm3785, %v3754
  %3795 = vst.msk [vmem:[#allocation5 + $0x24] sm:$0xf] %vm3785, %v3756
  %3796 = vst.msk [vmem:[#allocation5 + $0x28] sm:$0xf] %vm3785, %v3758
  %3797 = vst.msk [vmem:[#allocation5 + $0x2c] sm:$0xf] %vm3785, %v3760
  %3798 = vst.msk [vmem:[#allocation5 + $0x30] sm:$0xf] %vm3785, %v3762
  %3799 = vst.msk [vmem:[#allocation5 + $0x34] sm:$0xf] %vm3785, %v3764
  %3800 = vst.msk [vmem:[#allocation5 + $0x38] sm:$0xf] %vm3785, %v3766
  %3801 = vst.msk [vmem:[#allocation5 + $0x3c] sm:$0xf] %vm3785, %v3768
  %v3802 = vpack.c.bf16 %v3279, %v3279
  %v3803 = vpack.c.bf16 %v3299, %v3299
  %3806 = vrot.lane.b32.xlu0 %v3304, 24
  %v3807 = vpop.permute.xlu0 %3806
  %3808 = vrot.lane.b32.xlu0 %v3305, 24
  %v3809 = vpop.permute.xlu0 %3808
  %3810 = vrot.lane.b32.xlu0 %v3306, 24
  %v3811 = vpop.permute.xlu0 %3810
  %3812 = vrot.lane.b32.xlu0 %v3307, 24
  %v3813 = vpop.permute.xlu0 %3812
  %3814 = vrot.lane.b32.xlu0 %v3308, 24
  %v3815 = vpop.permute.xlu0 %3814
  %3816 = vrot.lane.b32.xlu0 %v3309, 24
  %v3817 = vpop.permute.xlu0 %3816
  %3818 = vrot.lane.b32.xlu0 %v3310, 24
  %v3819 = vpop.permute.xlu0 %3818
  %3820 = vrot.lane.b32.xlu0 %v3802, 24
  %v3821 = vpop.permute.xlu0 %3820
  %3822 = vrot.lane.b32.xlu0 %v3312, 24
  %v3823 = vpop.permute.xlu0 %3822
  %3824 = vrot.lane.b32.xlu0 %v3313, 24
  %v3825 = vpop.permute.xlu0 %3824
  %3826 = vrot.lane.b32.xlu0 %v3314, 24
  %v3827 = vpop.permute.xlu0 %3826
  %3828 = vrot.lane.b32.xlu0 %v3315, 24
  %v3829 = vpop.permute.xlu0 %3828
  %3830 = vrot.lane.b32.xlu0 %v3316, 24
  %v3831 = vpop.permute.xlu0 %3830
  %3832 = vrot.lane.b32.xlu0 %v3317, 24
  %v3833 = vpop.permute.xlu0 %3832
  %3834 = vrot.lane.b32.xlu0 %v3318, 24
  %v3835 = vpop.permute.xlu0 %3834
  %3836 = vrot.lane.b32.xlu0 %v3803, 24
  %v3837 = vpop.permute.xlu0 %3836
  %vm3854 = vcmask 257216
  %3855 = vst.msk [vmem:[#allocation5] sm:$0xf] %vm3854, %v3807
  %3856 = vst.msk [vmem:[#allocation5 + $0x4] sm:$0xf] %vm3854, %v3809
  %3857 = vst.msk [vmem:[#allocation5 + $0x8] sm:$0xf] %vm3854, %v3811
  %3858 = vst.msk [vmem:[#allocation5 + $0xc] sm:$0xf] %vm3854, %v3813
  %3859 = vst.msk [vmem:[#allocation5 + $0x10] sm:$0xf] %vm3854, %v3815
  %3860 = vst.msk [vmem:[#allocation5 + $0x14] sm:$0xf] %vm3854, %v3817
  %3861 = vst.msk [vmem:[#allocation5 + $0x18] sm:$0xf] %vm3854, %v3819
  %3862 = vst.msk [vmem:[#allocation5 + $0x1c] sm:$0xf] %vm3854, %v3821
  %3863 = vst.msk [vmem:[#allocation5 + $0x20] sm:$0xf] %vm3854, %v3823
  %3864 = vst.msk [vmem:[#allocation5 + $0x24] sm:$0xf] %vm3854, %v3825
  %3865 = vst.msk [vmem:[#allocation5 + $0x28] sm:$0xf] %vm3854, %v3827
  %3866 = vst.msk [vmem:[#allocation5 + $0x2c] sm:$0xf] %vm3854, %v3829
  %3867 = vst.msk [vmem:[#allocation5 + $0x30] sm:$0xf] %vm3854, %v3831
  %3868 = vst.msk [vmem:[#allocation5 + $0x34] sm:$0xf] %vm3854, %v3833
  %3869 = vst.msk [vmem:[#allocation5 + $0x38] sm:$0xf] %vm3854, %v3835
  %3870 = vst.msk [vmem:[#allocation5 + $0x3c] sm:$0xf] %vm3854, %v3837
  %v3871 = vpack.c.bf16 %v3280, %v3280
  %v3872 = vpack.c.bf16 %v3300, %v3300
  %v3874 = vshrl.u32 %v3802, 16
  %v3876 = vrot.slane %v3874, 4
  %v3877 = vshll.u32 %v3802, 16
  %v3879 = vrot.slane %v3877, 5
  %v3880 = vor.u32 %v3876, %v3879
  %v3881 = vrot.slane %v3880, 4
  %v3883 = vshll.u32 %v3871, 16
  %v3885 = vrot.slane %v3883, 5
  %v3886 = vsel %vm2098, %v3881, %v3885
  %v3888 = vshrl.u32 %v3803, 16
  %v3890 = vrot.slane %v3888, 4
  %v3891 = vshll.u32 %v3803, 16
  %v3893 = vrot.slane %v3891, 5
  %v3894 = vor.u32 %v3890, %v3893
  %v3895 = vrot.slane %v3894, 4
  %v3897 = vshll.u32 %v3872, 16
  %v3899 = vrot.slane %v3897, 5
  %v3900 = vsel %vm2098, %v3895, %v3899
  %3901 = vrot.lane.b32.xlu0 %v3379, 32
  %v3902 = vpop.permute.xlu0 %3901
  %3903 = vrot.lane.b32.xlu0 %v3393, 32
  %v3904 = vpop.permute.xlu0 %3903
  %3905 = vrot.lane.b32.xlu0 %v3407, 32
  %v3906 = vpop.permute.xlu0 %3905
  %3907 = vrot.lane.b32.xlu0 %v3421, 32
  %v3908 = vpop.permute.xlu0 %3907
  %3909 = vrot.lane.b32.xlu0 %v3435, 32
  %v3910 = vpop.permute.xlu0 %3909
  %3911 = vrot.lane.b32.xlu0 %v3449, 32
  %v3912 = vpop.permute.xlu0 %3911
  %3913 = vrot.lane.b32.xlu0 %v3463, 32
  %v3914 = vpop.permute.xlu0 %3913
  %3915 = vrot.lane.b32.xlu0 %v3886, 32
  %v3916 = vpop.permute.xlu0 %3915
  %3917 = vrot.lane.b32.xlu0 %v3491, 32
  %v3918 = vpop.permute.xlu0 %3917
  %3919 = vrot.lane.b32.xlu0 %v3505, 32
  %v3920 = vpop.permute.xlu0 %3919
  %3921 = vrot.lane.b32.xlu0 %v3519, 32
  %v3922 = vpop.permute.xlu0 %3921
  %3923 = vrot.lane.b32.xlu0 %v3533, 32
  %v3924 = vpop.permute.xlu0 %3923
  %3925 = vrot.lane.b32.xlu0 %v3547, 32
  %v3926 = vpop.permute.xlu0 %3925
  %3927 = vrot.lane.b32.xlu0 %v3561, 32
  %v3928 = vpop.permute.xlu0 %3927
  %3929 = vrot.lane.b32.xlu0 %v3575, 32
  %v3930 = vpop.permute.xlu0 %3929
  %3931 = vrot.lane.b32.xlu0 %v3900, 32
  %v3932 = vpop.permute.xlu0 %3931
  %vm3949 = vcmask 322816
  %3950 = vst.msk [vmem:[#allocation5] sm:$0xf] %vm3949, %v3902
  %3951 = vst.msk [vmem:[#allocation5 + $0x4] sm:$0xf] %vm3949, %v3904
  %3952 = vst.msk [vmem:[#allocation5 + $0x8] sm:$0xf] %vm3949, %v3906
  %3953 = vst.msk [vmem:[#allocation5 + $0xc] sm:$0xf] %vm3949, %v3908
  %3954 = vst.msk [vmem:[#allocation5 + $0x10] sm:$0xf] %vm3949, %v3910
  %3955 = vst.msk [vmem:[#allocation5 + $0x14] sm:$0xf] %vm3949, %v3912
  %3956 = vst.msk [vmem:[#allocation5 + $0x18] sm:$0xf] %vm3949, %v3914
  %3957 = vst.msk [vmem:[#allocation5 + $0x1c] sm:$0xf] %vm3949, %v3916
  %3958 = vst.msk [vmem:[#allocation5 + $0x20] sm:$0xf] %vm3949, %v3918
  %3959 = vst.msk [vmem:[#allocation5 + $0x24] sm:$0xf] %vm3949, %v3920
  %3960 = vst.msk [vmem:[#allocation5 + $0x28] sm:$0xf] %vm3949, %v3922
  %3961 = vst.msk [vmem:[#allocation5 + $0x2c] sm:$0xf] %vm3949, %v3924
  %3962 = vst.msk [vmem:[#allocation5 + $0x30] sm:$0xf] %vm3949, %v3926
  %3963 = vst.msk [vmem:[#allocation5 + $0x34] sm:$0xf] %vm3949, %v3928
  %3964 = vst.msk [vmem:[#allocation5 + $0x38] sm:$0xf] %vm3949, %v3930
  %3965 = vst.msk [vmem:[#allocation5 + $0x3c] sm:$0xf] %vm3949, %v3932
  %v3968 = vrot.slane %v3802, 5
  %v3969 = vrot.slane %v3968, 4
  %v3970 = vrot.slane %v3871, 5
  %v3971 = vsel %vm2422, %v3969, %v3970
  %v3972 = vrot.slane %v3803, 5
  %v3973 = vrot.slane %v3972, 4
  %v3974 = vrot.slane %v3872, 5
  %v3975 = vsel %vm2422, %v3973, %v3974
  %3976 = vrot.lane.b32.xlu0 %v3680, 40
  %v3977 = vpop.permute.xlu0 %3976
  %3978 = vrot.lane.b32.xlu0 %v3684, 40
  %v3979 = vpop.permute.xlu0 %3978
  %3980 = vrot.lane.b32.xlu0 %v3688, 40
  %v3981 = vpop.permute.xlu0 %3980
  %3982 = vrot.lane.b32.xlu0 %v3692, 40
  %v3983 = vpop.permute.xlu0 %3982
  %3984 = vrot.lane.b32.xlu0 %v3696, 40
  %v3985 = vpop.permute.xlu0 %3984
  %3986 = vrot.lane.b32.xlu0 %v3700, 40
  %v3987 = vpop.permute.xlu0 %3986
  %3988 = vrot.lane.b32.xlu0 %v3704, 40
  %v3989 = vpop.permute.xlu0 %3988
  %3990 = vrot.lane.b32.xlu0 %v3971, 40
  %v3991 = vpop.permute.xlu0 %3990
  %3992 = vrot.lane.b32.xlu0 %v3712, 40
  %v3993 = vpop.permute.xlu0 %3992
  %3994 = vrot.lane.b32.xlu0 %v3716, 40
  %v3995 = vpop.permute.xlu0 %3994
  %3996 = vrot.lane.b32.xlu0 %v3720, 40
  %v3997 = vpop.permute.xlu0 %3996
  %3998 = vrot.lane.b32.xlu0 %v3724, 40
  %v3999 = vpop.permute.xlu0 %3998
  %4000 = vrot.lane.b32.xlu0 %v3728, 40
  %v4001 = vpop.permute.xlu0 %4000
  %4002 = vrot.lane.b32.xlu0 %v3732, 40
  %v4003 = vpop.permute.xlu0 %4002
  %4004 = vrot.lane.b32.xlu0 %v3736, 40
  %v4005 = vpop.permute.xlu0 %4004
  %4006 = vrot.lane.b32.xlu0 %v3975, 40
  %v4007 = vpop.permute.xlu0 %4006
  %vm4024 = vcmask 388416
  %4025 = vst.msk [vmem:[#allocation5] sm:$0xf] %vm4024, %v3977
  %4026 = vst.msk [vmem:[#allocation5 + $0x4] sm:$0xf] %vm4024, %v3979
  %4027 = vst.msk [vmem:[#allocation5 + $0x8] sm:$0xf] %vm4024, %v3981
  %4028 = vst.msk [vmem:[#allocation5 + $0xc] sm:$0xf] %vm4024, %v3983
  %4029 = vst.msk [vmem:[#allocation5 + $0x10] sm:$0xf] %vm4024, %v3985
  %4030 = vst.msk [vmem:[#allocation5 + $0x14] sm:$0xf] %vm4024, %v3987
  %4031 = vst.msk [vmem:[#allocation5 + $0x18] sm:$0xf] %vm4024, %v3989
  %4032 = vst.msk [vmem:[#allocation5 + $0x1c] sm:$0xf] %vm4024, %v3991
  %4033 = vst.msk [vmem:[#allocation5 + $0x20] sm:$0xf] %vm4024, %v3993
  %4034 = vst.msk [vmem:[#allocation5 + $0x24] sm:$0xf] %vm4024, %v3995
  %4035 = vst.msk [vmem:[#allocation5 + $0x28] sm:$0xf] %vm4024, %v3997
  %4036 = vst.msk [vmem:[#allocation5 + $0x2c] sm:$0xf] %vm4024, %v3999
  %4037 = vst.msk [vmem:[#allocation5 + $0x30] sm:$0xf] %vm4024, %v4001
  %4038 = vst.msk [vmem:[#allocation5 + $0x34] sm:$0xf] %vm4024, %v4003
  %4039 = vst.msk [vmem:[#allocation5 + $0x38] sm:$0xf] %vm4024, %v4005
  %4040 = vst.msk [vmem:[#allocation5 + $0x3c] sm:$0xf] %vm4024, %v4007
  %v4041 = vpack.c.bf16 %v3281, %v3281
  %v4042 = vpack.c.bf16 %v3301, %v3301
  %4045 = vrot.lane.b32.xlu0 %v3305, 48
  %v4046 = vpop.permute.xlu0 %4045
  %4047 = vrot.lane.b32.xlu0 %v3306, 48
  %v4048 = vpop.permute.xlu0 %4047
  %4049 = vrot.lane.b32.xlu0 %v3307, 48
  %v4050 = vpop.permute.xlu0 %4049
  %4051 = vrot.lane.b32.xlu0 %v3308, 48
  %v4052 = vpop.permute.xlu0 %4051
  %4053 = vrot.lane.b32.xlu0 %v3309, 48
  %v4054 = vpop.permute.xlu0 %4053
  %4055 = vrot.lane.b32.xlu0 %v3310, 48
  %v4056 = vpop.permute.xlu0 %4055
  %4057 = vrot.lane.b32.xlu0 %v3802, 48
  %v4058 = vpop.permute.xlu0 %4057
  %4059 = vrot.lane.b32.xlu0 %v4041, 48
  %v4060 = vpop.permute.xlu0 %4059
  %4061 = vrot.lane.b32.xlu0 %v3313, 48
  %v4062 = vpop.permute.xlu0 %4061
  %4063 = vrot.lane.b32.xlu0 %v3314, 48
  %v4064 = vpop.permute.xlu0 %4063
  %4065 = vrot.lane.b32.xlu0 %v3315, 48
  %v4066 = vpop.permute.xlu0 %4065
  %4067 = vrot.lane.b32.xlu0 %v3316, 48
  %v4068 = vpop.permute.xlu0 %4067
  %4069 = vrot.lane.b32.xlu0 %v3317, 48
  %v4070 = vpop.permute.xlu0 %4069
  %4071 = vrot.lane.b32.xlu0 %v3318, 48
  %v4072 = vpop.permute.xlu0 %4071
  %4073 = vrot.lane.b32.xlu0 %v3803, 48
  %v4074 = vpop.permute.xlu0 %4073
  %4075 = vrot.lane.b32.xlu0 %v4042, 48
  %v4076 = vpop.permute.xlu0 %4075
  %vm4093 = vcmask 454016
  %4094 = vst.msk [vmem:[#allocation5] sm:$0xf] %vm4093, %v4046
  %4095 = vst.msk [vmem:[#allocation5 + $0x4] sm:$0xf] %vm4093, %v4048
  %4096 = vst.msk [vmem:[#allocation5 + $0x8] sm:$0xf] %vm4093, %v4050
  %4097 = vst.msk [vmem:[#allocation5 + $0xc] sm:$0xf] %vm4093, %v4052
  %4098 = vst.msk [vmem:[#allocation5 + $0x10] sm:$0xf] %vm4093, %v4054
  %4099 = vst.msk [vmem:[#allocation5 + $0x14] sm:$0xf] %vm4093, %v4056
  %4100 = vst.msk [vmem:[#allocation5 + $0x18] sm:$0xf] %vm4093, %v4058
  %4101 = vst.msk [vmem:[#allocation5 + $0x1c] sm:$0xf] %vm4093, %v4060
  %4102 = vst.msk [vmem:[#allocation5 + $0x20] sm:$0xf] %vm4093, %v4062
  %4103 = vst.msk [vmem:[#allocation5 + $0x24] sm:$0xf] %vm4093, %v4064
  %4104 = vst.msk [vmem:[#allocation5 + $0x28] sm:$0xf] %vm4093, %v4066
  %4105 = vst.msk [vmem:[#allocation5 + $0x2c] sm:$0xf] %vm4093, %v4068
  %4106 = vst.msk [vmem:[#allocation5 + $0x30] sm:$0xf] %vm4093, %v4070
  %4107 = vst.msk [vmem:[#allocation5 + $0x34] sm:$0xf] %vm4093, %v4072
  %4108 = vst.msk [vmem:[#allocation5 + $0x38] sm:$0xf] %vm4093, %v4074
  %4109 = vst.msk [vmem:[#allocation5 + $0x3c] sm:$0xf] %vm4093, %v4076
  %v4110 = vpack.c.bf16 %v3282, %v3282
  %v4111 = vpack.c.bf16 %v3302, %v3302
  %v4113 = vshrl.u32 %v4041, 16
  %v4115 = vrot.slane %v4113, 4
  %v4116 = vshll.u32 %v4041, 16
  %v4118 = vrot.slane %v4116, 5
  %v4119 = vor.u32 %v4115, %v4118
  %v4120 = vrot.slane %v4119, 4
  %v4122 = vshll.u32 %v4110, 16
  %v4124 = vrot.slane %v4122, 5
  %v4125 = vsel %vm2098, %v4120, %v4124
  %v4127 = vshrl.u32 %v4042, 16
  %v4129 = vrot.slane %v4127, 4
  %v4130 = vshll.u32 %v4042, 16
  %v4132 = vrot.slane %v4130, 5
  %v4133 = vor.u32 %v4129, %v4132
  %v4134 = vrot.slane %v4133, 4
  %v4136 = vshll.u32 %v4111, 16
  %v4138 = vrot.slane %v4136, 5
  %v4139 = vsel %vm2098, %v4134, %v4138
  %4140 = vrot.lane.b32.xlu0 %v3393, 56
  %v4141 = vpop.permute.xlu0 %4140
  %4142 = vrot.lane.b32.xlu0 %v3407, 56
  %v4143 = vpop.permute.xlu0 %4142
  %4144 = vrot.lane.b32.xlu0 %v3421, 56
  %v4145 = vpop.permute.xlu0 %4144
  %4146 = vrot.lane.b32.xlu0 %v3435, 56
  %v4147 = vpop.permute.xlu0 %4146
  %4148 = vrot.lane.b32.xlu0 %v3449, 56
  %v4149 = vpop.permute.xlu0 %4148
  %4150 = vrot.lane.b32.xlu0 %v3463, 56
  %v4151 = vpop.permute.xlu0 %4150
  %4152 = vrot.lane.b32.xlu0 %v3886, 56
  %v4153 = vpop.permute.xlu0 %4152
  %4154 = vrot.lane.b32.xlu0 %v4125, 56
  %v4155 = vpop.permute.xlu0 %4154
  %4156 = vrot.lane.b32.xlu0 %v3505, 56
  %v4157 = vpop.permute.xlu0 %4156
  %4158 = vrot.lane.b32.xlu0 %v3519, 56
  %v4159 = vpop.permute.xlu0 %4158
  %4160 = vrot.lane.b32.xlu0 %v3533, 56
  %v4161 = vpop.permute.xlu0 %4160
  %4162 = vrot.lane.b32.xlu0 %v3547, 56
  %v4163 = vpop.permute.xlu0 %4162
  %4164 = vrot.lane.b32.xlu0 %v3561, 56
  %v4165 = vpop.permute.xlu0 %4164
  %4166 = vrot.lane.b32.xlu0 %v3575, 56
  %v4167 = vpop.permute.xlu0 %4166
  %4168 = vrot.lane.b32.xlu0 %v3900, 56
  %v4169 = vpop.permute.xlu0 %4168
  %4170 = vrot.lane.b32.xlu0 %v4139, 56
  %v4171 = vpop.permute.xlu0 %4170
  %vm4188 = vcmask 519616
  %4189 = vst.msk [vmem:[#allocation5] sm:$0xf] %vm4188, %v4141
  %4190 = vst.msk [vmem:[#allocation5 + $0x4] sm:$0xf] %vm4188, %v4143
  %4191 = vst.msk [vmem:[#allocation5 + $0x8] sm:$0xf] %vm4188, %v4145
  %4192 = vst.msk [vmem:[#allocation5 + $0xc] sm:$0xf] %vm4188, %v4147
  %4193 = vst.msk [vmem:[#allocation5 + $0x10] sm:$0xf] %vm4188, %v4149
  %4194 = vst.msk [vmem:[#allocation5 + $0x14] sm:$0xf] %vm4188, %v4151
  %4195 = vst.msk [vmem:[#allocation5 + $0x18] sm:$0xf] %vm4188, %v4153
  %4196 = vst.msk [vmem:[#allocation5 + $0x1c] sm:$0xf] %vm4188, %v4155
  %4197 = vst.msk [vmem:[#allocation5 + $0x20] sm:$0xf] %vm4188, %v4157
  %4198 = vst.msk [vmem:[#allocation5 + $0x24] sm:$0xf] %vm4188, %v4159
  %4199 = vst.msk [vmem:[#allocation5 + $0x28] sm:$0xf] %vm4188, %v4161
  %4200 = vst.msk [vmem:[#allocation5 + $0x2c] sm:$0xf] %vm4188, %v4163
  %4201 = vst.msk [vmem:[#allocation5 + $0x30] sm:$0xf] %vm4188, %v4165
  %4202 = vst.msk [vmem:[#allocation5 + $0x34] sm:$0xf] %vm4188, %v4167
  %4203 = vst.msk [vmem:[#allocation5 + $0x38] sm:$0xf] %vm4188, %v4169
  %4204 = vst.msk [vmem:[#allocation5 + $0x3c] sm:$0xf] %vm4188, %v4171
  %v4207 = vrot.slane %v4041, 5
  %v4208 = vrot.slane %v4207, 4
  %v4209 = vrot.slane %v4110, 5
  %v4210 = vsel %vm2422, %v4208, %v4209
  %v4211 = vrot.slane %v4042, 5
  %v4212 = vrot.slane %v4211, 4
  %v4213 = vrot.slane %v4111, 5
  %v4214 = vsel %vm2422, %v4212, %v4213
  %4215 = vrot.lane.b32.xlu0 %v3684, 64
  %v4216 = vpop.permute.xlu0 %4215
  %4217 = vrot.lane.b32.xlu0 %v3688, 64
  %v4218 = vpop.permute.xlu0 %4217
  %4219 = vrot.lane.b32.xlu0 %v3692, 64
  %v4220 = vpop.permute.xlu0 %4219
  %4221 = vrot.lane.b32.xlu0 %v3696, 64
  %v4222 = vpop.permute.xlu0 %4221
  %4223 = vrot.lane.b32.xlu0 %v3700, 64
  %v4224 = vpop.permute.xlu0 %4223
  %4225 = vrot.lane.b32.xlu0 %v3704, 64
  %v4226 = vpop.permute.xlu0 %4225
  %4227 = vrot.lane.b32.xlu0 %v3971, 64
  %v4228 = vpop.permute.xlu0 %4227
  %4229 = vrot.lane.b32.xlu0 %v4210, 64
  %v4230 = vpop.permute.xlu0 %4229
  %4231 = vrot.lane.b32.xlu0 %v3716, 64
  %v4232 = vpop.permute.xlu0 %4231
  %4233 = vrot.lane.b32.xlu0 %v3720, 64
  %v4234 = vpop.permute.xlu0 %4233
  %4235 = vrot.lane.b32.xlu0 %v3724, 64
  %v4236 = vpop.permute.xlu0 %4235
  %4237 = vrot.lane.b32.xlu0 %v3728, 64
  %v4238 = vpop.permute.xlu0 %4237
  %4239 = vrot.lane.b32.xlu0 %v3732, 64
  %v4240 = vpop.permute.xlu0 %4239
  %4241 = vrot.lane.b32.xlu0 %v3736, 64
  %v4242 = vpop.permute.xlu0 %4241
  %4243 = vrot.lane.b32.xlu0 %v3975, 64
  %v4244 = vpop.permute.xlu0 %4243
  %4245 = vrot.lane.b32.xlu0 %v4214, 64
  %v4246 = vpop.permute.xlu0 %4245
  %vm4263 = vcmask 585216
  %4264 = vst.msk [vmem:[#allocation5] sm:$0xf] %vm4263, %v4216
  %4265 = vst.msk [vmem:[#allocation5 + $0x4] sm:$0xf] %vm4263, %v4218
  %4266 = vst.msk [vmem:[#allocation5 + $0x8] sm:$0xf] %vm4263, %v4220
  %4267 = vst.msk [vmem:[#allocation5 + $0xc] sm:$0xf] %vm4263, %v4222
  %4268 = vst.msk [vmem:[#allocation5 + $0x10] sm:$0xf] %vm4263, %v4224
  %4269 = vst.msk [vmem:[#allocation5 + $0x14] sm:$0xf] %vm4263, %v4226
  %4270 = vst.msk [vmem:[#allocation5 + $0x18] sm:$0xf] %vm4263, %v4228
  %4271 = vst.msk [vmem:[#allocation5 + $0x1c] sm:$0xf] %vm4263, %v4230
  %4272 = vst.msk [vmem:[#allocation5 + $0x20] sm:$0xf] %vm4263, %v4232
  %4273 = vst.msk [vmem:[#allocation5 + $0x24] sm:$0xf] %vm4263, %v4234
  %4274 = vst.msk [vmem:[#allocation5 + $0x28] sm:$0xf] %vm4263, %v4236
  %4275 = vst.msk [vmem:[#allocation5 + $0x2c] sm:$0xf] %vm4263, %v4238
  %4276 = vst.msk [vmem:[#allocation5 + $0x30] sm:$0xf] %vm4263, %v4240
  %4277 = vst.msk [vmem:[#allocation5 + $0x34] sm:$0xf] %vm4263, %v4242
  %4278 = vst.msk [vmem:[#allocation5 + $0x38] sm:$0xf] %vm4263, %v4244
  %4279 = vst.msk [vmem:[#allocation5 + $0x3c] sm:$0xf] %vm4263, %v4246
  %v4280 = vld [vmem:[#allocation5] sm:$0xf]
  %v4281 = vld [vmem:[#allocation5 + $0x4] sm:$0xf]
  %v4282 = vld [vmem:[#allocation5 + $0x8] sm:$0xf]
  %v4283 = vld [vmem:[#allocation5 + $0xc] sm:$0xf]
  %v4284 = vld [vmem:[#allocation5 + $0x10] sm:$0xf]
  %v4285 = vld [vmem:[#allocation5 + $0x14] sm:$0xf]
  %v4286 = vld [vmem:[#allocation5 + $0x18] sm:$0xf]
  %v4287 = vld [vmem:[#allocation5 + $0x1c] sm:$0xf]
  %v4288 = vld [vmem:[#allocation5 + $0x20] sm:$0xf]
  %v4289 = vld [vmem:[#allocation5 + $0x24] sm:$0xf]
  %v4290 = vld [vmem:[#allocation5 + $0x28] sm:$0xf]
  %v4291 = vld [vmem:[#allocation5 + $0x2c] sm:$0xf]
  %v4292 = vld [vmem:[#allocation5 + $0x30] sm:$0xf]
  %v4293 = vld [vmem:[#allocation5 + $0x34] sm:$0xf]
  %v4294 = vld [vmem:[#allocation5 + $0x38] sm:$0xf]
  %v4295 = vld [vmem:[#allocation5 + $0x3c] sm:$0xf]
  %v4296 = vld [vmem:[%s3] sm:$0xf]
  %v4297 = vld [vmem:[%s3 + $0x4] sm:$0xf]
  %v4298 = vld [vmem:[%s3 + $0x8] sm:$0xf]
  %v4299 = vld [vmem:[%s3 + $0xc] sm:$0xf]
  %v4300 = vld [vmem:[%s3 + $0x10] sm:$0xf]
  %v4301 = vld [vmem:[%s3 + $0x14] sm:$0xf]
  %v4302 = vld [vmem:[%s3 + $0x18] sm:$0xf]
  %v4303 = vld [vmem:[%s3 + $0x1c] sm:$0xf]
  %v4304 = vld [vmem:[%s3 + $0x20] sm:$0xf]
  %v4305 = vld [vmem:[%s4] sm:$0x1]
  %v4307 = vperm.slane %v4305, 0
  %v4325 = vunpack.c.l.b16 %v4280
  %v4326 = vunpack.c.l.b16 %v4281
  %v4327 = vunpack.c.l.b16 %v4282
  %v4328 = vunpack.c.l.b16 %v4283
  %v4329 = vunpack.c.l.b16 %v4284
  %v4330 = vunpack.c.l.b16 %v4285
  %v4331 = vunpack.c.l.b16 %v4286
  %v4332 = vunpack.c.l.b16 %v4287
  %v4333 = vunpack.c.l.b16 %v4288
  %v4334 = vunpack.c.l.b16 %v4289
  %v4335 = vunpack.c.l.b16 %v4290
  %v4336 = vunpack.c.l.b16 %v4291
  %v4337 = vunpack.c.l.b16 %v4292
  %v4338 = vunpack.c.l.b16 %v4293
  %v4339 = vunpack.c.l.b16 %v4294
  %v4340 = vunpack.c.l.b16 %v4295
  %v4341 = vpack.c.b16 %v4326, %v4325
  %v4342 = vpack.c.b16 %v4328, %v4327
  %v4343 = vpack.c.b16 %v4330, %v4329
  %v4344 = vpack.c.b16 %v4332, %v4331
  %v4345 = vpack.c.b16 %v4334, %v4333
  %v4346 = vpack.c.b16 %v4336, %v4335
  %v4347 = vpack.c.b16 %v4338, %v4337
  %v4348 = vpack.c.b16 %v4340, %v4339
  %v4358 = vunpack.c.l.b16 %v4296
  %v4359 = vunpack.c.l.b16 %v4297
  %v4360 = vunpack.c.l.b16 %v4298
  %v4361 = vunpack.c.l.b16 %v4299
  %v4362 = vunpack.c.l.b16 %v4300
  %v4363 = vunpack.c.l.b16 %v4301
  %v4364 = vunpack.c.l.b16 %v4302
  %v4365 = vunpack.c.l.b16 %v4303
  %v4366 = vunpack.c.l.b16 %v4304
  %v4367 = vpack.c.b16 %v4359, %v4358
  %v4368 = vpack.c.b16 %v4361, %v4360
  %v4369 = vpack.c.b16 %v4363, %v4362
  %v4370 = vpack.c.b16 %v4365, %v4364
  %v4371 = vpack.c.b16 %v4366, %v4366
  %vm4376 = vcmask 588800
  %v4378 = vsel %vm4376, %v4341, 0
  %v4381 = vsel %vm4376, %v4342, 0
  %v4384 = vsel %vm4376, %v4343, 0
  %v4387 = vsel %vm4376, %v4344, 0
  %v4390 = vsel %vm4376, %v4345, 0
  %v4393 = vsel %vm4376, %v4346, 0
  %v4396 = vsel %vm4376, %v4347, 0
  %v4399 = vsel %vm4376, %v4348, 0
  %vm4401 = vcmask 1043456
  %v4403 = vsel %vm4401, %v4371, 0
  %4405 = vmatpush.bf16.msra.mxu0 0
  %4406 = vmatpush.bf16.msra.mxu0 0
  %4407 = vmatpush.bf16.msra.mxu0 0
  %4408 = vmatpush.bf16.msra.mxu0 %v4403
  %4409 = vmatpush.bf16.msra.mxu0 %v4370
  %4410 = vmatpush.bf16.msra.mxu0 %v4369
  %4411 = vmatpush.bf16.msra.mxu0 %v4368
  %4412 = vmatpush.bf16.msra.mxu0 %v4367
  %4413 = vmatmul.bf16.gmra.mxu0 %v4378
  %v4414 = vpop.f32.mrf.mxu0
  %v4415 = vadd.f32 %v4307, %v4414
  %v4416 = vpop.f32.mrf.mxu0
  %v4417 = vadd.f32 %v4307, %v4416
  %4418 = vmatmul.bf16.gmra.mxu0 %v4381
  %v4419 = vpop.f32.mrf.mxu0
  %v4420 = vadd.f32 %v4307, %v4419
  %v4421 = vpop.f32.mrf.mxu0
  %v4422 = vadd.f32 %v4307, %v4421
  %4423 = vmatmul.bf16.gmra.mxu0 %v4384
  %v4424 = vpop.f32.mrf.mxu0
  %v4425 = vadd.f32 %v4307, %v4424
  %v4426 = vpop.f32.mrf.mxu0
  %v4427 = vadd.f32 %v4307, %v4426
  %4428 = vmatmul.bf16.gmra.mxu0 %v4387
  %v4429 = vpop.f32.mrf.mxu0
  %v4430 = vadd.f32 %v4307, %v4429
  %v4431 = vpop.f32.mrf.mxu0
  %v4432 = vadd.f32 %v4307, %v4431
  %4433 = vmatmul.bf16.gmra.mxu0 %v4390
  %v4434 = vpop.f32.mrf.mxu0
  %v4435 = vadd.f32 %v4307, %v4434
  %v4436 = vpop.f32.mrf.mxu0
  %v4437 = vadd.f32 %v4307, %v4436
  %4438 = vmatmul.bf16.gmra.mxu0 %v4393
  %v4439 = vpop.f32.mrf.mxu0
  %v4440 = vadd.f32 %v4307, %v4439
  %v4441 = vpop.f32.mrf.mxu0
  %v4442 = vadd.f32 %v4307, %v4441
  %4443 = vmatmul.bf16.gmra.mxu0 %v4396
  %v4444 = vpop.f32.mrf.mxu0
  %v4445 = vadd.f32 %v4307, %v4444
  %v4446 = vpop.f32.mrf.mxu0
  %v4447 = vadd.f32 %v4307, %v4446
  %4448 = vmatmul.bf16.gmra.mxu0 %v4399
  %v4449 = vpop.f32.mrf.mxu0
  %v4450 = vadd.f32 %v4307, %v4449
  %v4451 = vpop.f32.mrf.mxu0
  %v4452 = vadd.f32 %v4307, %v4451
  %4453 = vdwg.mxu0
  %v4454 = vmax.f32 %v4415, 0.0
  %v4455 = vmax.f32 %v4417, 0.0
  %v4456 = vmax.f32 %v4420, 0.0
  %v4457 = vmax.f32 %v4422, 0.0
  %v4458 = vmax.f32 %v4425, 0.0
  %v4459 = vmax.f32 %v4427, 0.0
  %v4460 = vmax.f32 %v4430, 0.0
  %v4461 = vmax.f32 %v4432, 0.0
  %v4462 = vmax.f32 %v4435, 0.0
  %v4463 = vmax.f32 %v4437, 0.0
  %v4464 = vmax.f32 %v4440, 0.0
  %v4465 = vmax.f32 %v4442, 0.0
  %v4466 = vmax.f32 %v4445, 0.0
  %v4467 = vmax.f32 %v4447, 0.0
  %v4468 = vmax.f32 %v4450, 0.0
  %v4469 = vmax.f32 %v4452, 0.0
  %4470 = vst.msk [vmem:[%s5] sm:$0xff] %vm3204, %v4454
  %4471 = vst.msk [vmem:[%s5 + $0x8] sm:$0xff] %vm3204, %v4455
  %4472 = vst.msk [vmem:[%s5 + $0x10] sm:$0xff] %vm3204, %v4456
  %4473 = vst.msk [vmem:[%s5 + $0x18] sm:$0xff] %vm3204, %v4457
  %4474 = vst.msk [vmem:[%s5 + $0x20] sm:$0xff] %vm3204, %v4458
  %4475 = vst.msk [vmem:[%s5 + $0x28] sm:$0xff] %vm3204, %v4459
  %4476 = vst.msk [vmem:[%s5 + $0x30] sm:$0xff] %vm3204, %v4460
  %4477 = vst.msk [vmem:[%s5 + $0x38] sm:$0xff] %vm3204, %v4461
  %4478 = vst.msk [vmem:[%s5 + $0x40] sm:$0xff] %vm3204, %v4462
  %4479 = vst.msk [vmem:[%s5 + $0x48] sm:$0xff] %vm3204, %v4463
  %4480 = vst.msk [vmem:[%s5 + $0x50] sm:$0xff] %vm3204, %v4464
  %4481 = vst.msk [vmem:[%s5 + $0x58] sm:$0xff] %vm3204, %v4465
  %4482 = vst.msk [vmem:[%s5 + $0x60] sm:$0xff] %vm3204, %v4466
  %4483 = vst.msk [vmem:[%s5 + $0x68] sm:$0xff] %vm3204, %v4467
  %4484 = vst.msk [vmem:[%s5 + $0x70] sm:$0xff] %vm3204, %v4468
  %4485 = vst.msk [vmem:[%s5 + $0x78] sm:$0xff] %vm3204, %v4469
  // Predicated region
  $region22: #{down_forward.1} parent=0 // pred_check
    _
  $region23: #{down_forward.1} parent=0 // pred_check_branch
    %4487 = sbr.rel (0) target = $region25
  $region24: #{down_forward.1} parent=0 // pred_region
    _
  $region25: #{down_forward.1} parent=0 // pred_fallthru
    _
  // Predicated region
  $region26: #{down_forward.1} parent=0 // pred_check
    _
  $region27: #{down_forward.1} parent=0 // pred_check_branch
    %4489 = sbr.rel (0) target = $region29
  $region28: #{down_forward.1} parent=0 // pred_region
    _
  $region29: #{down_forward.1} parent=0 // pred_fallthru
    _

</llo_original>
